<compile_context>
chip_gen: v7x
topology: tpu7x:2x2x1
jax: 0.10.0
libtpu: 0.0.40
codegen_flags: <defaults>
</compile_context>

<pallas_src>
import numpy as np

import jax
import jax.numpy as jnp
from jax.experimental import pallas as pl
from jax.experimental.pallas import tpu as pltpu


# (kernel, stride, padding) for m1..m6 of CNN2
_CFG = [(3, 1, 1), (4, 2, 1), (3, 1, 1), (4, 2, 1), (3, 1, 1), (4, 2, 1)]


def _cnn2_fused_kernel(x_ref, *refs):
    """refs = (R_1, Wrow_1, bias_1, ..., R_6, Wrow_6, bias_6, o_ref).

    Activation layout: X[b*H + h, w*C + c] (f32). Each layer is
        X <- relu(bias_row + sum_kh (R[kh] @ X) @ Wrow[kh])
    i.e. 3-4 accumulating MXU matmul pairs per layer, all operands VMEM-resident.
    """
    o_ref = refs[-1]
    layer_refs = refs[:-1]
    n_layers = len(layer_refs) // 3

    x = x_ref[...]
    for l in range(n_layers):
        r_ref = layer_refs[3 * l]        # (KH, B*Hout, B*Hin)
        w_ref = layer_refs[3 * l + 1]    # (KH, Win*Cin, Wout*Cout)
        b_ref = layer_refs[3 * l + 2]    # (1, Wout*Cout)
        kh_taps = r_ref.shape[0]

        acc = None
        for kh in range(kh_taps):
            rx = jnp.dot(r_ref[kh], x, preferred_element_type=jnp.float32)
            term = jnp.dot(rx, w_ref[kh], preferred_element_type=jnp.float32)
            acc = term if acc is None else acc + term
        x = jnp.maximum(acc + b_ref[...], 0.0)

    o_ref[...] = x.astype(o_ref.dtype)


def _row_select(kh_taps, batch, h_in, h_out, stride, pad):
    """Constant 0/1 matrix: (R_kh @ X)[b*Hout+ho, :] = X[b*Hin + ho*s + kh - p, :] (or 0)."""
    r = np.zeros((kh_taps, batch * h_out, batch * h_in), np.float32)
    for kh in range(kh_taps):
        for b in range(batch):
            for ho in range(h_out):
                hi = ho * stride + kh - pad
                if 0 <= hi < h_in:
                    r[kh, b * h_out + ho, b * h_in + hi] = 1.0
    return r


def _col_select(kw_taps, w_in, w_out, stride, pad):
    """Constant 0/1 tensor sel[kw, wi, wo] = 1 iff wi == wo*s + kw - p (in range)."""
    sel = np.zeros((kw_taps, w_in, w_out), np.float32)
    for kw in range(kw_taps):
        for wo in range(w_out):
            wi = wo * stride + kw - pad
            if 0 <= wi < w_in:
                sel[kw, wi, wo] = 1.0
    return sel


def cnn2_forward(x_nchw, params):
    """x_nchw: (B, C, H, W) like PyTorch. params: list of (weight, bias) per conv."""
    B, C0, H0, W0 = x_nchw.shape
    # NCHW -> row layout [b*H + h, w*C + c]
    x2d = jnp.transpose(x_nchw, (0, 2, 3, 1)).reshape(B * H0, W0 * C0)

    flat_args = []
    H, W, C = H0, W0, C0
    for (w, bias), (k, s, p) in zip(params, _CFG):
        Cout, Cin_w, KH, KW = w.shape
        assert Cin_w == C and KH == k and KW == k
        Hout = (H + 2 * p - KH) // s + 1
        Wout = (W + 2 * p - KW) // s + 1

        r_mat = jnp.asarray(_row_select(KH, B, H, Hout, s, p))          # const
        sel = jnp.asarray(_col_select(KW, W, Wout, s, p))               # const
        wt = jnp.transpose(w, (2, 3, 1, 0))                             # (KH,KW,Cin,Cout)
        # Wrow[kh, wi*Cin+ci, wo*Cout+co] = w[co,ci,kh,kw] where wi = wo*s + kw - p
        w_row = jnp.einsum('kxy,hkcd->hxcyd', sel, wt).reshape(KH, W * C, Wout * Cout)
        b_row = jnp.tile(bias, Wout).reshape(1, Wout * Cout)

        flat_args += [r_mat, w_row, b_row]
        H, W, C = Hout, Wout, Cout

    vmem = pl.BlockSpec(memory_space=pltpu.MemorySpace.VMEM)
    out2d = pl.pallas_call(
        _cnn2_fused_kernel,
        out_shape=jax.ShapeDtypeStruct((B * H, W * C), x_nchw.dtype),
        in_specs=[vmem] * (1 + len(flat_args)),
        out_specs=vmem,
    )(x2d, *flat_args)

    # PyTorch x.view(B, 2c*(h//8)**2) flattens NCHW order (C, H, W).
    return out2d.reshape(B, H, W, C).transpose(0, 3, 1, 2).reshape(B, C * H * W)


def init_cnn2_params(key, c):
    chans = [(c, c), (c, c), (c, 2 * c), (2 * c, 2 * c), (2 * c, 2 * c), (2 * c, 2 * c)]
    params = []
    for (cin, cout), (k, _, _) in zip(chans, _CFG):
        key, wk, bk = jax.random.split(key, 3)
        fan_in = cin * k * k
        bound = 1.0 / float(fan_in) ** 0.5
        w = jax.random.uniform(wk, (cout, cin, k, k), jnp.float32, -bound, bound)
        b = jax.random.uniform(bk, (cout,), jnp.float32, -bound, bound)
        params.append((w, b))
    return params


def _reference_forward(x_nchw, params):
    """Pure-JAX NCHW reference mirroring torch.nn.Conv2d + ReLU, for validation."""
    x = x_nchw
    for (w, b), (_, s, p) in zip(params, _CFG):
        x = jax.lax.conv_general_dilated(
            x, w, window_strides=(s, s), padding=[(p, p), (p, p)],
            dimension_numbers=("NCHW", "OIHW", "NCHW"))
        x = jnp.maximum(x + b[None, :, None, None], 0.0)
    return x.reshape(x.shape[0], -1)


if __name__ == "__main__":
    B, c, h = 2, 4, 16
    key = jax.random.PRNGKey(0)
    key, xk = jax.random.split(key)
    x = jax.random.normal(xk, (B, c, h, h), jnp.float32)   # NCHW, like PyTorch

    params = init_cnn2_params(key, c)

    fwd = jax.jit(cnn2_forward)
    out = jax.block_until_ready(fwd(x, params))

    ref = jax.block_until_ready(_reference_forward(x, params))
    assert out.shape == (B, 2 * c * (h // 8) * (h // 8))
    assert jnp.allclose(out, ref, atol=1e-3, rtol=1e-3), float(jnp.max(jnp.abs(out - ref)))

    print("KERNEL_OK")
</pallas_src>

<mosaic_0001>
module attributes {stable_mosaic.version = 11 : i64} {
  func.func @_cnn2_fused_kernel(%arg0: memref<32x64xf32, #tpu.memory_space<vmem>>, %arg1: memref<3x32x32xf32, #tpu.memory_space<vmem>>, %arg2: memref<3x64x64xf32, #tpu.memory_space<vmem>>, %arg3: memref<1x64xf32, #tpu.memory_space<vmem>>, %arg4: memref<4x16x32xf32, #tpu.memory_space<vmem>>, %arg5: memref<4x64x32xf32, #tpu.memory_space<vmem>>, %arg6: memref<1x32xf32, #tpu.memory_space<vmem>>, %arg7: memref<3x16x16xf32, #tpu.memory_space<vmem>>, %arg8: memref<3x32x64xf32, #tpu.memory_space<vmem>>, %arg9: memref<1x64xf32, #tpu.memory_space<vmem>>, %arg10: memref<4x8x16xf32, #tpu.memory_space<vmem>>, %arg11: memref<4x64x32xf32, #tpu.memory_space<vmem>>, %arg12: memref<1x32xf32, #tpu.memory_space<vmem>>, %arg13: memref<3x8x8xf32, #tpu.memory_space<vmem>>, %arg14: memref<3x32x32xf32, #tpu.memory_space<vmem>>, %arg15: memref<1x32xf32, #tpu.memory_space<vmem>>, %arg16: memref<4x4x8xf32, #tpu.memory_space<vmem>>, %arg17: memref<4x32x16xf32, #tpu.memory_space<vmem>>, %arg18: memref<1x16xf32, #tpu.memory_space<vmem>>, %arg19: memref<4x16xf32, #tpu.memory_space<vmem>>) attributes {dimension_semantics = [], scalar_prefetch = 0 : i64, scratch_operands = 0 : i64, tpu.core_type = #tpu.core_type<tc>} {
    %c0 = arith.constant 0 : index
    %c0_0 = arith.constant 0 : index
    %0 = vector.load %arg0[%c0, %c0_0] : memref<32x64xf32, #tpu.memory_space<vmem>>, vector<32x64xf32>
    %c0_1 = arith.constant 0 : index
    %c0_2 = arith.constant 0 : index
    %c0_3 = arith.constant 0 : index
    %1 = vector.load %arg1[%c0_1, %c0_2, %c0_3] : memref<3x32x32xf32, #tpu.memory_space<vmem>>, vector<1x32x32xf32>
    %2 = vector.shape_cast %1 : vector<1x32x32xf32> to vector<32x32xf32>
    %cst = arith.constant dense<0.000000e+00> : vector<32x64xf32>
    %3 = tpu.matmul %2, %0, %cst {dimension_numbers = #tpu.dot_dimension_numbers<[1], [0], [0], [1], [0, 0, 1, 1], [], []>} : vector<32x32xf32>, vector<32x64xf32>, vector<32x64xf32> -> vector<32x64xf32>
    %c0_4 = arith.constant 0 : index
    %c0_5 = arith.constant 0 : index
    %c0_6 = arith.constant 0 : index
    %4 = vector.load %arg2[%c0_4, %c0_5, %c0_6] : memref<3x64x64xf32, #tpu.memory_space<vmem>>, vector<1x64x64xf32>
    %5 = vector.shape_cast %4 : vector<1x64x64xf32> to vector<64x64xf32>
    %cst_7 = arith.constant dense<0.000000e+00> : vector<32x64xf32>
    %6 = tpu.matmul %3, %5, %cst_7 {dimension_numbers = #tpu.dot_dimension_numbers<[1], [0], [0], [1], [0, 0, 1, 1], [], []>} : vector<32x64xf32>, vector<64x64xf32>, vector<32x64xf32> -> vector<32x64xf32>
    %c1 = arith.constant 1 : index
    %c0_8 = arith.constant 0 : index
    %c0_9 = arith.constant 0 : index
    %7 = vector.load %arg1[%c1, %c0_8, %c0_9] : memref<3x32x32xf32, #tpu.memory_space<vmem>>, vector<1x32x32xf32>
    %8 = vector.shape_cast %7 : vector<1x32x32xf32> to vector<32x32xf32>
    %cst_10 = arith.constant dense<0.000000e+00> : vector<32x64xf32>
    %9 = tpu.matmul %8, %0, %cst_10 {dimension_numbers = #tpu.dot_dimension_numbers<[1], [0], [0], [1], [0, 0, 1, 1], [], []>} : vector<32x32xf32>, vector<32x64xf32>, vector<32x64xf32> -> vector<32x64xf32>
    %c1_11 = arith.constant 1 : index
    %c0_12 = arith.constant 0 : index
    %c0_13 = arith.constant 0 : index
    %10 = vector.load %arg2[%c1_11, %c0_12, %c0_13] : memref<3x64x64xf32, #tpu.memory_space<vmem>>, vector<1x64x64xf32>
    %11 = vector.shape_cast %10 : vector<1x64x64xf32> to vector<64x64xf32>
    %cst_14 = arith.constant dense<0.000000e+00> : vector<32x64xf32>
    %12 = tpu.matmul %9, %11, %cst_14 {dimension_numbers = #tpu.dot_dimension_numbers<[1], [0], [0], [1], [0, 0, 1, 1], [], []>} : vector<32x64xf32>, vector<64x64xf32>, vector<32x64xf32> -> vector<32x64xf32>
    %13 = arith.addf %6, %12 : vector<32x64xf32>
    %c2 = arith.constant 2 : index
    %c0_15 = arith.constant 0 : index
    %c0_16 = arith.constant 0 : index
    %14 = vector.load %arg1[%c2, %c0_15, %c0_16] : memref<3x32x32xf32, #tpu.memory_space<vmem>>, vector<1x32x32xf32>
    %15 = vector.shape_cast %14 : vector<1x32x32xf32> to vector<32x32xf32>
    %cst_17 = arith.constant dense<0.000000e+00> : vector<32x64xf32>
    %16 = tpu.matmul %15, %0, %cst_17 {dimension_numbers = #tpu.dot_dimension_numbers<[1], [0], [0], [1], [0, 0, 1, 1], [], []>} : vector<32x32xf32>, vector<32x64xf32>, vector<32x64xf32> -> vector<32x64xf32>
    %c2_18 = arith.constant 2 : index
    %c0_19 = arith.constant 0 : index
    %c0_20 = arith.constant 0 : index
    %17 = vector.load %arg2[%c2_18, %c0_19, %c0_20] : memref<3x64x64xf32, #tpu.memory_space<vmem>>, vector<1x64x64xf32>
    %18 = vector.shape_cast %17 : vector<1x64x64xf32> to vector<64x64xf32>
    %cst_21 = arith.constant dense<0.000000e+00> : vector<32x64xf32>
    %19 = tpu.matmul %16, %18, %cst_21 {dimension_numbers = #tpu.dot_dimension_numbers<[1], [0], [0], [1], [0, 0, 1, 1], [], []>} : vector<32x64xf32>, vector<64x64xf32>, vector<32x64xf32> -> vector<32x64xf32>
    %20 = arith.addf %13, %19 : vector<32x64xf32>
    %c0_22 = arith.constant 0 : index
    %c0_23 = arith.constant 0 : index
    %21 = vector.load %arg3[%c0_22, %c0_23] : memref<1x64xf32, #tpu.memory_space<vmem>>, vector<1x64xf32>
    %22 = vector.broadcast %21 : vector<1x64xf32> to vector<32x64xf32>
    %23 = arith.addf %20, %22 : vector<32x64xf32>
    %cst_24 = arith.constant 0.000000e+00 : f32
    %24 = vector.broadcast %cst_24 : f32 to vector<32x64xf32>
    %25 = arith.maximumf %23, %24 : vector<32x64xf32>
    %c0_25 = arith.constant 0 : index
    %c0_26 = arith.constant 0 : index
    %c0_27 = arith.constant 0 : index
    %26 = vector.load %arg4[%c0_25, %c0_26, %c0_27] : memref<4x16x32xf32, #tpu.memory_space<vmem>>, vector<1x16x32xf32>
    %27 = vector.shape_cast %26 : vector<1x16x32xf32> to vector<16x32xf32>
    %cst_28 = arith.constant dense<0.000000e+00> : vector<16x64xf32>
    %28 = tpu.matmul %27, %25, %cst_28 {dimension_numbers = #tpu.dot_dimension_numbers<[1], [0], [0], [1], [0, 0, 1, 1], [], []>} : vector<16x32xf32>, vector<32x64xf32>, vector<16x64xf32> -> vector<16x64xf32>
    %c0_29 = arith.constant 0 : index
    %c0_30 = arith.constant 0 : index
    %c0_31 = arith.constant 0 : index
    %29 = vector.load %arg5[%c0_29, %c0_30, %c0_31] : memref<4x64x32xf32, #tpu.memory_space<vmem>>, vector<1x64x32xf32>
    %30 = vector.shape_cast %29 : vector<1x64x32xf32> to vector<64x32xf32>
    %cst_32 = arith.constant dense<0.000000e+00> : vector<16x32xf32>
    %31 = tpu.matmul %28, %30, %cst_32 {dimension_numbers = #tpu.dot_dimension_numbers<[1], [0], [0], [1], [0, 0, 1, 1], [], []>} : vector<16x64xf32>, vector<64x32xf32>, vector<16x32xf32> -> vector<16x32xf32>
    %c1_33 = arith.constant 1 : index
    %c0_34 = arith.constant 0 : index
    %c0_35 = arith.constant 0 : index
    %32 = vector.load %arg4[%c1_33, %c0_34, %c0_35] : memref<4x16x32xf32, #tpu.memory_space<vmem>>, vector<1x16x32xf32>
    %33 = vector.shape_cast %32 : vector<1x16x32xf32> to vector<16x32xf32>
    %cst_36 = arith.constant dense<0.000000e+00> : vector<16x64xf32>
    %34 = tpu.matmul %33, %25, %cst_36 {dimension_numbers = #tpu.dot_dimension_numbers<[1], [0], [0], [1], [0, 0, 1, 1], [], []>} : vector<16x32xf32>, vector<32x64xf32>, vector<16x64xf32> -> vector<16x64xf32>
    %c1_37 = arith.constant 1 : index
    %c0_38 = arith.constant 0 : index
    %c0_39 = arith.constant 0 : index
    %35 = vector.load %arg5[%c1_37, %c0_38, %c0_39] : memref<4x64x32xf32, #tpu.memory_space<vmem>>, vector<1x64x32xf32>
    %36 = vector.shape_cast %35 : vector<1x64x32xf32> to vector<64x32xf32>
    %cst_40 = arith.constant dense<0.000000e+00> : vector<16x32xf32>
    %37 = tpu.matmul %34, %36, %cst_40 {dimension_numbers = #tpu.dot_dimension_numbers<[1], [0], [0], [1], [0, 0, 1, 1], [], []>} : vector<16x64xf32>, vector<64x32xf32>, vector<16x32xf32> -> vector<16x32xf32>
    %38 = arith.addf %31, %37 : vector<16x32xf32>
    %c2_41 = arith.constant 2 : index
    %c0_42 = arith.constant 0 : index
    %c0_43 = arith.constant 0 : index
    %39 = vector.load %arg4[%c2_41, %c0_42, %c0_43] : memref<4x16x32xf32, #tpu.memory_space<vmem>>, vector<1x16x32xf32>
    %40 = vector.shape_cast %39 : vector<1x16x32xf32> to vector<16x32xf32>
    %cst_44 = arith.constant dense<0.000000e+00> : vector<16x64xf32>
    %41 = tpu.matmul %40, %25, %cst_44 {dimension_numbers = #tpu.dot_dimension_numbers<[1], [0], [0], [1], [0, 0, 1, 1], [], []>} : vector<16x32xf32>, vector<32x64xf32>, vector<16x64xf32> -> vector<16x64xf32>
    %c2_45 = arith.constant 2 : index
    %c0_46 = arith.constant 0 : index
    %c0_47 = arith.constant 0 : index
    %42 = vector.load %arg5[%c2_45, %c0_46, %c0_47] : memref<4x64x32xf32, #tpu.memory_space<vmem>>, vector<1x64x32xf32>
    %43 = vector.shape_cast %42 : vector<1x64x32xf32> to vector<64x32xf32>
    %cst_48 = arith.constant dense<0.000000e+00> : vector<16x32xf32>
    %44 = tpu.matmul %41, %43, %cst_48 {dimension_numbers = #tpu.dot_dimension_numbers<[1], [0], [0], [1], [0, 0, 1, 1], [], []>} : vector<16x64xf32>, vector<64x32xf32>, vector<16x32xf32> -> vector<16x32xf32>
    %45 = arith.addf %38, %44 : vector<16x32xf32>
    %c3 = arith.constant 3 : index
    %c0_49 = arith.constant 0 : index
    %c0_50 = arith.constant 0 : index
    %46 = vector.load %arg4[%c3, %c0_49, %c0_50] : memref<4x16x32xf32, #tpu.memory_space<vmem>>, vector<1x16x32xf32>
    %47 = vector.shape_cast %46 : vector<1x16x32xf32> to vector<16x32xf32>
    %cst_51 = arith.constant dense<0.000000e+00> : vector<16x64xf32>
    %48 = tpu.matmul %47, %25, %cst_51 {dimension_numbers = #tpu.dot_dimension_numbers<[1], [0], [0], [1], [0, 0, 1, 1], [], []>} : vector<16x32xf32>, vector<32x64xf32>, vector<16x64xf32> -> vector<16x64xf32>
    %c3_52 = arith.constant 3 : index
    %c0_53 = arith.constant 0 : index
    %c0_54 = arith.constant 0 : index
    %49 = vector.load %arg5[%c3_52, %c0_53, %c0_54] : memref<4x64x32xf32, #tpu.memory_space<vmem>>, vector<1x64x32xf32>
    %50 = vector.shape_cast %49 : vector<1x64x32xf32> to vector<64x32xf32>
    %cst_55 = arith.constant dense<0.000000e+00> : vector<16x32xf32>
    %51 = tpu.matmul %48, %50, %cst_55 {dimension_numbers = #tpu.dot_dimension_numbers<[1], [0], [0], [1], [0, 0, 1, 1], [], []>} : vector<16x64xf32>, vector<64x32xf32>, vector<16x32xf32> -> vector<16x32xf32>
    %52 = arith.addf %45, %51 : vector<16x32xf32>
    %c0_56 = arith.constant 0 : index
    %c0_57 = arith.constant 0 : index
    %53 = vector.load %arg6[%c0_56, %c0_57] : memref<1x32xf32, #tpu.memory_space<vmem>>, vector<1x32xf32>
    %54 = vector.broadcast %53 : vector<1x32xf32> to vector<16x32xf32>
    %55 = arith.addf %52, %54 : vector<16x32xf32>
    %cst_58 = arith.constant 0.000000e+00 : f32
    %56 = vector.broadcast %cst_58 : f32 to vector<16x32xf32>
    %57 = arith.maximumf %55, %56 : vector<16x32xf32>
    %c0_59 = arith.constant 0 : index
    %c0_60 = arith.constant 0 : index
    %c0_61 = arith.constant 0 : index
    %58 = vector.load %arg7[%c0_59, %c0_60, %c0_61] : memref<3x16x16xf32, #tpu.memory_space<vmem>>, vector<1x16x16xf32>
    %59 = vector.shape_cast %58 : vector<1x16x16xf32> to vector<16x16xf32>
    %cst_62 = arith.constant dense<0.000000e+00> : vector<16x32xf32>
    %60 = tpu.matmul %59, %57, %cst_62 {dimension_numbers = #tpu.dot_dimension_numbers<[1], [0], [0], [1], [0, 0, 1, 1], [], []>} : vector<16x16xf32>, vector<16x32xf32>, vector<16x32xf32> -> vector<16x32xf32>
    %c0_63 = arith.constant 0 : index
    %c0_64 = arith.constant 0 : index
    %c0_65 = arith.constant 0 : index
    %61 = vector.load %arg8[%c0_63, %c0_64, %c0_65] : memref<3x32x64xf32, #tpu.memory_space<vmem>>, vector<1x32x64xf32>
    %62 = vector.shape_cast %61 : vector<1x32x64xf32> to vector<32x64xf32>
    %cst_66 = arith.constant dense<0.000000e+00> : vector<16x64xf32>
    %63 = tpu.matmul %60, %62, %cst_66 {dimension_numbers = #tpu.dot_dimension_numbers<[1], [0], [0], [1], [0, 0, 1, 1], [], []>} : vector<16x32xf32>, vector<32x64xf32>, vector<16x64xf32> -> vector<16x64xf32>
    %c1_67 = arith.constant 1 : index
    %c0_68 = arith.constant 0 : index
    %c0_69 = arith.constant 0 : index
    %64 = vector.load %arg7[%c1_67, %c0_68, %c0_69] : memref<3x16x16xf32, #tpu.memory_space<vmem>>, vector<1x16x16xf32>
    %65 = vector.shape_cast %64 : vector<1x16x16xf32> to vector<16x16xf32>
    %cst_70 = arith.constant dense<0.000000e+00> : vector<16x32xf32>
    %66 = tpu.matmul %65, %57, %cst_70 {dimension_numbers = #tpu.dot_dimension_numbers<[1], [0], [0], [1], [0, 0, 1, 1], [], []>} : vector<16x16xf32>, vector<16x32xf32>, vector<16x32xf32> -> vector<16x32xf32>
    %c1_71 = arith.constant 1 : index
    %c0_72 = arith.constant 0 : index
    %c0_73 = arith.constant 0 : index
    %67 = vector.load %arg8[%c1_71, %c0_72, %c0_73] : memref<3x32x64xf32, #tpu.memory_space<vmem>>, vector<1x32x64xf32>
    %68 = vector.shape_cast %67 : vector<1x32x64xf32> to vector<32x64xf32>
    %cst_74 = arith.constant dense<0.000000e+00> : vector<16x64xf32>
    %69 = tpu.matmul %66, %68, %cst_74 {dimension_numbers = #tpu.dot_dimension_numbers<[1], [0], [0], [1], [0, 0, 1, 1], [], []>} : vector<16x32xf32>, vector<32x64xf32>, vector<16x64xf32> -> vector<16x64xf32>
    %70 = arith.addf %63, %69 : vector<16x64xf32>
    %c2_75 = arith.constant 2 : index
    %c0_76 = arith.constant 0 : index
    %c0_77 = arith.constant 0 : index
    %71 = vector.load %arg7[%c2_75, %c0_76, %c0_77] : memref<3x16x16xf32, #tpu.memory_space<vmem>>, vector<1x16x16xf32>
    %72 = vector.shape_cast %71 : vector<1x16x16xf32> to vector<16x16xf32>
    %cst_78 = arith.constant dense<0.000000e+00> : vector<16x32xf32>
    %73 = tpu.matmul %72, %57, %cst_78 {dimension_numbers = #tpu.dot_dimension_numbers<[1], [0], [0], [1], [0, 0, 1, 1], [], []>} : vector<16x16xf32>, vector<16x32xf32>, vector<16x32xf32> -> vector<16x32xf32>
    %c2_79 = arith.constant 2 : index
    %c0_80 = arith.constant 0 : index
    %c0_81 = arith.constant 0 : index
    %74 = vector.load %arg8[%c2_79, %c0_80, %c0_81] : memref<3x32x64xf32, #tpu.memory_space<vmem>>, vector<1x32x64xf32>
    %75 = vector.shape_cast %74 : vector<1x32x64xf32> to vector<32x64xf32>
    %cst_82 = arith.constant dense<0.000000e+00> : vector<16x64xf32>
    %76 = tpu.matmul %73, %75, %cst_82 {dimension_numbers = #tpu.dot_dimension_numbers<[1], [0], [0], [1], [0, 0, 1, 1], [], []>} : vector<16x32xf32>, vector<32x64xf32>, vector<16x64xf32> -> vector<16x64xf32>
    %77 = arith.addf %70, %76 : vector<16x64xf32>
    %c0_83 = arith.constant 0 : index
    %c0_84 = arith.constant 0 : index
    %78 = vector.load %arg9[%c0_83, %c0_84] : memref<1x64xf32, #tpu.memory_space<vmem>>, vector<1x64xf32>
    %79 = vector.broadcast %78 : vector<1x64xf32> to vector<16x64xf32>
    %80 = arith.addf %77, %79 : vector<16x64xf32>
    %cst_85 = arith.constant 0.000000e+00 : f32
    %81 = vector.broadcast %cst_85 : f32 to vector<16x64xf32>
    %82 = arith.maximumf %80, %81 : vector<16x64xf32>
    %c0_86 = arith.constant 0 : index
    %c0_87 = arith.constant 0 : index
    %c0_88 = arith.constant 0 : index
    %83 = vector.load %arg10[%c0_86, %c0_87, %c0_88] : memref<4x8x16xf32, #tpu.memory_space<vmem>>, vector<1x8x16xf32>
    %84 = vector.shape_cast %83 : vector<1x8x16xf32> to vector<8x16xf32>
    %cst_89 = arith.constant dense<0.000000e+00> : vector<8x64xf32>
    %85 = tpu.matmul %84, %82, %cst_89 {dimension_numbers = #tpu.dot_dimension_numbers<[1], [0], [0], [1], [0, 0, 1, 1], [], []>} : vector<8x16xf32>, vector<16x64xf32>, vector<8x64xf32> -> vector<8x64xf32>
    %c0_90 = arith.constant 0 : index
    %c0_91 = arith.constant 0 : index
    %c0_92 = arith.constant 0 : index
    %86 = vector.load %arg11[%c0_90, %c0_91, %c0_92] : memref<4x64x32xf32, #tpu.memory_space<vmem>>, vector<1x64x32xf32>
    %87 = vector.shape_cast %86 : vector<1x64x32xf32> to vector<64x32xf32>
    %cst_93 = arith.constant dense<0.000000e+00> : vector<8x32xf32>
    %88 = tpu.matmul %85, %87, %cst_93 {dimension_numbers = #tpu.dot_dimension_numbers<[1], [0], [0], [1], [0, 0, 1, 1], [], []>} : vector<8x64xf32>, vector<64x32xf32>, vector<8x32xf32> -> vector<8x32xf32>
    %c1_94 = arith.constant 1 : index
    %c0_95 = arith.constant 0 : index
    %c0_96 = arith.constant 0 : index
    %89 = vector.load %arg10[%c1_94, %c0_95, %c0_96] : memref<4x8x16xf32, #tpu.memory_space<vmem>>, vector<1x8x16xf32>
    %90 = vector.shape_cast %89 : vector<1x8x16xf32> to vector<8x16xf32>
    %cst_97 = arith.constant dense<0.000000e+00> : vector<8x64xf32>
    %91 = tpu.matmul %90, %82, %cst_97 {dimension_numbers = #tpu.dot_dimension_numbers<[1], [0], [0], [1], [0, 0, 1, 1], [], []>} : vector<8x16xf32>, vector<16x64xf32>, vector<8x64xf32> -> vector<8x64xf32>
    %c1_98 = arith.constant 1 : index
    %c0_99 = arith.constant 0 : index
    %c0_100 = arith.constant 0 : index
    %92 = vector.load %arg11[%c1_98, %c0_99, %c0_100] : memref<4x64x32xf32, #tpu.memory_space<vmem>>, vector<1x64x32xf32>
    %93 = vector.shape_cast %92 : vector<1x64x32xf32> to vector<64x32xf32>
    %cst_101 = arith.constant dense<0.000000e+00> : vector<8x32xf32>
    %94 = tpu.matmul %91, %93, %cst_101 {dimension_numbers = #tpu.dot_dimension_numbers<[1], [0], [0], [1], [0, 0, 1, 1], [], []>} : vector<8x64xf32>, vector<64x32xf32>, vector<8x32xf32> -> vector<8x32xf32>
    %95 = arith.addf %88, %94 : vector<8x32xf32>
    %c2_102 = arith.constant 2 : index
    %c0_103 = arith.constant 0 : index
    %c0_104 = arith.constant 0 : index
    %96 = vector.load %arg10[%c2_102, %c0_103, %c0_104] : memref<4x8x16xf32, #tpu.memory_space<vmem>>, vector<1x8x16xf32>
    %97 = vector.shape_cast %96 : vector<1x8x16xf32> to vector<8x16xf32>
    %cst_105 = arith.constant dense<0.000000e+00> : vector<8x64xf32>
    %98 = tpu.matmul %97, %82, %cst_105 {dimension_numbers = #tpu.dot_dimension_numbers<[1], [0], [0], [1], [0, 0, 1, 1], [], []>} : vector<8x16xf32>, vector<16x64xf32>, vector<8x64xf32> -> vector<8x64xf32>
    %c2_106 = arith.constant 2 : index
    %c0_107 = arith.constant 0 : index
    %c0_108 = arith.constant 0 : index
    %99 = vector.load %arg11[%c2_106, %c0_107, %c0_108] : memref<4x64x32xf32, #tpu.memory_space<vmem>>, vector<1x64x32xf32>
    %100 = vector.shape_cast %99 : vector<1x64x32xf32> to vector<64x32xf32>
    %cst_109 = arith.constant dense<0.000000e+00> : vector<8x32xf32>
    %101 = tpu.matmul %98, %100, %cst_109 {dimension_numbers = #tpu.dot_dimension_numbers<[1], [0], [0], [1], [0, 0, 1, 1], [], []>} : vector<8x64xf32>, vector<64x32xf32>, vector<8x32xf32> -> vector<8x32xf32>
    %102 = arith.addf %95, %101 : vector<8x32xf32>
    %c3_110 = arith.constant 3 : index
    %c0_111 = arith.constant 0 : index
    %c0_112 = arith.constant 0 : index
    %103 = vector.load %arg10[%c3_110, %c0_111, %c0_112] : memref<4x8x16xf32, #tpu.memory_space<vmem>>, vector<1x8x16xf32>
    %104 = vector.shape_cast %103 : vector<1x8x16xf32> to vector<8x16xf32>
    %cst_113 = arith.constant dense<0.000000e+00> : vector<8x64xf32>
    %105 = tpu.matmul %104, %82, %cst_113 {dimension_numbers = #tpu.dot_dimension_numbers<[1], [0], [0], [1], [0, 0, 1, 1], [], []>} : vector<8x16xf32>, vector<16x64xf32>, vector<8x64xf32> -> vector<8x64xf32>
    %c3_114 = arith.constant 3 : index
    %c0_115 = arith.constant 0 : index
    %c0_116 = arith.constant 0 : index
    %106 = vector.load %arg11[%c3_114, %c0_115, %c0_116] : memref<4x64x32xf32, #tpu.memory_space<vmem>>, vector<1x64x32xf32>
    %107 = vector.shape_cast %106 : vector<1x64x32xf32> to vector<64x32xf32>
    %cst_117 = arith.constant dense<0.000000e+00> : vector<8x32xf32>
    %108 = tpu.matmul %105, %107, %cst_117 {dimension_numbers = #tpu.dot_dimension_numbers<[1], [0], [0], [1], [0, 0, 1, 1], [], []>} : vector<8x64xf32>, vector<64x32xf32>, vector<8x32xf32> -> vector<8x32xf32>
    %109 = arith.addf %102, %108 : vector<8x32xf32>
    %c0_118 = arith.constant 0 : index
    %c0_119 = arith.constant 0 : index
    %110 = vector.load %arg12[%c0_118, %c0_119] : memref<1x32xf32, #tpu.memory_space<vmem>>, vector<1x32xf32>
    %111 = vector.broadcast %110 : vector<1x32xf32> to vector<8x32xf32>
    %112 = arith.addf %109, %111 : vector<8x32xf32>
    %cst_120 = arith.constant 0.000000e+00 : f32
    %113 = vector.broadcast %cst_120 : f32 to vector<8x32xf32>
    %114 = arith.maximumf %112, %113 : vector<8x32xf32>
    %c0_121 = arith.constant 0 : index
    %c0_122 = arith.constant 0 : index
    %c0_123 = arith.constant 0 : index
    %115 = vector.load %arg13[%c0_121, %c0_122, %c0_123] : memref<3x8x8xf32, #tpu.memory_space<vmem>>, vector<1x8x8xf32>
    %116 = vector.shape_cast %115 : vector<1x8x8xf32> to vector<8x8xf32>
    %cst_124 = arith.constant dense<0.000000e+00> : vector<8x32xf32>
    %117 = tpu.matmul %116, %114, %cst_124 {dimension_numbers = #tpu.dot_dimension_numbers<[1], [0], [0], [1], [0, 0, 1, 1], [], []>} : vector<8x8xf32>, vector<8x32xf32>, vector<8x32xf32> -> vector<8x32xf32>
    %c0_125 = arith.constant 0 : index
    %c0_126 = arith.constant 0 : index
    %c0_127 = arith.constant 0 : index
    %118 = vector.load %arg14[%c0_125, %c0_126, %c0_127] : memref<3x32x32xf32, #tpu.memory_space<vmem>>, vector<1x32x32xf32>
    %119 = vector.shape_cast %118 : vector<1x32x32xf32> to vector<32x32xf32>
    %cst_128 = arith.constant dense<0.000000e+00> : vector<8x32xf32>
    %120 = tpu.matmul %117, %119, %cst_128 {dimension_numbers = #tpu.dot_dimension_numbers<[1], [0], [0], [1], [0, 0, 1, 1], [], []>} : vector<8x32xf32>, vector<32x32xf32>, vector<8x32xf32> -> vector<8x32xf32>
    %c1_129 = arith.constant 1 : index
    %c0_130 = arith.constant 0 : index
    %c0_131 = arith.constant 0 : index
    %121 = vector.load %arg13[%c1_129, %c0_130, %c0_131] : memref<3x8x8xf32, #tpu.memory_space<vmem>>, vector<1x8x8xf32>
    %122 = vector.shape_cast %121 : vector<1x8x8xf32> to vector<8x8xf32>
    %cst_132 = arith.constant dense<0.000000e+00> : vector<8x32xf32>
    %123 = tpu.matmul %122, %114, %cst_132 {dimension_numbers = #tpu.dot_dimension_numbers<[1], [0], [0], [1], [0, 0, 1, 1], [], []>} : vector<8x8xf32>, vector<8x32xf32>, vector<8x32xf32> -> vector<8x32xf32>
    %c1_133 = arith.constant 1 : index
    %c0_134 = arith.constant 0 : index
    %c0_135 = arith.constant 0 : index
    %124 = vector.load %arg14[%c1_133, %c0_134, %c0_135] : memref<3x32x32xf32, #tpu.memory_space<vmem>>, vector<1x32x32xf32>
    %125 = vector.shape_cast %124 : vector<1x32x32xf32> to vector<32x32xf32>
    %cst_136 = arith.constant dense<0.000000e+00> : vector<8x32xf32>
    %126 = tpu.matmul %123, %125, %cst_136 {dimension_numbers = #tpu.dot_dimension_numbers<[1], [0], [0], [1], [0, 0, 1, 1], [], []>} : vector<8x32xf32>, vector<32x32xf32>, vector<8x32xf32> -> vector<8x32xf32>
    %127 = arith.addf %120, %126 : vector<8x32xf32>
    %c2_137 = arith.constant 2 : index
    %c0_138 = arith.constant 0 : index
    %c0_139 = arith.constant 0 : index
    %128 = vector.load %arg13[%c2_137, %c0_138, %c0_139] : memref<3x8x8xf32, #tpu.memory_space<vmem>>, vector<1x8x8xf32>
    %129 = vector.shape_cast %128 : vector<1x8x8xf32> to vector<8x8xf32>
    %cst_140 = arith.constant dense<0.000000e+00> : vector<8x32xf32>
    %130 = tpu.matmul %129, %114, %cst_140 {dimension_numbers = #tpu.dot_dimension_numbers<[1], [0], [0], [1], [0, 0, 1, 1], [], []>} : vector<8x8xf32>, vector<8x32xf32>, vector<8x32xf32> -> vector<8x32xf32>
    %c2_141 = arith.constant 2 : index
    %c0_142 = arith.constant 0 : index
    %c0_143 = arith.constant 0 : index
    %131 = vector.load %arg14[%c2_141, %c0_142, %c0_143] : memref<3x32x32xf32, #tpu.memory_space<vmem>>, vector<1x32x32xf32>
    %132 = vector.shape_cast %131 : vector<1x32x32xf32> to vector<32x32xf32>
    %cst_144 = arith.constant dense<0.000000e+00> : vector<8x32xf32>
    %133 = tpu.matmul %130, %132, %cst_144 {dimension_numbers = #tpu.dot_dimension_numbers<[1], [0], [0], [1], [0, 0, 1, 1], [], []>} : vector<8x32xf32>, vector<32x32xf32>, vector<8x32xf32> -> vector<8x32xf32>
    %134 = arith.addf %127, %133 : vector<8x32xf32>
    %c0_145 = arith.constant 0 : index
    %c0_146 = arith.constant 0 : index
    %135 = vector.load %arg15[%c0_145, %c0_146] : memref<1x32xf32, #tpu.memory_space<vmem>>, vector<1x32xf32>
    %136 = vector.broadcast %135 : vector<1x32xf32> to vector<8x32xf32>
    %137 = arith.addf %134, %136 : vector<8x32xf32>
    %cst_147 = arith.constant 0.000000e+00 : f32
    %138 = vector.broadcast %cst_147 : f32 to vector<8x32xf32>
    %139 = arith.maximumf %137, %138 : vector<8x32xf32>
    %c0_148 = arith.constant 0 : index
    %c0_149 = arith.constant 0 : index
    %c0_150 = arith.constant 0 : index
    %140 = vector.load %arg16[%c0_148, %c0_149, %c0_150] : memref<4x4x8xf32, #tpu.memory_space<vmem>>, vector<1x4x8xf32>
    %141 = vector.shape_cast %140 : vector<1x4x8xf32> to vector<4x8xf32>
    %cst_151 = arith.constant dense<0.000000e+00> : vector<4x32xf32>
    %142 = tpu.matmul %141, %139, %cst_151 {dimension_numbers = #tpu.dot_dimension_numbers<[1], [0], [0], [1], [0, 0, 1, 1], [], []>} : vector<4x8xf32>, vector<8x32xf32>, vector<4x32xf32> -> vector<4x32xf32>
    %c0_152 = arith.constant 0 : index
    %c0_153 = arith.constant 0 : index
    %c0_154 = arith.constant 0 : index
    %143 = vector.load %arg17[%c0_152, %c0_153, %c0_154] : memref<4x32x16xf32, #tpu.memory_space<vmem>>, vector<1x32x16xf32>
    %144 = vector.shape_cast %143 : vector<1x32x16xf32> to vector<32x16xf32>
    %cst_155 = arith.constant dense<0.000000e+00> : vector<4x16xf32>
    %145 = tpu.matmul %142, %144, %cst_155 {dimension_numbers = #tpu.dot_dimension_numbers<[1], [0], [0], [1], [0, 0, 1, 1], [], []>} : vector<4x32xf32>, vector<32x16xf32>, vector<4x16xf32> -> vector<4x16xf32>
    %c1_156 = arith.constant 1 : index
    %c0_157 = arith.constant 0 : index
    %c0_158 = arith.constant 0 : index
    %146 = vector.load %arg16[%c1_156, %c0_157, %c0_158] : memref<4x4x8xf32, #tpu.memory_space<vmem>>, vector<1x4x8xf32>
    %147 = vector.shape_cast %146 : vector<1x4x8xf32> to vector<4x8xf32>
    %cst_159 = arith.constant dense<0.000000e+00> : vector<4x32xf32>
    %148 = tpu.matmul %147, %139, %cst_159 {dimension_numbers = #tpu.dot_dimension_numbers<[1], [0], [0], [1], [0, 0, 1, 1], [], []>} : vector<4x8xf32>, vector<8x32xf32>, vector<4x32xf32> -> vector<4x32xf32>
    %c1_160 = arith.constant 1 : index
    %c0_161 = arith.constant 0 : index
    %c0_162 = arith.constant 0 : index
    %149 = vector.load %arg17[%c1_160, %c0_161, %c0_162] : memref<4x32x16xf32, #tpu.memory_space<vmem>>, vector<1x32x16xf32>
    %150 = vector.shape_cast %149 : vector<1x32x16xf32> to vector<32x16xf32>
    %cst_163 = arith.constant dense<0.000000e+00> : vector<4x16xf32>
    %151 = tpu.matmul %148, %150, %cst_163 {dimension_numbers = #tpu.dot_dimension_numbers<[1], [0], [0], [1], [0, 0, 1, 1], [], []>} : vector<4x32xf32>, vector<32x16xf32>, vector<4x16xf32> -> vector<4x16xf32>
    %152 = arith.addf %145, %151 : vector<4x16xf32>
    %c2_164 = arith.constant 2 : index
    %c0_165 = arith.constant 0 : index
    %c0_166 = arith.constant 0 : index
    %153 = vector.load %arg16[%c2_164, %c0_165, %c0_166] : memref<4x4x8xf32, #tpu.memory_space<vmem>>, vector<1x4x8xf32>
    %154 = vector.shape_cast %153 : vector<1x4x8xf32> to vector<4x8xf32>
    %cst_167 = arith.constant dense<0.000000e+00> : vector<4x32xf32>
    %155 = tpu.matmul %154, %139, %cst_167 {dimension_numbers = #tpu.dot_dimension_numbers<[1], [0], [0], [1], [0, 0, 1, 1], [], []>} : vector<4x8xf32>, vector<8x32xf32>, vector<4x32xf32> -> vector<4x32xf32>
    %c2_168 = arith.constant 2 : index
    %c0_169 = arith.constant 0 : index
    %c0_170 = arith.constant 0 : index
    %156 = vector.load %arg17[%c2_168, %c0_169, %c0_170] : memref<4x32x16xf32, #tpu.memory_space<vmem>>, vector<1x32x16xf32>
    %157 = vector.shape_cast %156 : vector<1x32x16xf32> to vector<32x16xf32>
    %cst_171 = arith.constant dense<0.000000e+00> : vector<4x16xf32>
    %158 = tpu.matmul %155, %157, %cst_171 {dimension_numbers = #tpu.dot_dimension_numbers<[1], [0], [0], [1], [0, 0, 1, 1], [], []>} : vector<4x32xf32>, vector<32x16xf32>, vector<4x16xf32> -> vector<4x16xf32>
    %159 = arith.addf %152, %158 : vector<4x16xf32>
    %c3_172 = arith.constant 3 : index
    %c0_173 = arith.constant 0 : index
    %c0_174 = arith.constant 0 : index
    %160 = vector.load %arg16[%c3_172, %c0_173, %c0_174] : memref<4x4x8xf32, #tpu.memory_space<vmem>>, vector<1x4x8xf32>
    %161 = vector.shape_cast %160 : vector<1x4x8xf32> to vector<4x8xf32>
    %cst_175 = arith.constant dense<0.000000e+00> : vector<4x32xf32>
    %162 = tpu.matmul %161, %139, %cst_175 {dimension_numbers = #tpu.dot_dimension_numbers<[1], [0], [0], [1], [0, 0, 1, 1], [], []>} : vector<4x8xf32>, vector<8x32xf32>, vector<4x32xf32> -> vector<4x32xf32>
    %c3_176 = arith.constant 3 : index
    %c0_177 = arith.constant 0 : index
    %c0_178 = arith.constant 0 : index
    %163 = vector.load %arg17[%c3_176, %c0_177, %c0_178] : memref<4x32x16xf32, #tpu.memory_space<vmem>>, vector<1x32x16xf32>
    %164 = vector.shape_cast %163 : vector<1x32x16xf32> to vector<32x16xf32>
    %cst_179 = arith.constant dense<0.000000e+00> : vector<4x16xf32>
    %165 = tpu.matmul %162, %164, %cst_179 {dimension_numbers = #tpu.dot_dimension_numbers<[1], [0], [0], [1], [0, 0, 1, 1], [], []>} : vector<4x32xf32>, vector<32x16xf32>, vector<4x16xf32> -> vector<4x16xf32>
    %166 = arith.addf %159, %165 : vector<4x16xf32>
    %c0_180 = arith.constant 0 : index
    %c0_181 = arith.constant 0 : index
    %167 = vector.load %arg18[%c0_180, %c0_181] : memref<1x16xf32, #tpu.memory_space<vmem>>, vector<1x16xf32>
    %168 = vector.broadcast %167 : vector<1x16xf32> to vector<4x16xf32>
    %169 = arith.addf %166, %168 : vector<4x16xf32>
    %cst_182 = arith.constant 0.000000e+00 : f32
    %170 = vector.broadcast %cst_182 : f32 to vector<4x16xf32>
    %171 = arith.maximumf %169, %170 : vector<4x16xf32>
    %c0_183 = arith.constant 0 : index
    %c0_184 = arith.constant 0 : index
    %172 = vector.load %arg19[%c0_183, %c0_184] : memref<4x16xf32, #tpu.memory_space<vmem>>, vector<4x16xf32>
    tpu.vector_store %arg19[%c0_183, %c0_184], %171 {strides = array<i32>} : memref<4x16xf32, #tpu.memory_space<vmem>>, vector<4x16xf32>,
    return
  }
}

</mosaic_0001>

<llo_original>
// kernel: tile.33
$region0: #{tile.33}
  #allocation0 [shape = 's32[1]{0}', space=sflag, size = 0x4, scoped, tag = 'scoped memory for tile.33']
  %s0 = inlined_call_operand.vmem [shape: f32[4], index: 0, kind: input, shape index: {}]
  %s1 = inlined_call_operand.vmem [shape: f32[16,4], index: 1, kind: output, shape index: {}]
  // Predicated region
  $region2: #{tile.33} parent=0 // pred_check
    _
  $region3: #{tile.33} parent=0 // pred_check_branch
    %3 = sbr.rel (0) target = $region5
  $region4: #{tile.33} parent=0 // pred_region
    _
  $region5: #{tile.33} parent=0 // pred_fallthru
    _
  %v4 = vld [vmem:[%s0] ss:$0 sm:$0xff]
  %5 = vst [vmem:[%s1] sm:$0xff] %v4
  %s6 = scalar_lea.vmem %s1, 8
  %7 = vst [vmem:[%s6] sm:$0xff] %v4

// kernel: tile.34
$region0: #{tile.34}
  %s0 = inlined_call_operand.vmem [shape: f32[16,4], index: 0, kind: input, shape index: {}]
  %s1 = inlined_call_operand.vmem [shape: f32[1,64], index: 1, kind: output, shape index: {}]
  $region1: #{tile.34} parent=0
    #allocation0 [shape = 'u8[4096]{0}', space=vmem, size = 0x1000, scoped, tag = 'scoped mem for output reshape']
    %v2 = vld [vmem:[%s0] sm:$0x1]
    %vm3 = vcmask 31744
    %4 = vst.msk [vmem:[#allocation0] sm:$0x1] %vm3, %v2
    %s5 = scalar_lea.vmem %s0, 15
    %v6 = vld [vmem:[%s5] sm:$0x1]
    %7 = vrot.lane.b32.xlu0 %v6, 60
    %v8 = vpop.permute.xlu0 %7
    %vm9 = vcmask 523744
    %10 = vst.msk [vmem:[#allocation0] sm:$0x1] %vm9, %v8
    %s11 = scalar_lea.vmem %s0, 14
    %v12 = vld [vmem:[%s11] sm:$0x1]
    %13 = vrot.lane.b32.xlu0 %v12, 56
    %v14 = vpop.permute.xlu0 %13
    %vm15 = vcmask 490944
    %16 = vst.msk [vmem:[#allocation0] sm:$0x1] %vm15, %v14
    %s17 = scalar_lea.vmem %s0, 13
    %v18 = vld [vmem:[%s17] sm:$0x1]
    %19 = vrot.lane.b32.xlu0 %v18, 52
    %v20 = vpop.permute.xlu0 %19
    %vm21 = vcmask 458144
    %22 = vst.msk [vmem:[#allocation0] sm:$0x1] %vm21, %v20
    %s23 = scalar_lea.vmem %s0, 12
    %v24 = vld [vmem:[%s23] sm:$0x1]
    %25 = vrot.lane.b32.xlu0 %v24, 48
    %v26 = vpop.permute.xlu0 %25
    %vm27 = vcmask 425344
    %28 = vst.msk [vmem:[#allocation0] sm:$0x1] %vm27, %v26
    %s29 = scalar_lea.vmem %s0, 11
    %v30 = vld [vmem:[%s29] sm:$0x1]
    %31 = vrot.lane.b32.xlu0 %v30, 44
    %v32 = vpop.permute.xlu0 %31
    %vm33 = vcmask 392544
    %34 = vst.msk [vmem:[#allocation0] sm:$0x1] %vm33, %v32
    %s35 = scalar_lea.vmem %s0, 10
    %v36 = vld [vmem:[%s35] sm:$0x1]
    %37 = vrot.lane.b32.xlu0 %v36, 40
    %v38 = vpop.permute.xlu0 %37
    %vm39 = vcmask 359744
    %40 = vst.msk [vmem:[#allocation0] sm:$0x1] %vm39, %v38
    %s41 = scalar_lea.vmem %s0, 9
    %v42 = vld [vmem:[%s41] sm:$0x1]
    %43 = vrot.lane.b32.xlu0 %v42, 36
    %v44 = vpop.permute.xlu0 %43
    %vm45 = vcmask 326944
    %46 = vst.msk [vmem:[#allocation0] sm:$0x1] %vm45, %v44
    %s47 = scalar_lea.vmem %s0, 8
    %v48 = vld [vmem:[%s47] sm:$0x1]
    %49 = vrot.lane.b32.xlu0 %v48, 32
    %v50 = vpop.permute.xlu0 %49
    %vm51 = vcmask 294144
    %52 = vst.msk [vmem:[#allocation0] sm:$0x1] %vm51, %v50
    %s53 = scalar_lea.vmem %s0, 7
    %v54 = vld [vmem:[%s53] sm:$0x1]
    %55 = vrot.lane.b32.xlu0 %v54, 28
    %v56 = vpop.permute.xlu0 %55
    %vm57 = vcmask 261344
    %58 = vst.msk [vmem:[#allocation0] sm:$0x1] %vm57, %v56
    %s59 = scalar_lea.vmem %s0, 6
    %v60 = vld [vmem:[%s59] sm:$0x1]
    %61 = vrot.lane.b32.xlu0 %v60, 24
    %v62 = vpop.permute.xlu0 %61
    %vm63 = vcmask 228544
    %64 = vst.msk [vmem:[#allocation0] sm:$0x1] %vm63, %v62
    %s65 = scalar_lea.vmem %s0, 5
    %v66 = vld [vmem:[%s65] sm:$0x1]
    %67 = vrot.lane.b32.xlu0 %v66, 20
    %v68 = vpop.permute.xlu0 %67
    %vm69 = vcmask 195744
    %70 = vst.msk [vmem:[#allocation0] sm:$0x1] %vm69, %v68
    %s71 = scalar_lea.vmem %s0, 4
    %v72 = vld [vmem:[%s71] sm:$0x1]
    %73 = vrot.lane.b32.xlu0 %v72, 16
    %v74 = vpop.permute.xlu0 %73
    %vm75 = vcmask 162944
    %76 = vst.msk [vmem:[#allocation0] sm:$0x1] %vm75, %v74
    %s77 = scalar_lea.vmem %s0, 3
    %v78 = vld [vmem:[%s77] sm:$0x1]
    %79 = vrot.lane.b32.xlu0 %v78, 12
    %v80 = vpop.permute.xlu0 %79
    %vm81 = vcmask 130144
    %82 = vst.msk [vmem:[#allocation0] sm:$0x1] %vm81, %v80
    %s83 = scalar_lea.vmem %s0, 2
    %v84 = vld [vmem:[%s83] sm:$0x1]
    %85 = vrot.lane.b32.xlu0 %v84, 8
    %v86 = vpop.permute.xlu0 %85
    %vm87 = vcmask 97344
    %88 = vst.msk [vmem:[#allocation0] sm:$0x1] %vm87, %v86
    %s89 = scalar_lea.vmem %s0, 1
    %v90 = vld [vmem:[%s89] sm:$0x1]
    %91 = vrot.lane.b32.xlu0 %v90, 4
    %v92 = vpop.permute.xlu0 %91
    %vm93 = vcmask 64544
    %94 = vst.msk [vmem:[#allocation0] sm:$0x1] %vm93, %v92
    %s96 = sshllo.u32 0, 1
    %v98 = vld [vmem:[#allocation0] sm:%s96]
    %s99 = sshllo.u32 0, 1
    %100 = vst [vmem:[%s1] sm:%s99] %v98

// kernel: tile.38
$region0: #{tile.38}
  #allocation0 [shape = 's32[1]{0}', space=sflag, size = 0x4, scoped, tag = 'scoped memory for tile.38']
  %s0 = inlined_call_operand.vmem [shape: f32[4], index: 0, kind: input, shape index: {}]
  %s1 = inlined_call_operand.vmem [shape: f32[8,4], index: 1, kind: output, shape index: {}]
  // Predicated region
  $region2: #{tile.38} parent=0 // pred_check
    _
  $region3: #{tile.38} parent=0 // pred_check_branch
    %3 = sbr.rel (0) target = $region5
  $region4: #{tile.38} parent=0 // pred_region
    _
  $region5: #{tile.38} parent=0 // pred_fallthru
    _
  %v4 = vld [vmem:[%s0] ss:$0 sm:$0xff]
  %5 = vst [vmem:[%s1] sm:$0xff] %v4

// kernel: tile.39
$region0: #{tile.39}
  %s0 = inlined_call_operand.vmem [shape: f32[8,4], index: 0, kind: input, shape index: {}]
  %s1 = inlined_call_operand.vmem [shape: f32[1,32], index: 1, kind: output, shape index: {}]
  $region1: #{tile.39} parent=0
    #allocation0 [shape = 'u8[4096]{0}', space=vmem, size = 0x1000, scoped, tag = 'scoped mem for output reshape']
    %v2 = vld [vmem:[%s0] sm:$0x1]
    %vm3 = vcmask 31744
    %4 = vst.msk [vmem:[#allocation0] sm:$0x1] %vm3, %v2
    %s5 = scalar_lea.vmem %s0, 7
    %v6 = vld [vmem:[%s5] sm:$0x1]
    %7 = vrot.lane.b32.xlu0 %v6, 28
    %v8 = vpop.permute.xlu0 %7
    %vm9 = vcmask 261344
    %10 = vst.msk [vmem:[#allocation0] sm:$0x1] %vm9, %v8
    %s11 = scalar_lea.vmem %s0, 6
    %v12 = vld [vmem:[%s11] sm:$0x1]
    %13 = vrot.lane.b32.xlu0 %v12, 24
    %v14 = vpop.permute.xlu0 %13
    %vm15 = vcmask 228544
    %16 = vst.msk [vmem:[#allocation0] sm:$0x1] %vm15, %v14
    %s17 = scalar_lea.vmem %s0, 5
    %v18 = vld [vmem:[%s17] sm:$0x1]
    %19 = vrot.lane.b32.xlu0 %v18, 20
    %v20 = vpop.permute.xlu0 %19
    %vm21 = vcmask 195744
    %22 = vst.msk [vmem:[#allocation0] sm:$0x1] %vm21, %v20
    %s23 = scalar_lea.vmem %s0, 4
    %v24 = vld [vmem:[%s23] sm:$0x1]
    %25 = vrot.lane.b32.xlu0 %v24, 16
    %v26 = vpop.permute.xlu0 %25
    %vm27 = vcmask 162944
    %28 = vst.msk [vmem:[#allocation0] sm:$0x1] %vm27, %v26
    %s29 = scalar_lea.vmem %s0, 3
    %v30 = vld [vmem:[%s29] sm:$0x1]
    %31 = vrot.lane.b32.xlu0 %v30, 12
    %v32 = vpop.permute.xlu0 %31
    %vm33 = vcmask 130144
    %34 = vst.msk [vmem:[#allocation0] sm:$0x1] %vm33, %v32
    %s35 = scalar_lea.vmem %s0, 2
    %v36 = vld [vmem:[%s35] sm:$0x1]
    %37 = vrot.lane.b32.xlu0 %v36, 8
    %v38 = vpop.permute.xlu0 %37
    %vm39 = vcmask 97344
    %40 = vst.msk [vmem:[#allocation0] sm:$0x1] %vm39, %v38
    %s41 = scalar_lea.vmem %s0, 1
    %v42 = vld [vmem:[%s41] sm:$0x1]
    %43 = vrot.lane.b32.xlu0 %v42, 4
    %v44 = vpop.permute.xlu0 %43
    %vm45 = vcmask 64544
    %46 = vst.msk [vmem:[#allocation0] sm:$0x1] %vm45, %v44
    %s48 = sshllo.u32 0, 1
    %v50 = vld [vmem:[#allocation0] sm:%s48]
    %s51 = sshllo.u32 0, 1
    %52 = vst [vmem:[%s1] sm:%s51] %v50

// kernel: tile.43
$region0: #{tile.43}
  #allocation0 [shape = 's32[1]{0}', space=sflag, size = 0x4, scoped, tag = 'scoped memory for tile.43']
  %s0 = inlined_call_operand.vmem [shape: f32[8], index: 0, kind: input, shape index: {}]
  %s1 = inlined_call_operand.vmem [shape: f32[8,8], index: 1, kind: output, shape index: {}]
  // Predicated region
  $region2: #{tile.43} parent=0 // pred_check
    _
  $region3: #{tile.43} parent=0 // pred_check_branch
    %3 = sbr.rel (0) target = $region5
  $region4: #{tile.43} parent=0 // pred_region
    _
  $region5: #{tile.43} parent=0 // pred_fallthru
    _
  %v4 = vld [vmem:[%s0] ss:$0 sm:$0xff]
  %5 = vst [vmem:[%s1] sm:$0xff] %v4

// kernel: tile.44
$region0: #{tile.44}
  %s0 = inlined_call_operand.vmem [shape: f32[8,8], index: 0, kind: input, shape index: {}]
  %s1 = inlined_call_operand.vmem [shape: f32[1,64], index: 1, kind: output, shape index: {}]
  $region1: #{tile.44} parent=0
    #allocation0 [shape = 'u8[4096]{0}', space=vmem, size = 0x1000, scoped, tag = 'scoped mem for output reshape']
    %v2 = vld [vmem:[%s0] sm:$0x1]
    %vm3 = vcmask 64512
    %4 = vst.msk [vmem:[#allocation0] sm:$0x1] %vm3, %v2
    %s5 = scalar_lea.vmem %s0, 7
    %v6 = vld [vmem:[%s5] sm:$0x1]
    %7 = vrot.lane.b32.xlu0 %v6, 56
    %v8 = vpop.permute.xlu0 %7
    %vm9 = vcmask 523712
    %10 = vst.msk [vmem:[#allocation0] sm:$0x1] %vm9, %v8
    %s11 = scalar_lea.vmem %s0, 6
    %v12 = vld [vmem:[%s11] sm:$0x1]
    %13 = vrot.lane.b32.xlu0 %v12, 48
    %v14 = vpop.permute.xlu0 %13
    %vm15 = vcmask 458112
    %16 = vst.msk [vmem:[#allocation0] sm:$0x1] %vm15, %v14
    %s17 = scalar_lea.vmem %s0, 5
    %v18 = vld [vmem:[%s17] sm:$0x1]
    %19 = vrot.lane.b32.xlu0 %v18, 40
    %v20 = vpop.permute.xlu0 %19
    %vm21 = vcmask 392512
    %22 = vst.msk [vmem:[#allocation0] sm:$0x1] %vm21, %v20
    %s23 = scalar_lea.vmem %s0, 4
    %v24 = vld [vmem:[%s23] sm:$0x1]
    %25 = vrot.lane.b32.xlu0 %v24, 32
    %v26 = vpop.permute.xlu0 %25
    %vm27 = vcmask 326912
    %28 = vst.msk [vmem:[#allocation0] sm:$0x1] %vm27, %v26
    %s29 = scalar_lea.vmem %s0, 3
    %v30 = vld [vmem:[%s29] sm:$0x1]
    %31 = vrot.lane.b32.xlu0 %v30, 24
    %v32 = vpop.permute.xlu0 %31
    %vm33 = vcmask 261312
    %34 = vst.msk [vmem:[#allocation0] sm:$0x1] %vm33, %v32
    %s35 = scalar_lea.vmem %s0, 2
    %v36 = vld [vmem:[%s35] sm:$0x1]
    %37 = vrot.lane.b32.xlu0 %v36, 16
    %v38 = vpop.permute.xlu0 %37
    %vm39 = vcmask 195712
    %40 = vst.msk [vmem:[#allocation0] sm:$0x1] %vm39, %v38
    %s41 = scalar_lea.vmem %s0, 1
    %v42 = vld [vmem:[%s41] sm:$0x1]
    %43 = vrot.lane.b32.xlu0 %v42, 8
    %v44 = vpop.permute.xlu0 %43
    %vm45 = vcmask 130112
    %46 = vst.msk [vmem:[#allocation0] sm:$0x1] %vm45, %v44
    %s48 = sshllo.u32 0, 1
    %v50 = vld [vmem:[#allocation0] sm:%s48]
    %s51 = sshllo.u32 0, 1
    %52 = vst [vmem:[%s1] sm:%s51] %v50

// kernel: tile.48
$region0: #{tile.48}
  #allocation0 [shape = 's32[1]{0}', space=sflag, size = 0x4, scoped, tag = 'scoped memory for tile.48']
  %s0 = inlined_call_operand.vmem [shape: f32[8], index: 0, kind: input, shape index: {}]
  %s1 = inlined_call_operand.vmem [shape: f32[4,8], index: 1, kind: output, shape index: {}]
  // Predicated region
  $region2: #{tile.48} parent=0 // pred_check
    _
  $region3: #{tile.48} parent=0 // pred_check_branch
    %3 = sbr.rel (0) target = $region5
  $region4: #{tile.48} parent=0 // pred_region
    _
  $region5: #{tile.48} parent=0 // pred_fallthru
    _
  %v4 = vld [vmem:[%s0] ss:$0 sm:$0xff]
  %5 = vst [vmem:[%s1] sm:$0xf] %v4

// kernel: tile.49
$region0: #{tile.49}
  %s0 = inlined_call_operand.vmem [shape: f32[4,8], index: 0, kind: input, shape index: {}]
  %s1 = inlined_call_operand.vmem [shape: f32[1,32], index: 1, kind: output, shape index: {}]
  $region1: #{tile.49} parent=0
    #allocation0 [shape = 'u8[4096]{0}', space=vmem, size = 0x1000, scoped, tag = 'scoped mem for output reshape']
    #allocation1 [shape = 'u8[4096]{0}', space=vmem, size = 0x1000, scoped, tag = 'scoped mem for input reshape']
    %s3 = sshllo.u32 0, 4
    %v4 = vld [vmem:[%s0] sm:%s3]
    %5 = vst [vmem:[#allocation1] sm:%s3] %v4
    %v6 = vld [vmem:[#allocation1] sm:$0x1]
    %vm7 = vcmask 64512
    %8 = vst.msk [vmem:[#allocation0] sm:$0x1] %vm7, %v6
    %s9 = scalar_lea.vmem [#allocation1], 3
    %v10 = vld [vmem:[%s9] sm:$0x1]
    %11 = vrot.lane.b32.xlu0 %v10, 24
    %v12 = vpop.permute.xlu0 %11
    %vm13 = vcmask 261312
    %14 = vst.msk [vmem:[#allocation0] sm:$0x1] %vm13, %v12
    %s15 = scalar_lea.vmem [#allocation1], 2
    %v16 = vld [vmem:[%s15] sm:$0x1]
    %17 = vrot.lane.b32.xlu0 %v16, 16
    %v18 = vpop.permute.xlu0 %17
    %vm19 = vcmask 195712
    %20 = vst.msk [vmem:[#allocation0] sm:$0x1] %vm19, %v18
    %s21 = scalar_lea.vmem [#allocation1], 1
    %v22 = vld [vmem:[%s21] sm:$0x1]
    %23 = vrot.lane.b32.xlu0 %v22, 8
    %v24 = vpop.permute.xlu0 %23
    %vm25 = vcmask 130112
    %26 = vst.msk [vmem:[#allocation0] sm:$0x1] %vm25, %v24
    %s28 = sshllo.u32 0, 1
    %v30 = vld [vmem:[#allocation0] sm:%s28]
    %s31 = sshllo.u32 0, 1
    %32 = vst [vmem:[%s1] sm:%s31] %v30

// kernel: tile.59
$region0: #{tile.59}
  %s0 = inlined_call_operand.vmem [shape: f32[2,8], index: 0, kind: input, shape index: {}]
  %s1 = inlined_call_operand.vmem [shape: f32[1,16], index: 1, kind: output, shape index: {}]
  $region1: #{tile.59} parent=0
    #allocation0 [shape = 'u8[4096]{0}', space=vmem, size = 0x1000, scoped, tag = 'scoped mem for output reshape']
    #allocation1 [shape = 'u8[4096]{0}', space=vmem, size = 0x1000, scoped, tag = 'scoped mem for input reshape']
    %s3 = sshllo.u32 0, 2
    %v4 = vld [vmem:[%s0] sm:%s3]
    %5 = vst [vmem:[#allocation1] sm:%s3] %v4
    %v6 = vld [vmem:[#allocation1] sm:$0x1]
    %vm7 = vcmask 64512
    %8 = vst.msk [vmem:[#allocation0] sm:$0x1] %vm7, %v6
    %s9 = scalar_lea.vmem [#allocation1], 1
    %v10 = vld [vmem:[%s9] sm:$0x1]
    %11 = vrot.lane.b32.xlu0 %v10, 8
    %v12 = vpop.permute.xlu0 %11
    %vm13 = vcmask 130112
    %14 = vst.msk [vmem:[#allocation0] sm:$0x1] %vm13, %v12
    %s16 = sshllo.u32 0, 1
    %v18 = vld [vmem:[#allocation0] sm:%s16]
    %s19 = sshllo.u32 0, 1
    %20 = vst [vmem:[%s1] sm:%s19] %v18

// kernel: tile.58
$region0: #{tile.58}
  #allocation0 [shape = 's32[1]{0}', space=sflag, size = 0x4, scoped, tag = 'scoped memory for tile.58']
  %s0 = inlined_call_operand.vmem [shape: f32[8], index: 0, kind: input, shape index: {}]
  %s1 = inlined_call_operand.vmem [shape: f32[2,8], index: 1, kind: output, shape index: {}]
  // Predicated region
  $region2: #{tile.58} parent=0 // pred_check
    _
  $region3: #{tile.58} parent=0 // pred_check_branch
    %3 = sbr.rel (0) target = $region5
  $region4: #{tile.58} parent=0 // pred_region
    _
  $region5: #{tile.58} parent=0 // pred_fallthru
    _
  %v4 = vld [vmem:[%s0] ss:$0 sm:$0xff]
  %5 = vst [vmem:[%s1] sm:$0x3] %v4

// kernel: cnn2_forward.1
$region0: #{cnn2_forward.1}
  #allocation0 [shape = 'u32[]', space=smem, size = 0x4, offset = 0x4, fixed_abs, tag = 'smem constant byte address 0x4 - core index']
  #allocation1 [shape = 'u32[144,128]{1,0:T(1,128)}', space=vmem, size = 0x12000, scoped, tag = 'internal scratch']
  %s0 = inlined_call_operand.vmem [shape: f32[32,64], index: 0, kind: input, shape index: {}]
  %s1 = inlined_call_operand.vmem [shape: f32[3,32,32], index: 1, kind: input, shape index: {}]
  %s2 = inlined_call_operand.vmem [shape: f32[3,64,64], index: 2, kind: input, shape index: {}]
  %s3 = inlined_call_operand.vmem [shape: f32[1,64], index: 3, kind: input, shape index: {}]
  %s4 = inlined_call_operand.vmem [shape: f32[4,16,32], index: 4, kind: input, shape index: {}]
  %s5 = inlined_call_operand.vmem [shape: f32[4,64,32], index: 5, kind: input, shape index: {}]
  %s6 = inlined_call_operand.vmem [shape: f32[1,32], index: 6, kind: input, shape index: {}]
  %s7 = inlined_call_operand.vmem [shape: f32[3,16,16], index: 7, kind: input, shape index: {}]
  %s8 = inlined_call_operand.vmem [shape: f32[3,32,64], index: 8, kind: input, shape index: {}]
  %s9 = inlined_call_operand.vmem [shape: f32[1,64], index: 9, kind: input, shape index: {}]
  %s10 = inlined_call_operand.vmem [shape: f32[4,8,16], index: 10, kind: input, shape index: {}]
  %s11 = inlined_call_operand.vmem [shape: f32[4,64,32], index: 11, kind: input, shape index: {}]
  %s12 = inlined_call_operand.vmem [shape: f32[1,32], index: 12, kind: input, shape index: {}]
  %s13 = inlined_call_operand.vmem [shape: f32[3,8,8], index: 13, kind: input, shape index: {}]
  %s14 = inlined_call_operand.vmem [shape: f32[3,32,32], index: 14, kind: input, shape index: {}]
  %s15 = inlined_call_operand.vmem [shape: f32[1,32], index: 15, kind: input, shape index: {}]
  %s16 = inlined_call_operand.vmem [shape: f32[4,4,8], index: 16, kind: input, shape index: {}]
  %s17 = inlined_call_operand.vmem [shape: f32[4,32,16], index: 17, kind: input, shape index: {}]
  %s18 = inlined_call_operand.vmem [shape: f32[1,16], index: 18, kind: input, shape index: {}]
  %s19 = inlined_call_operand.vmem [shape: f32[4,16], index: 19, kind: output, shape index: {}]
  %s20 = sld [smem:[#allocation0]]
  $region86: #{cnn2_forward.1} parent=0
    _
  %s22 = ssub.s32 1, %s20
  %s23 = scalar_select 0, %s22, %s20
  // Predicated region
  $region2: #{cnn2_forward.1} parent=0 // pred_check
    _
  $region3: #{cnn2_forward.1} parent=0 // pred_check_branch
    %25 = sbr.rel (0) target = $region5
  $region4: #{cnn2_forward.1} parent=0 // pred_region
    _
  $region5: #{cnn2_forward.1} parent=0 // pred_fallthru
    _
  // Predicated region
  $region6: #{cnn2_forward.1} parent=0 // pred_check
    _
  $region7: #{cnn2_forward.1} parent=0 // pred_check_branch
    %27 = sbr.rel (0) target = $region9
  $region8: #{cnn2_forward.1} parent=0 // pred_region
    _
  $region9: #{cnn2_forward.1} parent=0 // pred_fallthru
    _
  // Predicated region
  $region10: #{cnn2_forward.1} parent=0 // pred_check
    _
  $region11: #{cnn2_forward.1} parent=0 // pred_check_branch
    %29 = sbr.rel (0) target = $region13
  $region12: #{cnn2_forward.1} parent=0 // pred_region
    _
  $region13: #{cnn2_forward.1} parent=0 // pred_fallthru
    _
  // Predicated region
  $region14: #{cnn2_forward.1} parent=0 // pred_check
    _
  $region15: #{cnn2_forward.1} parent=0 // pred_check_branch
    %31 = sbr.rel (0) target = $region17
  $region16: #{cnn2_forward.1} parent=0 // pred_region
    _
  $region17: #{cnn2_forward.1} parent=0 // pred_fallthru
    _
  // Predicated region
  $region18: #{cnn2_forward.1} parent=0 // pred_check
    _
  $region19: #{cnn2_forward.1} parent=0 // pred_check_branch
    %33 = sbr.rel (0) target = $region21
  $region20: #{cnn2_forward.1} parent=0 // pred_region
    _
  $region21: #{cnn2_forward.1} parent=0 // pred_fallthru
    _
  // Predicated region
  $region22: #{cnn2_forward.1} parent=0 // pred_check
    _
  $region23: #{cnn2_forward.1} parent=0 // pred_check_branch
    %35 = sbr.rel (0) target = $region25
  $region24: #{cnn2_forward.1} parent=0 // pred_region
    _
  $region25: #{cnn2_forward.1} parent=0 // pred_fallthru
    _
  // Predicated region
  $region26: #{cnn2_forward.1} parent=0 // pred_check
    _
  $region27: #{cnn2_forward.1} parent=0 // pred_check_branch
    %37 = sbr.rel (0) target = $region29
  $region28: #{cnn2_forward.1} parent=0 // pred_region
    _
  $region29: #{cnn2_forward.1} parent=0 // pred_fallthru
    _
  // Predicated region
  $region30: #{cnn2_forward.1} parent=0 // pred_check
    _
  $region31: #{cnn2_forward.1} parent=0 // pred_check_branch
    %39 = sbr.rel (0) target = $region33
  $region32: #{cnn2_forward.1} parent=0 // pred_region
    _
  $region33: #{cnn2_forward.1} parent=0 // pred_fallthru
    _
  // Predicated region
  $region34: #{cnn2_forward.1} parent=0 // pred_check
    _
  $region35: #{cnn2_forward.1} parent=0 // pred_check_branch
    %41 = sbr.rel (0) target = $region37
  $region36: #{cnn2_forward.1} parent=0 // pred_region
    _
  $region37: #{cnn2_forward.1} parent=0 // pred_fallthru
    _
  // Predicated region
  $region38: #{cnn2_forward.1} parent=0 // pred_check
    _
  $region39: #{cnn2_forward.1} parent=0 // pred_check_branch
    %43 = sbr.rel (0) target = $region41
  $region40: #{cnn2_forward.1} parent=0 // pred_region
    _
  $region41: #{cnn2_forward.1} parent=0 // pred_fallthru
    _
  // Predicated region
  $region42: #{cnn2_forward.1} parent=0 // pred_check
    _
  $region43: #{cnn2_forward.1} parent=0 // pred_check_branch
    %45 = sbr.rel (0) target = $region45
  $region44: #{cnn2_forward.1} parent=0 // pred_region
    _
  $region45: #{cnn2_forward.1} parent=0 // pred_fallthru
    _
  // Predicated region
  $region46: #{cnn2_forward.1} parent=0 // pred_check
    _
  $region47: #{cnn2_forward.1} parent=0 // pred_check_branch
    %47 = sbr.rel (0) target = $region49
  $region48: #{cnn2_forward.1} parent=0 // pred_region
    _
  $region49: #{cnn2_forward.1} parent=0 // pred_fallthru
    _
  // Predicated region
  $region50: #{cnn2_forward.1} parent=0 // pred_check
    _
  $region51: #{cnn2_forward.1} parent=0 // pred_check_branch
    %49 = sbr.rel (0) target = $region53
  $region52: #{cnn2_forward.1} parent=0 // pred_region
    _
  $region53: #{cnn2_forward.1} parent=0 // pred_fallthru
    _
  // Predicated region
  $region54: #{cnn2_forward.1} parent=0 // pred_check
    _
  $region55: #{cnn2_forward.1} parent=0 // pred_check_branch
    %51 = sbr.rel (0) target = $region57
  $region56: #{cnn2_forward.1} parent=0 // pred_region
    _
  $region57: #{cnn2_forward.1} parent=0 // pred_fallthru
    _
  // Predicated region
  $region58: #{cnn2_forward.1} parent=0 // pred_check
    _
  $region59: #{cnn2_forward.1} parent=0 // pred_check_branch
    %53 = sbr.rel (0) target = $region61
  $region60: #{cnn2_forward.1} parent=0 // pred_region
    _
  $region61: #{cnn2_forward.1} parent=0 // pred_fallthru
    _
  // Predicated region
  $region62: #{cnn2_forward.1} parent=0 // pred_check
    _
  $region63: #{cnn2_forward.1} parent=0 // pred_check_branch
    %55 = sbr.rel (0) target = $region65
  $region64: #{cnn2_forward.1} parent=0 // pred_region
    _
  $region65: #{cnn2_forward.1} parent=0 // pred_fallthru
    _
  // Predicated region
  $region66: #{cnn2_forward.1} parent=0 // pred_check
    _
  $region67: #{cnn2_forward.1} parent=0 // pred_check_branch
    %57 = sbr.rel (0) target = $region69
  $region68: #{cnn2_forward.1} parent=0 // pred_region
    _
  $region69: #{cnn2_forward.1} parent=0 // pred_fallthru
    _
  // Predicated region
  $region70: #{cnn2_forward.1} parent=0 // pred_check
    _
  $region71: #{cnn2_forward.1} parent=0 // pred_check_branch
    %59 = sbr.rel (0) target = $region73
  $region72: #{cnn2_forward.1} parent=0 // pred_region
    _
  $region73: #{cnn2_forward.1} parent=0 // pred_fallthru
    _
  // Predicated region
  $region74: #{cnn2_forward.1} parent=0 // pred_check
    _
  $region75: #{cnn2_forward.1} parent=0 // pred_check_branch
    %61 = sbr.rel (0) target = $region77
  $region76: #{cnn2_forward.1} parent=0 // pred_region
    _
  $region77: #{cnn2_forward.1} parent=0 // pred_fallthru
    _
  %v62 = vld [vmem:[%s0] sm:$0xff]
  %v63 = vld [vmem:[%s0 + $0x8] sm:$0xff]
  %v64 = vld [vmem:[%s0 + $0x10] sm:$0xff]
  %v65 = vld [vmem:[%s0 + $0x18] sm:$0xff]
  %v66 = vld [vmem:[%s1] sm:$0xff]
  %v67 = vld [vmem:[%s1 + $0x8] sm:$0xff]
  %v68 = vld [vmem:[%s1 + $0x10] sm:$0xff]
  %v69 = vld [vmem:[%s1 + $0x18] sm:$0xff]
  %vm70 = vcmask 261120
  %v72 = vsel %vm70, %v66, 0
  %v75 = vsel %vm70, %v67, 0
  %v78 = vsel %vm70, %v68, 0
  %v81 = vsel %vm70, %v69, 0
  %83 = vmatprep.subr.mxu0 0.0
  %84 = vmatpush1.msra.mxu0 %v62
  %85 = vmatprep.subr.mxu0 0.0
  %86 = vmatpush1.msra.mxu0 %v63
  %87 = vmatprep.subr.mxu0 0.0
  %88 = vmatpush1.msra.mxu0 %v64
  %89 = vmatprep.subr.mxu0 0.0
  %90 = vmatpush1.msra.mxu0 %v65
  %91 = vmatprep.subr.mxu0 0.0
  %92 = vmatpush1.msra.mxu0 0.0
  %93 = vmatprep.subr.mxu0 0.0
  %94 = vmatpush1.msra.mxu0 0.0
  %95 = vmatprep.subr.mxu0 0.0
  %96 = vmatpush1.msra.mxu0 0.0
  %97 = vmatprep.subr.mxu0 0.0
  %98 = vmatpush1.msra.mxu0 0.0
  %99 = vmatprep.subr.mxu0 0.0
  %100 = vmatpush1.msra.mxu0 0.0
  %101 = vmatprep.subr.mxu0 0.0
  %102 = vmatpush1.msra.mxu0 0.0
  %103 = vmatprep.subr.mxu0 0.0
  %104 = vmatpush1.msra.mxu0 0.0
  %105 = vmatprep.subr.mxu0 0.0
  %106 = vmatpush1.msra.mxu0 0.0
  %107 = vmatprep.subr.mxu0 0.0
  %108 = vmatpush1.msra.mxu0 0.0
  %109 = vmatprep.subr.mxu0 0.0
  %110 = vmatpush1.msra.mxu0 0.0
  %111 = vmatprep.subr.mxu0 0.0
  %112 = vmatpush1.msra.mxu0 0.0
  %113 = vmatprep.subr.mxu0 0.0
  %114 = vmatpush1.msra.mxu0 0.0
  %115 = vmatprep.subr.mxu0 0.0
  %116 = vmatpush1.msra.mxu0 0.0
  %117 = vmatprep.subr.mxu0 0.0
  %118 = vmatpush1.msra.mxu0 0.0
  %119 = vmatprep.subr.mxu0 0.0
  %120 = vmatpush1.msra.mxu0 0.0
  %121 = vmatprep.subr.mxu0 0.0
  %122 = vmatpush1.msra.mxu0 0.0
  %123 = vmatprep.subr.mxu0 0.0
  %124 = vmatpush1.msra.mxu0 0.0
  %125 = vmatprep.subr.mxu0 0.0
  %126 = vmatpush1.msra.mxu0 0.0
  %127 = vmatprep.subr.mxu0 0.0
  %128 = vmatpush1.msra.mxu0 0.0
  %129 = vmatprep.subr.mxu0 0.0
  %130 = vmatpush1.msra.mxu0 0.0
  %131 = vmatprep.subr.mxu0 0.0
  %132 = vmatpush1.msra.mxu0 0.0
  %133 = vmatprep.subr.mxu0 0.0
  %134 = vmatpush1.msra.mxu0 0.0
  %135 = vmatprep.subr.mxu0 0.0
  %136 = vmatpush1.msra.mxu0 0.0
  %137 = vmatprep.subr.mxu0 0.0
  %138 = vmatpush1.msra.mxu0 0.0
  %139 = vmatprep.subr.mxu0 0.0
  %140 = vmatpush1.msra.mxu0 0.0
  %141 = vmatprep.subr.mxu0 0.0
  %142 = vmatpush1.msra.mxu0 0.0
  %143 = vmatprep.subr.mxu0 0.0
  %144 = vmatpush1.msra.mxu0 0.0
  %145 = vmatprep.subr.mxu0 0.0
  %146 = vmatpush1.msra.mxu0 0.0
  %147 = vmatprep.mubr.f32.mxu0 0.0
  %148 = vmatmul.mubr.f32.gmra.mrb[0].mxu0 %v72
  %v149 = vpop.f32.mrb[0].mxu0
  %v150 = vadd.f32 0.0, %v149
  %v151 = vpop.f32.mrb[0].mxu0
  %152 = vmatprep.mubr.f32.mxu0 0.0
  %153 = vmatmul.mubr.f32.gmra.mrb[0].mxu0 %v75
  %v154 = vpop.f32.mrb[0].mxu0
  %v155 = vadd.f32 0.0, %v154
  %v156 = vpop.f32.mrb[0].mxu0
  %157 = vmatprep.mubr.f32.mxu0 0.0
  %158 = vmatmul.mubr.f32.gmra.mrb[0].mxu0 %v78
  %v159 = vpop.f32.mrb[0].mxu0
  %v160 = vadd.f32 0.0, %v159
  %v161 = vpop.f32.mrb[0].mxu0
  %162 = vmatprep.mubr.f32.mxu0 0.0
  %163 = vmatmul.mubr.f32.gmra.mrb[0].mxu0 %v81
  %v164 = vpop.f32.mrb[0].mxu0
  %v165 = vadd.f32 0.0, %v164
  %v166 = vpop.f32.mrb[0].mxu0
  %167 = vdwg.mxu0
  %v168 = vld [vmem:[%s2] sm:$0xff]
  %v169 = vld [vmem:[%s2 + $0x8] sm:$0xff]
  %v170 = vld [vmem:[%s2 + $0x10] sm:$0xff]
  %v171 = vld [vmem:[%s2 + $0x18] sm:$0xff]
  %v172 = vld [vmem:[%s2 + $0x20] sm:$0xff]
  %v173 = vld [vmem:[%s2 + $0x28] sm:$0xff]
  %v174 = vld [vmem:[%s2 + $0x30] sm:$0xff]
  %v175 = vld [vmem:[%s2 + $0x38] sm:$0xff]
  %s176 = scalar_lea.vmem %s1, 32
  %v177 = vld [vmem:[%s176] sm:$0xff]
  %v178 = vld [vmem:[%s176 + $0x8] sm:$0xff]
  %v179 = vld [vmem:[%s176 + $0x10] sm:$0xff]
  %v180 = vld [vmem:[%s176 + $0x18] sm:$0xff]
  %v182 = vsel %vm70, %v177, 0
  %v185 = vsel %vm70, %v178, 0
  %v188 = vsel %vm70, %v179, 0
  %v191 = vsel %vm70, %v180, 0
  %193 = vmatprep.subr.mxu0 0.0
  %194 = vmatpush1.msra.mxu0 %v62
  %195 = vmatprep.subr.mxu0 0.0
  %196 = vmatpush1.msra.mxu0 %v63
  %197 = vmatprep.subr.mxu0 0.0
  %198 = vmatpush1.msra.mxu0 %v64
  %199 = vmatprep.subr.mxu0 0.0
  %200 = vmatpush1.msra.mxu0 %v65
  %201 = vmatprep.subr.mxu0 0.0
  %202 = vmatpush1.msra.mxu0 0.0
  %203 = vmatprep.subr.mxu0 0.0
  %204 = vmatpush1.msra.mxu0 0.0
  %205 = vmatprep.subr.mxu0 0.0
  %206 = vmatpush1.msra.mxu0 0.0
  %207 = vmatprep.subr.mxu0 0.0
  %208 = vmatpush1.msra.mxu0 0.0
  %209 = vmatprep.subr.mxu0 0.0
  %210 = vmatpush1.msra.mxu0 0.0
  %211 = vmatprep.subr.mxu0 0.0
  %212 = vmatpush1.msra.mxu0 0.0
  %213 = vmatprep.subr.mxu0 0.0
  %214 = vmatpush1.msra.mxu0 0.0
  %215 = vmatprep.subr.mxu0 0.0
  %216 = vmatpush1.msra.mxu0 0.0
  %217 = vmatprep.subr.mxu0 0.0
  %218 = vmatpush1.msra.mxu0 0.0
  %219 = vmatprep.subr.mxu0 0.0
  %220 = vmatpush1.msra.mxu0 0.0
  %221 = vmatprep.subr.mxu0 0.0
  %222 = vmatpush1.msra.mxu0 0.0
  %223 = vmatprep.subr.mxu0 0.0
  %224 = vmatpush1.msra.mxu0 0.0
  %225 = vmatprep.subr.mxu0 0.0
  %226 = vmatpush1.msra.mxu0 0.0
  %227 = vmatprep.subr.mxu0 0.0
  %228 = vmatpush1.msra.mxu0 0.0
  %229 = vmatprep.subr.mxu0 0.0
  %230 = vmatpush1.msra.mxu0 0.0
  %231 = vmatprep.subr.mxu0 0.0
  %232 = vmatpush1.msra.mxu0 0.0
  %233 = vmatprep.subr.mxu0 0.0
  %234 = vmatpush1.msra.mxu0 0.0
  %235 = vmatprep.subr.mxu0 0.0
  %236 = vmatpush1.msra.mxu0 0.0
  %237 = vmatprep.subr.mxu0 0.0
  %238 = vmatpush1.msra.mxu0 0.0
  %239 = vmatprep.subr.mxu0 0.0
  %240 = vmatpush1.msra.mxu0 0.0
  %241 = vmatprep.subr.mxu0 0.0
  %242 = vmatpush1.msra.mxu0 0.0
  %243 = vmatprep.subr.mxu0 0.0
  %244 = vmatpush1.msra.mxu0 0.0
  %245 = vmatprep.subr.mxu0 0.0
  %246 = vmatpush1.msra.mxu0 0.0
  %247 = vmatprep.subr.mxu0 0.0
  %248 = vmatpush1.msra.mxu0 0.0
  %249 = vmatprep.subr.mxu0 0.0
  %250 = vmatpush1.msra.mxu0 0.0
  %251 = vmatprep.subr.mxu0 0.0
  %252 = vmatpush1.msra.mxu0 0.0
  %253 = vmatprep.subr.mxu0 0.0
  %254 = vmatpush1.msra.mxu0 0.0
  %255 = vmatprep.subr.mxu0 0.0
  %256 = vmatpush1.msra.mxu0 0.0
  %257 = vmatprep.mubr.f32.mxu0 0.0
  %258 = vmatmul.mubr.f32.gmra.mrb[0].mxu0 %v182
  %v259 = vpop.f32.mrb[0].mxu0
  %v260 = vadd.f32 0.0, %v259
  %v261 = vpop.f32.mrb[0].mxu0
  %262 = vmatprep.mubr.f32.mxu0 0.0
  %263 = vmatmul.mubr.f32.gmra.mrb[0].mxu0 %v185
  %v264 = vpop.f32.mrb[0].mxu0
  %v265 = vadd.f32 0.0, %v264
  %v266 = vpop.f32.mrb[0].mxu0
  %267 = vmatprep.mubr.f32.mxu0 0.0
  %268 = vmatmul.mubr.f32.gmra.mrb[0].mxu0 %v188
  %v269 = vpop.f32.mrb[0].mxu0
  %v270 = vadd.f32 0.0, %v269
  %v271 = vpop.f32.mrb[0].mxu0
  %272 = vmatprep.mubr.f32.mxu0 0.0
  %273 = vmatmul.mubr.f32.gmra.mrb[0].mxu0 %v191
  %v274 = vpop.f32.mrb[0].mxu0
  %v275 = vadd.f32 0.0, %v274
  %v276 = vpop.f32.mrb[0].mxu0
  %277 = vdwg.mxu0
  %s278 = scalar_lea.vmem %s2, 64
  %v279 = vld [vmem:[%s278] sm:$0xff]
  %v280 = vld [vmem:[%s278 + $0x8] sm:$0xff]
  %v281 = vld [vmem:[%s278 + $0x10] sm:$0xff]
  %v282 = vld [vmem:[%s278 + $0x18] sm:$0xff]
  %v283 = vld [vmem:[%s278 + $0x20] sm:$0xff]
  %v284 = vld [vmem:[%s278 + $0x28] sm:$0xff]
  %v285 = vld [vmem:[%s278 + $0x30] sm:$0xff]
  %v286 = vld [vmem:[%s278 + $0x38] sm:$0xff]
  %vm287 = vcmask 523264
  %v289 = vsel %vm287, %v260, 0
  %v292 = vsel %vm287, %v265, 0
  %v295 = vsel %vm287, %v270, 0
  %v298 = vsel %vm287, %v275, 0
  %300 = vmatprep.subr.mxu0 0.0
  %301 = vmatpush1.msra.mxu0 %v279
  %302 = vmatprep.subr.mxu0 0.0
  %303 = vmatpush1.msra.mxu0 %v280
  %304 = vmatprep.subr.mxu0 0.0
  %305 = vmatpush1.msra.mxu0 %v281
  %306 = vmatprep.subr.mxu0 0.0
  %307 = vmatpush1.msra.mxu0 %v282
  %308 = vmatprep.subr.mxu0 0.0
  %309 = vmatpush1.msra.mxu0 %v283
  %310 = vmatprep.subr.mxu0 0.0
  %311 = vmatpush1.msra.mxu0 %v284
  %312 = vmatprep.subr.mxu0 0.0
  %313 = vmatpush1.msra.mxu0 %v285
  %314 = vmatprep.subr.mxu0 0.0
  %315 = vmatpush1.msra.mxu0 %v286
  %316 = vmatprep.subr.mxu0 0.0
  %317 = vmatpush1.msra.mxu0 0.0
  %318 = vmatprep.subr.mxu0 0.0
  %319 = vmatpush1.msra.mxu0 0.0
  %320 = vmatprep.subr.mxu0 0.0
  %321 = vmatpush1.msra.mxu0 0.0
  %322 = vmatprep.subr.mxu0 0.0
  %323 = vmatpush1.msra.mxu0 0.0
  %324 = vmatprep.subr.mxu0 0.0
  %325 = vmatpush1.msra.mxu0 0.0
  %326 = vmatprep.subr.mxu0 0.0
  %327 = vmatpush1.msra.mxu0 0.0
  %328 = vmatprep.subr.mxu0 0.0
  %329 = vmatpush1.msra.mxu0 0.0
  %330 = vmatprep.subr.mxu0 0.0
  %331 = vmatpush1.msra.mxu0 0.0
  %332 = vmatprep.subr.mxu0 0.0
  %333 = vmatpush1.msra.mxu0 0.0
  %334 = vmatprep.subr.mxu0 0.0
  %335 = vmatpush1.msra.mxu0 0.0
  %336 = vmatprep.subr.mxu0 0.0
  %337 = vmatpush1.msra.mxu0 0.0
  %338 = vmatprep.subr.mxu0 0.0
  %339 = vmatpush1.msra.mxu0 0.0
  %340 = vmatprep.subr.mxu0 0.0
  %341 = vmatpush1.msra.mxu0 0.0
  %342 = vmatprep.subr.mxu0 0.0
  %343 = vmatpush1.msra.mxu0 0.0
  %344 = vmatprep.subr.mxu0 0.0
  %345 = vmatpush1.msra.mxu0 0.0
  %346 = vmatprep.subr.mxu0 0.0
  %347 = vmatpush1.msra.mxu0 0.0
  %348 = vmatprep.subr.mxu0 0.0
  %349 = vmatpush1.msra.mxu0 0.0
  %350 = vmatprep.subr.mxu0 0.0
  %351 = vmatpush1.msra.mxu0 0.0
  %352 = vmatprep.subr.mxu0 0.0
  %353 = vmatpush1.msra.mxu0 0.0
  %354 = vmatprep.subr.mxu0 0.0
  %355 = vmatpush1.msra.mxu0 0.0
  %356 = vmatprep.subr.mxu0 0.0
  %357 = vmatpush1.msra.mxu0 0.0
  %358 = vmatprep.subr.mxu0 0.0
  %359 = vmatpush1.msra.mxu0 0.0
  %360 = vmatprep.subr.mxu0 0.0
  %361 = vmatpush1.msra.mxu0 0.0
  %362 = vmatprep.subr.mxu0 0.0
  %363 = vmatpush1.msra.mxu0 0.0
  %364 = vmatprep.mubr.f32.mxu0 0.0
  %365 = vmatmul.mubr.f32.gmra.mrb[0].mxu0 %v289
  %v366 = vpop.f32.mrb[0].mxu0
  %v367 = vadd.f32 0.0, %v366
  %v368 = vpop.f32.mrb[0].mxu0
  %369 = vmatprep.mubr.f32.mxu0 0.0
  %370 = vmatmul.mubr.f32.gmra.mrb[0].mxu0 %v292
  %v371 = vpop.f32.mrb[0].mxu0
  %v372 = vadd.f32 0.0, %v371
  %v373 = vpop.f32.mrb[0].mxu0
  %374 = vmatprep.mubr.f32.mxu0 0.0
  %375 = vmatmul.mubr.f32.gmra.mrb[0].mxu0 %v295
  %v376 = vpop.f32.mrb[0].mxu0
  %v377 = vadd.f32 0.0, %v376
  %v378 = vpop.f32.mrb[0].mxu0
  %379 = vmatprep.mubr.f32.mxu0 0.0
  %380 = vmatmul.mubr.f32.gmra.mrb[0].mxu0 %v298
  %v381 = vpop.f32.mrb[0].mxu0
  %v382 = vadd.f32 0.0, %v381
  %v383 = vpop.f32.mrb[0].mxu0
  %384 = vdwg.mxu0
  %v386 = vsel %vm287, %v150, 0
  %v389 = vsel %vm287, %v155, 0
  %v392 = vsel %vm287, %v160, 0
  %v395 = vsel %vm287, %v165, 0
  %397 = vmatprep.subr.mxu0 0.0
  %398 = vmatpush1.msra.mxu0 %v168
  %399 = vmatprep.subr.mxu0 0.0
  %400 = vmatpush1.msra.mxu0 %v169
  %401 = vmatprep.subr.mxu0 0.0
  %402 = vmatpush1.msra.mxu0 %v170
  %403 = vmatprep.subr.mxu0 0.0
  %404 = vmatpush1.msra.mxu0 %v171
  %405 = vmatprep.subr.mxu0 0.0
  %406 = vmatpush1.msra.mxu0 %v172
  %407 = vmatprep.subr.mxu0 0.0
  %408 = vmatpush1.msra.mxu0 %v173
  %409 = vmatprep.subr.mxu0 0.0
  %410 = vmatpush1.msra.mxu0 %v174
  %411 = vmatprep.subr.mxu0 0.0
  %412 = vmatpush1.msra.mxu0 %v175
  %413 = vmatprep.subr.mxu0 0.0
  %414 = vmatpush1.msra.mxu0 0.0
  %415 = vmatprep.subr.mxu0 0.0
  %416 = vmatpush1.msra.mxu0 0.0
  %417 = vmatprep.subr.mxu0 0.0
  %418 = vmatpush1.msra.mxu0 0.0
  %419 = vmatprep.subr.mxu0 0.0
  %420 = vmatpush1.msra.mxu0 0.0
  %421 = vmatprep.subr.mxu0 0.0
  %422 = vmatpush1.msra.mxu0 0.0
  %423 = vmatprep.subr.mxu0 0.0
  %424 = vmatpush1.msra.mxu0 0.0
  %425 = vmatprep.subr.mxu0 0.0
  %426 = vmatpush1.msra.mxu0 0.0
  %427 = vmatprep.subr.mxu0 0.0
  %428 = vmatpush1.msra.mxu0 0.0
  %429 = vmatprep.subr.mxu0 0.0
  %430 = vmatpush1.msra.mxu0 0.0
  %431 = vmatprep.subr.mxu0 0.0
  %432 = vmatpush1.msra.mxu0 0.0
  %433 = vmatprep.subr.mxu0 0.0
  %434 = vmatpush1.msra.mxu0 0.0
  %435 = vmatprep.subr.mxu0 0.0
  %436 = vmatpush1.msra.mxu0 0.0
  %437 = vmatprep.subr.mxu0 0.0
  %438 = vmatpush1.msra.mxu0 0.0
  %439 = vmatprep.subr.mxu0 0.0
  %440 = vmatpush1.msra.mxu0 0.0
  %441 = vmatprep.subr.mxu0 0.0
  %442 = vmatpush1.msra.mxu0 0.0
  %443 = vmatprep.subr.mxu0 0.0
  %444 = vmatpush1.msra.mxu0 0.0
  %445 = vmatprep.subr.mxu0 0.0
  %446 = vmatpush1.msra.mxu0 0.0
  %447 = vmatprep.subr.mxu0 0.0
  %448 = vmatpush1.msra.mxu0 0.0
  %449 = vmatprep.subr.mxu0 0.0
  %450 = vmatpush1.msra.mxu0 0.0
  %451 = vmatprep.subr.mxu0 0.0
  %452 = vmatpush1.msra.mxu0 0.0
  %453 = vmatprep.subr.mxu0 0.0
  %454 = vmatpush1.msra.mxu0 0.0
  %455 = vmatprep.subr.mxu0 0.0
  %456 = vmatpush1.msra.mxu0 0.0
  %457 = vmatprep.subr.mxu0 0.0
  %458 = vmatpush1.msra.mxu0 0.0
  %459 = vmatprep.subr.mxu0 0.0
  %460 = vmatpush1.msra.mxu0 0.0
  %461 = vmatprep.mubr.f32.mxu0 0.0
  %462 = vmatmul.mubr.f32.gmra.mrb[0].mxu0 %v386
  %v463 = vpop.f32.mrb[0].mxu0
  %v464 = vadd.f32 %v367, %v463
  %v465 = vpop.f32.mrb[0].mxu0
  %466 = vmatprep.mubr.f32.mxu0 0.0
  %467 = vmatmul.mubr.f32.gmra.mrb[0].mxu0 %v389
  %v468 = vpop.f32.mrb[0].mxu0
  %v469 = vadd.f32 %v372, %v468
  %v470 = vpop.f32.mrb[0].mxu0
  %471 = vmatprep.mubr.f32.mxu0 0.0
  %472 = vmatmul.mubr.f32.gmra.mrb[0].mxu0 %v392
  %v473 = vpop.f32.mrb[0].mxu0
  %v474 = vadd.f32 %v377, %v473
  %v475 = vpop.f32.mrb[0].mxu0
  %476 = vmatprep.mubr.f32.mxu0 0.0
  %477 = vmatmul.mubr.f32.gmra.mrb[0].mxu0 %v395
  %v478 = vpop.f32.mrb[0].mxu0
  %v479 = vadd.f32 %v382, %v478
  %v480 = vpop.f32.mrb[0].mxu0
  %481 = vdwg.mxu0
  %s482 = scalar_lea.vmem %s1, 64
  %v483 = vld [vmem:[%s482] sm:$0xff]
  %v484 = vld [vmem:[%s482 + $0x8] sm:$0xff]
  %v485 = vld [vmem:[%s482 + $0x10] sm:$0xff]
  %v486 = vld [vmem:[%s482 + $0x18] sm:$0xff]
  %v488 = vsel %vm70, %v483, 0
  %v491 = vsel %vm70, %v484, 0
  %v494 = vsel %vm70, %v485, 0
  %v497 = vsel %vm70, %v486, 0
  %499 = vmatprep.subr.mxu0 0.0
  %500 = vmatpush1.msra.mxu0 %v62
  %501 = vmatprep.subr.mxu0 0.0
  %502 = vmatpush1.msra.mxu0 %v63
  %503 = vmatprep.subr.mxu0 0.0
  %504 = vmatpush1.msra.mxu0 %v64
  %505 = vmatprep.subr.mxu0 0.0
  %506 = vmatpush1.msra.mxu0 %v65
  %507 = vmatprep.subr.mxu0 0.0
  %508 = vmatpush1.msra.mxu0 0.0
  %509 = vmatprep.subr.mxu0 0.0
  %510 = vmatpush1.msra.mxu0 0.0
  %511 = vmatprep.subr.mxu0 0.0
  %512 = vmatpush1.msra.mxu0 0.0
  %513 = vmatprep.subr.mxu0 0.0
  %514 = vmatpush1.msra.mxu0 0.0
  %515 = vmatprep.subr.mxu0 0.0
  %516 = vmatpush1.msra.mxu0 0.0
  %517 = vmatprep.subr.mxu0 0.0
  %518 = vmatpush1.msra.mxu0 0.0
  %519 = vmatprep.subr.mxu0 0.0
  %520 = vmatpush1.msra.mxu0 0.0
  %521 = vmatprep.subr.mxu0 0.0
  %522 = vmatpush1.msra.mxu0 0.0
  %523 = vmatprep.subr.mxu0 0.0
  %524 = vmatpush1.msra.mxu0 0.0
  %525 = vmatprep.subr.mxu0 0.0
  %526 = vmatpush1.msra.mxu0 0.0
  %527 = vmatprep.subr.mxu0 0.0
  %528 = vmatpush1.msra.mxu0 0.0
  %529 = vmatprep.subr.mxu0 0.0
  %530 = vmatpush1.msra.mxu0 0.0
  %531 = vmatprep.subr.mxu0 0.0
  %532 = vmatpush1.msra.mxu0 0.0
  %533 = vmatprep.subr.mxu0 0.0
  %534 = vmatpush1.msra.mxu0 0.0
  %535 = vmatprep.subr.mxu0 0.0
  %536 = vmatpush1.msra.mxu0 0.0
  %537 = vmatprep.subr.mxu0 0.0
  %538 = vmatpush1.msra.mxu0 0.0
  %539 = vmatprep.subr.mxu0 0.0
  %540 = vmatpush1.msra.mxu0 0.0
  %541 = vmatprep.subr.mxu0 0.0
  %542 = vmatpush1.msra.mxu0 0.0
  %543 = vmatprep.subr.mxu0 0.0
  %544 = vmatpush1.msra.mxu0 0.0
  %545 = vmatprep.subr.mxu0 0.0
  %546 = vmatpush1.msra.mxu0 0.0
  %547 = vmatprep.subr.mxu0 0.0
  %548 = vmatpush1.msra.mxu0 0.0
  %549 = vmatprep.subr.mxu0 0.0
  %550 = vmatpush1.msra.mxu0 0.0
  %551 = vmatprep.subr.mxu0 0.0
  %552 = vmatpush1.msra.mxu0 0.0
  %553 = vmatprep.subr.mxu0 0.0
  %554 = vmatpush1.msra.mxu0 0.0
  %555 = vmatprep.subr.mxu0 0.0
  %556 = vmatpush1.msra.mxu0 0.0
  %557 = vmatprep.subr.mxu0 0.0
  %558 = vmatpush1.msra.mxu0 0.0
  %559 = vmatprep.subr.mxu0 0.0
  %560 = vmatpush1.msra.mxu0 0.0
  %561 = vmatprep.subr.mxu0 0.0
  %562 = vmatpush1.msra.mxu0 0.0
  %563 = vmatprep.mubr.f32.mxu0 0.0
  %564 = vmatmul.mubr.f32.gmra.mrb[0].mxu0 %v488
  %v565 = vpop.f32.mrb[0].mxu0
  %v566 = vadd.f32 0.0, %v565
  %v567 = vpop.f32.mrb[0].mxu0
  %568 = vmatprep.mubr.f32.mxu0 0.0
  %569 = vmatmul.mubr.f32.gmra.mrb[0].mxu0 %v491
  %v570 = vpop.f32.mrb[0].mxu0
  %v571 = vadd.f32 0.0, %v570
  %v572 = vpop.f32.mrb[0].mxu0
  %573 = vmatprep.mubr.f32.mxu0 0.0
  %574 = vmatmul.mubr.f32.gmra.mrb[0].mxu0 %v494
  %v575 = vpop.f32.mrb[0].mxu0
  %v576 = vadd.f32 0.0, %v575
  %v577 = vpop.f32.mrb[0].mxu0
  %578 = vmatprep.mubr.f32.mxu0 0.0
  %579 = vmatmul.mubr.f32.gmra.mrb[0].mxu0 %v497
  %v580 = vpop.f32.mrb[0].mxu0
  %v581 = vadd.f32 0.0, %v580
  %v582 = vpop.f32.mrb[0].mxu0
  %583 = vdwg.mxu0
  %s584 = scalar_lea.vmem %s2, 128
  %v585 = vld [vmem:[%s584] sm:$0xff]
  %v586 = vld [vmem:[%s584 + $0x8] sm:$0xff]
  %v587 = vld [vmem:[%s584 + $0x10] sm:$0xff]
  %v588 = vld [vmem:[%s584 + $0x18] sm:$0xff]
  %v589 = vld [vmem:[%s584 + $0x20] sm:$0xff]
  %v590 = vld [vmem:[%s584 + $0x28] sm:$0xff]
  %v591 = vld [vmem:[%s584 + $0x30] sm:$0xff]
  %v592 = vld [vmem:[%s584 + $0x38] sm:$0xff]
  %v594 = vsel %vm287, %v566, 0
  %v597 = vsel %vm287, %v571, 0
  %v600 = vsel %vm287, %v576, 0
  %v603 = vsel %vm287, %v581, 0
  %605 = vmatprep.subr.mxu0 0.0
  %606 = vmatpush1.msra.mxu0 %v585
  %607 = vmatprep.subr.mxu0 0.0
  %608 = vmatpush1.msra.mxu0 %v586
  %609 = vmatprep.subr.mxu0 0.0
  %610 = vmatpush1.msra.mxu0 %v587
  %611 = vmatprep.subr.mxu0 0.0
  %612 = vmatpush1.msra.mxu0 %v588
  %613 = vmatprep.subr.mxu0 0.0
  %614 = vmatpush1.msra.mxu0 %v589
  %615 = vmatprep.subr.mxu0 0.0
  %616 = vmatpush1.msra.mxu0 %v590
  %617 = vmatprep.subr.mxu0 0.0
  %618 = vmatpush1.msra.mxu0 %v591
  %619 = vmatprep.subr.mxu0 0.0
  %620 = vmatpush1.msra.mxu0 %v592
  %621 = vmatprep.subr.mxu0 0.0
  %622 = vmatpush1.msra.mxu0 0.0
  %623 = vmatprep.subr.mxu0 0.0
  %624 = vmatpush1.msra.mxu0 0.0
  %625 = vmatprep.subr.mxu0 0.0
  %626 = vmatpush1.msra.mxu0 0.0
  %627 = vmatprep.subr.mxu0 0.0
  %628 = vmatpush1.msra.mxu0 0.0
  %629 = vmatprep.subr.mxu0 0.0
  %630 = vmatpush1.msra.mxu0 0.0
  %631 = vmatprep.subr.mxu0 0.0
  %632 = vmatpush1.msra.mxu0 0.0
  %633 = vmatprep.subr.mxu0 0.0
  %634 = vmatpush1.msra.mxu0 0.0
  %635 = vmatprep.subr.mxu0 0.0
  %636 = vmatpush1.msra.mxu0 0.0
  %637 = vmatprep.subr.mxu0 0.0
  %638 = vmatpush1.msra.mxu0 0.0
  %639 = vmatprep.subr.mxu0 0.0
  %640 = vmatpush1.msra.mxu0 0.0
  %641 = vmatprep.subr.mxu0 0.0
  %642 = vmatpush1.msra.mxu0 0.0
  %643 = vmatprep.subr.mxu0 0.0
  %644 = vmatpush1.msra.mxu0 0.0
  %645 = vmatprep.subr.mxu0 0.0
  %646 = vmatpush1.msra.mxu0 0.0
  %647 = vmatprep.subr.mxu0 0.0
  %648 = vmatpush1.msra.mxu0 0.0
  %649 = vmatprep.subr.mxu0 0.0
  %650 = vmatpush1.msra.mxu0 0.0
  %651 = vmatprep.subr.mxu0 0.0
  %652 = vmatpush1.msra.mxu0 0.0
  %653 = vmatprep.subr.mxu0 0.0
  %654 = vmatpush1.msra.mxu0 0.0
  %655 = vmatprep.subr.mxu0 0.0
  %656 = vmatpush1.msra.mxu0 0.0
  %657 = vmatprep.subr.mxu0 0.0
  %658 = vmatpush1.msra.mxu0 0.0
  %659 = vmatprep.subr.mxu0 0.0
  %660 = vmatpush1.msra.mxu0 0.0
  %661 = vmatprep.subr.mxu0 0.0
  %662 = vmatpush1.msra.mxu0 0.0
  %663 = vmatprep.subr.mxu0 0.0
  %664 = vmatpush1.msra.mxu0 0.0
  %665 = vmatprep.subr.mxu0 0.0
  %666 = vmatpush1.msra.mxu0 0.0
  %667 = vmatprep.subr.mxu0 0.0
  %668 = vmatpush1.msra.mxu0 0.0
  %669 = vmatprep.mubr.f32.mxu0 0.0
  %670 = vmatmul.mubr.f32.gmra.mrb[0].mxu0 %v594
  %v671 = vpop.f32.mrb[0].mxu0
  %v672 = vadd.f32 0.0, %v671
  %v673 = vpop.f32.mrb[0].mxu0
  %674 = vmatprep.mubr.f32.mxu0 0.0
  %675 = vmatmul.mubr.f32.gmra.mrb[0].mxu0 %v597
  %v676 = vpop.f32.mrb[0].mxu0
  %v677 = vadd.f32 0.0, %v676
  %v678 = vpop.f32.mrb[0].mxu0
  %679 = vmatprep.mubr.f32.mxu0 0.0
  %680 = vmatmul.mubr.f32.gmra.mrb[0].mxu0 %v600
  %v681 = vpop.f32.mrb[0].mxu0
  %v682 = vadd.f32 0.0, %v681
  %v683 = vpop.f32.mrb[0].mxu0
  %684 = vmatprep.mubr.f32.mxu0 0.0
  %685 = vmatmul.mubr.f32.gmra.mrb[0].mxu0 %v603
  %v686 = vpop.f32.mrb[0].mxu0
  %v687 = vadd.f32 0.0, %v686
  %v688 = vpop.f32.mrb[0].mxu0
  %689 = vdwg.mxu0
  %v690 = vadd.f32 %v464, %v672
  %v691 = vadd.f32 %v469, %v677
  %v692 = vadd.f32 %v474, %v682
  %v693 = vadd.f32 %v479, %v687
  %v694 = vld [vmem:[%s3] sm:$0x1]
  %v696 = vlaneseq
  %v697 = vshrl.u32 %v696, 7
  %v698 = vsub.s32 0, %v697
  %v699 = vrot.slane %v694, %v698
  %v701 = vadd.f32 %v690, %v699
  %v702 = vadd.f32 %v691, %v699
  %v703 = vadd.f32 %v692, %v699
  %v704 = vadd.f32 %v693, %v699
  %v705 = vmax.f32 %v701, 0.0
  %v706 = vmax.f32 %v702, 0.0
  %v707 = vmax.f32 %v703, 0.0
  %v708 = vmax.f32 %v704, 0.0
  %v709 = vld [vmem:[%s4] sm:$0xff]
  %v710 = vld [vmem:[%s4 + $0x8] sm:$0xff]
  %v712 = vsel %vm70, %v709, 0
  %v715 = vsel %vm70, %v710, 0
  %717 = vmatprep.subr.mxu0 0.0
  %718 = vmatpush1.msra.mxu0 %v705
  %719 = vmatprep.subr.mxu0 0.0
  %720 = vmatpush1.msra.mxu0 %v706
  %721 = vmatprep.subr.mxu0 0.0
  %722 = vmatpush1.msra.mxu0 %v707
  %723 = vmatprep.subr.mxu0 0.0
  %724 = vmatpush1.msra.mxu0 %v708
  %725 = vmatprep.subr.mxu0 0.0
  %726 = vmatpush1.msra.mxu0 0.0
  %727 = vmatprep.subr.mxu0 0.0
  %728 = vmatpush1.msra.mxu0 0.0
  %729 = vmatprep.subr.mxu0 0.0
  %730 = vmatpush1.msra.mxu0 0.0
  %731 = vmatprep.subr.mxu0 0.0
  %732 = vmatpush1.msra.mxu0 0.0
  %733 = vmatprep.subr.mxu0 0.0
  %734 = vmatpush1.msra.mxu0 0.0
  %735 = vmatprep.subr.mxu0 0.0
  %736 = vmatpush1.msra.mxu0 0.0
  %737 = vmatprep.subr.mxu0 0.0
  %738 = vmatpush1.msra.mxu0 0.0
  %739 = vmatprep.subr.mxu0 0.0
  %740 = vmatpush1.msra.mxu0 0.0
  %741 = vmatprep.subr.mxu0 0.0
  %742 = vmatpush1.msra.mxu0 0.0
  %743 = vmatprep.subr.mxu0 0.0
  %744 = vmatpush1.msra.mxu0 0.0
  %745 = vmatprep.subr.mxu0 0.0
  %746 = vmatpush1.msra.mxu0 0.0
  %747 = vmatprep.subr.mxu0 0.0
  %748 = vmatpush1.msra.mxu0 0.0
  %749 = vmatprep.subr.mxu0 0.0
  %750 = vmatpush1.msra.mxu0 0.0
  %751 = vmatprep.subr.mxu0 0.0
  %752 = vmatpush1.msra.mxu0 0.0
  %753 = vmatprep.subr.mxu0 0.0
  %754 = vmatpush1.msra.mxu0 0.0
  %755 = vmatprep.subr.mxu0 0.0
  %756 = vmatpush1.msra.mxu0 0.0
  %757 = vmatprep.subr.mxu0 0.0
  %758 = vmatpush1.msra.mxu0 0.0
  %759 = vmatprep.subr.mxu0 0.0
  %760 = vmatpush1.msra.mxu0 0.0
  %761 = vmatprep.subr.mxu0 0.0
  %762 = vmatpush1.msra.mxu0 0.0
  %763 = vmatprep.subr.mxu0 0.0
  %764 = vmatpush1.msra.mxu0 0.0
  %765 = vmatprep.subr.mxu0 0.0
  %766 = vmatpush1.msra.mxu0 0.0
  %767 = vmatprep.subr.mxu0 0.0
  %768 = vmatpush1.msra.mxu0 0.0
  %769 = vmatprep.subr.mxu0 0.0
  %770 = vmatpush1.msra.mxu0 0.0
  %771 = vmatprep.subr.mxu0 0.0
  %772 = vmatpush1.msra.mxu0 0.0
  %773 = vmatprep.subr.mxu0 0.0
  %774 = vmatpush1.msra.mxu0 0.0
  %775 = vmatprep.subr.mxu0 0.0
  %776 = vmatpush1.msra.mxu0 0.0
  %777 = vmatprep.subr.mxu0 0.0
  %778 = vmatpush1.msra.mxu0 0.0
  %779 = vmatprep.subr.mxu0 0.0
  %780 = vmatpush1.msra.mxu0 0.0
  %781 = vmatprep.mubr.f32.mxu0 0.0
  %782 = vmatmul.mubr.f32.gmra.mrb[0].mxu0 %v712
  %v783 = vpop.f32.mrb[0].mxu0
  %v784 = vadd.f32 0.0, %v783
  %v785 = vpop.f32.mrb[0].mxu0
  %786 = vmatprep.mubr.f32.mxu0 0.0
  %787 = vmatmul.mubr.f32.gmra.mrb[0].mxu0 %v715
  %v788 = vpop.f32.mrb[0].mxu0
  %v789 = vadd.f32 0.0, %v788
  %v790 = vpop.f32.mrb[0].mxu0
  %791 = vdwg.mxu0
  %v792 = vld [vmem:[%s5] sm:$0xff]
  %v793 = vld [vmem:[%s5 + $0x8] sm:$0xff]
  %v794 = vld [vmem:[%s5 + $0x10] sm:$0xff]
  %v795 = vld [vmem:[%s5 + $0x18] sm:$0xff]
  %v796 = vld [vmem:[%s5 + $0x20] sm:$0xff]
  %v797 = vld [vmem:[%s5 + $0x28] sm:$0xff]
  %v798 = vld [vmem:[%s5 + $0x30] sm:$0xff]
  %v799 = vld [vmem:[%s5 + $0x38] sm:$0xff]
  %s800 = scalar_lea.vmem %s4, 16
  %v801 = vld [vmem:[%s800] sm:$0xff]
  %v802 = vld [vmem:[%s800 + $0x8] sm:$0xff]
  %v804 = vsel %vm70, %v801, 0
  %v807 = vsel %vm70, %v802, 0
  %809 = vmatprep.subr.mxu0 0.0
  %810 = vmatpush1.msra.mxu0 %v705
  %811 = vmatprep.subr.mxu0 0.0
  %812 = vmatpush1.msra.mxu0 %v706
  %813 = vmatprep.subr.mxu0 0.0
  %814 = vmatpush1.msra.mxu0 %v707
  %815 = vmatprep.subr.mxu0 0.0
  %816 = vmatpush1.msra.mxu0 %v708
  %817 = vmatprep.subr.mxu0 0.0
  %818 = vmatpush1.msra.mxu0 0.0
  %819 = vmatprep.subr.mxu0 0.0
  %820 = vmatpush1.msra.mxu0 0.0
  %821 = vmatprep.subr.mxu0 0.0
  %822 = vmatpush1.msra.mxu0 0.0
  %823 = vmatprep.subr.mxu0 0.0
  %824 = vmatpush1.msra.mxu0 0.0
  %825 = vmatprep.subr.mxu0 0.0
  %826 = vmatpush1.msra.mxu0 0.0
  %827 = vmatprep.subr.mxu0 0.0
  %828 = vmatpush1.msra.mxu0 0.0
  %829 = vmatprep.subr.mxu0 0.0
  %830 = vmatpush1.msra.mxu0 0.0
  %831 = vmatprep.subr.mxu0 0.0
  %832 = vmatpush1.msra.mxu0 0.0
  %833 = vmatprep.subr.mxu0 0.0
  %834 = vmatpush1.msra.mxu0 0.0
  %835 = vmatprep.subr.mxu0 0.0
  %836 = vmatpush1.msra.mxu0 0.0
  %837 = vmatprep.subr.mxu0 0.0
  %838 = vmatpush1.msra.mxu0 0.0
  %839 = vmatprep.subr.mxu0 0.0
  %840 = vmatpush1.msra.mxu0 0.0
  %841 = vmatprep.subr.mxu0 0.0
  %842 = vmatpush1.msra.mxu0 0.0
  %843 = vmatprep.subr.mxu0 0.0
  %844 = vmatpush1.msra.mxu0 0.0
  %845 = vmatprep.subr.mxu0 0.0
  %846 = vmatpush1.msra.mxu0 0.0
  %847 = vmatprep.subr.mxu0 0.0
  %848 = vmatpush1.msra.mxu0 0.0
  %849 = vmatprep.subr.mxu0 0.0
  %850 = vmatpush1.msra.mxu0 0.0
  %851 = vmatprep.subr.mxu0 0.0
  %852 = vmatpush1.msra.mxu0 0.0
  %853 = vmatprep.subr.mxu0 0.0
  %854 = vmatpush1.msra.mxu0 0.0
  %855 = vmatprep.subr.mxu0 0.0
  %856 = vmatpush1.msra.mxu0 0.0
  %857 = vmatprep.subr.mxu0 0.0
  %858 = vmatpush1.msra.mxu0 0.0
  %859 = vmatprep.subr.mxu0 0.0
  %860 = vmatpush1.msra.mxu0 0.0
  %861 = vmatprep.subr.mxu0 0.0
  %862 = vmatpush1.msra.mxu0 0.0
  %863 = vmatprep.subr.mxu0 0.0
  %864 = vmatpush1.msra.mxu0 0.0
  %865 = vmatprep.subr.mxu0 0.0
  %866 = vmatpush1.msra.mxu0 0.0
  %867 = vmatprep.subr.mxu0 0.0
  %868 = vmatpush1.msra.mxu0 0.0
  %869 = vmatprep.subr.mxu0 0.0
  %870 = vmatpush1.msra.mxu0 0.0
  %871 = vmatprep.subr.mxu0 0.0
  %872 = vmatpush1.msra.mxu0 0.0
  %873 = vmatprep.mubr.f32.mxu0 0.0
  %874 = vmatmul.mubr.f32.gmra.mrb[0].mxu0 %v804
  %v875 = vpop.f32.mrb[0].mxu0
  %v876 = vadd.f32 0.0, %v875
  %v877 = vpop.f32.mrb[0].mxu0
  %878 = vmatprep.mubr.f32.mxu0 0.0
  %879 = vmatmul.mubr.f32.gmra.mrb[0].mxu0 %v807
  %v880 = vpop.f32.mrb[0].mxu0
  %v881 = vadd.f32 0.0, %v880
  %v882 = vpop.f32.mrb[0].mxu0
  %883 = vdwg.mxu0
  %s884 = scalar_lea.vmem %s5, 64
  %v885 = vld [vmem:[%s884] sm:$0xff]
  %v886 = vld [vmem:[%s884 + $0x8] sm:$0xff]
  %v887 = vld [vmem:[%s884 + $0x10] sm:$0xff]
  %v888 = vld [vmem:[%s884 + $0x18] sm:$0xff]
  %v889 = vld [vmem:[%s884 + $0x20] sm:$0xff]
  %v890 = vld [vmem:[%s884 + $0x28] sm:$0xff]
  %v891 = vld [vmem:[%s884 + $0x30] sm:$0xff]
  %v892 = vld [vmem:[%s884 + $0x38] sm:$0xff]
  %v894 = vsel %vm287, %v876, 0
  %v897 = vsel %vm287, %v881, 0
  %899 = vmatprep.subr.mxu0 0.0
  %900 = vmatpush1.msra.mxu0 %v885
  %901 = vmatprep.subr.mxu0 0.0
  %902 = vmatpush1.msra.mxu0 %v886
  %903 = vmatprep.subr.mxu0 0.0
  %904 = vmatpush1.msra.mxu0 %v887
  %905 = vmatprep.subr.mxu0 0.0
  %906 = vmatpush1.msra.mxu0 %v888
  %907 = vmatprep.subr.mxu0 0.0
  %908 = vmatpush1.msra.mxu0 %v889
  %909 = vmatprep.subr.mxu0 0.0
  %910 = vmatpush1.msra.mxu0 %v890
  %911 = vmatprep.subr.mxu0 0.0
  %912 = vmatpush1.msra.mxu0 %v891
  %913 = vmatprep.subr.mxu0 0.0
  %914 = vmatpush1.msra.mxu0 %v892
  %915 = vmatprep.subr.mxu0 0.0
  %916 = vmatpush1.msra.mxu0 0.0
  %917 = vmatprep.subr.mxu0 0.0
  %918 = vmatpush1.msra.mxu0 0.0
  %919 = vmatprep.subr.mxu0 0.0
  %920 = vmatpush1.msra.mxu0 0.0
  %921 = vmatprep.subr.mxu0 0.0
  %922 = vmatpush1.msra.mxu0 0.0
  %923 = vmatprep.subr.mxu0 0.0
  %924 = vmatpush1.msra.mxu0 0.0
  %925 = vmatprep.subr.mxu0 0.0
  %926 = vmatpush1.msra.mxu0 0.0
  %927 = vmatprep.subr.mxu0 0.0
  %928 = vmatpush1.msra.mxu0 0.0
  %929 = vmatprep.subr.mxu0 0.0
  %930 = vmatpush1.msra.mxu0 0.0
  %931 = vmatprep.subr.mxu0 0.0
  %932 = vmatpush1.msra.mxu0 0.0
  %933 = vmatprep.subr.mxu0 0.0
  %934 = vmatpush1.msra.mxu0 0.0
  %935 = vmatprep.subr.mxu0 0.0
  %936 = vmatpush1.msra.mxu0 0.0
  %937 = vmatprep.subr.mxu0 0.0
  %938 = vmatpush1.msra.mxu0 0.0
  %939 = vmatprep.subr.mxu0 0.0
  %940 = vmatpush1.msra.mxu0 0.0
  %941 = vmatprep.subr.mxu0 0.0
  %942 = vmatpush1.msra.mxu0 0.0
  %943 = vmatprep.subr.mxu0 0.0
  %944 = vmatpush1.msra.mxu0 0.0
  %945 = vmatprep.subr.mxu0 0.0
  %946 = vmatpush1.msra.mxu0 0.0
  %947 = vmatprep.subr.mxu0 0.0
  %948 = vmatpush1.msra.mxu0 0.0
  %949 = vmatprep.subr.mxu0 0.0
  %950 = vmatpush1.msra.mxu0 0.0
  %951 = vmatprep.subr.mxu0 0.0
  %952 = vmatpush1.msra.mxu0 0.0
  %953 = vmatprep.subr.mxu0 0.0
  %954 = vmatpush1.msra.mxu0 0.0
  %955 = vmatprep.subr.mxu0 0.0
  %956 = vmatpush1.msra.mxu0 0.0
  %957 = vmatprep.subr.mxu0 0.0
  %958 = vmatpush1.msra.mxu0 0.0
  %959 = vmatprep.subr.mxu0 0.0
  %960 = vmatpush1.msra.mxu0 0.0
  %961 = vmatprep.subr.mxu0 0.0
  %962 = vmatpush1.msra.mxu0 0.0
  %963 = vmatprep.mubr.f32.mxu0 0.0
  %964 = vmatmul.mubr.f32.gmra.mrb[0].mxu0 %v894
  %v965 = vpop.f32.mrb[0].mxu0
  %v966 = vadd.f32 0.0, %v965
  %v967 = vpop.f32.mrb[0].mxu0
  %968 = vmatprep.mubr.f32.mxu0 0.0
  %969 = vmatmul.mubr.f32.gmra.mrb[0].mxu0 %v897
  %v970 = vpop.f32.mrb[0].mxu0
  %v971 = vadd.f32 0.0, %v970
  %v972 = vpop.f32.mrb[0].mxu0
  %973 = vdwg.mxu0
  %v975 = vsel %vm287, %v784, 0
  %v978 = vsel %vm287, %v789, 0
  %980 = vmatprep.subr.mxu0 0.0
  %981 = vmatpush1.msra.mxu0 %v792
  %982 = vmatprep.subr.mxu0 0.0
  %983 = vmatpush1.msra.mxu0 %v793
  %984 = vmatprep.subr.mxu0 0.0
  %985 = vmatpush1.msra.mxu0 %v794
  %986 = vmatprep.subr.mxu0 0.0
  %987 = vmatpush1.msra.mxu0 %v795
  %988 = vmatprep.subr.mxu0 0.0
  %989 = vmatpush1.msra.mxu0 %v796
  %990 = vmatprep.subr.mxu0 0.0
  %991 = vmatpush1.msra.mxu0 %v797
  %992 = vmatprep.subr.mxu0 0.0
  %993 = vmatpush1.msra.mxu0 %v798
  %994 = vmatprep.subr.mxu0 0.0
  %995 = vmatpush1.msra.mxu0 %v799
  %996 = vmatprep.subr.mxu0 0.0
  %997 = vmatpush1.msra.mxu0 0.0
  %998 = vmatprep.subr.mxu0 0.0
  %999 = vmatpush1.msra.mxu0 0.0
  %1000 = vmatprep.subr.mxu0 0.0
  %1001 = vmatpush1.msra.mxu0 0.0
  %1002 = vmatprep.subr.mxu0 0.0
  %1003 = vmatpush1.msra.mxu0 0.0
  %1004 = vmatprep.subr.mxu0 0.0
  %1005 = vmatpush1.msra.mxu0 0.0
  %1006 = vmatprep.subr.mxu0 0.0
  %1007 = vmatpush1.msra.mxu0 0.0
  %1008 = vmatprep.subr.mxu0 0.0
  %1009 = vmatpush1.msra.mxu0 0.0
  %1010 = vmatprep.subr.mxu0 0.0
  %1011 = vmatpush1.msra.mxu0 0.0
  %1012 = vmatprep.subr.mxu0 0.0
  %1013 = vmatpush1.msra.mxu0 0.0
  %1014 = vmatprep.subr.mxu0 0.0
  %1015 = vmatpush1.msra.mxu0 0.0
  %1016 = vmatprep.subr.mxu0 0.0
  %1017 = vmatpush1.msra.mxu0 0.0
  %1018 = vmatprep.subr.mxu0 0.0
  %1019 = vmatpush1.msra.mxu0 0.0
  %1020 = vmatprep.subr.mxu0 0.0
  %1021 = vmatpush1.msra.mxu0 0.0
  %1022 = vmatprep.subr.mxu0 0.0
  %1023 = vmatpush1.msra.mxu0 0.0
  %1024 = vmatprep.subr.mxu0 0.0
  %1025 = vmatpush1.msra.mxu0 0.0
  %1026 = vmatprep.subr.mxu0 0.0
  %1027 = vmatpush1.msra.mxu0 0.0
  %1028 = vmatprep.subr.mxu0 0.0
  %1029 = vmatpush1.msra.mxu0 0.0
  %1030 = vmatprep.subr.mxu0 0.0
  %1031 = vmatpush1.msra.mxu0 0.0
  %1032 = vmatprep.subr.mxu0 0.0
  %1033 = vmatpush1.msra.mxu0 0.0
  %1034 = vmatprep.subr.mxu0 0.0
  %1035 = vmatpush1.msra.mxu0 0.0
  %1036 = vmatprep.subr.mxu0 0.0
  %1037 = vmatpush1.msra.mxu0 0.0
  %1038 = vmatprep.subr.mxu0 0.0
  %1039 = vmatpush1.msra.mxu0 0.0
  %1040 = vmatprep.subr.mxu0 0.0
  %1041 = vmatpush1.msra.mxu0 0.0
  %1042 = vmatprep.subr.mxu0 0.0
  %1043 = vmatpush1.msra.mxu0 0.0
  %1044 = vmatprep.mubr.f32.mxu0 0.0
  %1045 = vmatmul.mubr.f32.gmra.mrb[0].mxu0 %v975
  %v1046 = vpop.f32.mrb[0].mxu0
  %v1047 = vadd.f32 %v966, %v1046
  %v1048 = vpop.f32.mrb[0].mxu0
  %1049 = vmatprep.mubr.f32.mxu0 0.0
  %1050 = vmatmul.mubr.f32.gmra.mrb[0].mxu0 %v978
  %v1051 = vpop.f32.mrb[0].mxu0
  %v1052 = vadd.f32 %v971, %v1051
  %v1053 = vpop.f32.mrb[0].mxu0
  %1054 = vdwg.mxu0
  %s1055 = scalar_lea.vmem %s4, 32
  %v1056 = vld [vmem:[%s1055] sm:$0xff]
  %v1057 = vld [vmem:[%s1055 + $0x8] sm:$0xff]
  %v1059 = vsel %vm70, %v1056, 0
  %v1062 = vsel %vm70, %v1057, 0
  %1064 = vmatprep.subr.mxu0 0.0
  %1065 = vmatpush1.msra.mxu0 %v705
  %1066 = vmatprep.subr.mxu0 0.0
  %1067 = vmatpush1.msra.mxu0 %v706
  %1068 = vmatprep.subr.mxu0 0.0
  %1069 = vmatpush1.msra.mxu0 %v707
  %1070 = vmatprep.subr.mxu0 0.0
  %1071 = vmatpush1.msra.mxu0 %v708
  %1072 = vmatprep.subr.mxu0 0.0
  %1073 = vmatpush1.msra.mxu0 0.0
  %1074 = vmatprep.subr.mxu0 0.0
  %1075 = vmatpush1.msra.mxu0 0.0
  %1076 = vmatprep.subr.mxu0 0.0
  %1077 = vmatpush1.msra.mxu0 0.0
  %1078 = vmatprep.subr.mxu0 0.0
  %1079 = vmatpush1.msra.mxu0 0.0
  %1080 = vmatprep.subr.mxu0 0.0
  %1081 = vmatpush1.msra.mxu0 0.0
  %1082 = vmatprep.subr.mxu0 0.0
  %1083 = vmatpush1.msra.mxu0 0.0
  %1084 = vmatprep.subr.mxu0 0.0
  %1085 = vmatpush1.msra.mxu0 0.0
  %1086 = vmatprep.subr.mxu0 0.0
  %1087 = vmatpush1.msra.mxu0 0.0
  %1088 = vmatprep.subr.mxu0 0.0
  %1089 = vmatpush1.msra.mxu0 0.0
  %1090 = vmatprep.subr.mxu0 0.0
  %1091 = vmatpush1.msra.mxu0 0.0
  %1092 = vmatprep.subr.mxu0 0.0
  %1093 = vmatpush1.msra.mxu0 0.0
  %1094 = vmatprep.subr.mxu0 0.0
  %1095 = vmatpush1.msra.mxu0 0.0
  %1096 = vmatprep.subr.mxu0 0.0
  %1097 = vmatpush1.msra.mxu0 0.0
  %1098 = vmatprep.subr.mxu0 0.0
  %1099 = vmatpush1.msra.mxu0 0.0
  %1100 = vmatprep.subr.mxu0 0.0
  %1101 = vmatpush1.msra.mxu0 0.0
  %1102 = vmatprep.subr.mxu0 0.0
  %1103 = vmatpush1.msra.mxu0 0.0
  %1104 = vmatprep.subr.mxu0 0.0
  %1105 = vmatpush1.msra.mxu0 0.0
  %1106 = vmatprep.subr.mxu0 0.0
  %1107 = vmatpush1.msra.mxu0 0.0
  %1108 = vmatprep.subr.mxu0 0.0
  %1109 = vmatpush1.msra.mxu0 0.0
  %1110 = vmatprep.subr.mxu0 0.0
  %1111 = vmatpush1.msra.mxu0 0.0
  %1112 = vmatprep.subr.mxu0 0.0
  %1113 = vmatpush1.msra.mxu0 0.0
  %1114 = vmatprep.subr.mxu0 0.0
  %1115 = vmatpush1.msra.mxu0 0.0
  %1116 = vmatprep.subr.mxu0 0.0
  %1117 = vmatpush1.msra.mxu0 0.0
  %1118 = vmatprep.subr.mxu0 0.0
  %1119 = vmatpush1.msra.mxu0 0.0
  %1120 = vmatprep.subr.mxu0 0.0
  %1121 = vmatpush1.msra.mxu0 0.0
  %1122 = vmatprep.subr.mxu0 0.0
  %1123 = vmatpush1.msra.mxu0 0.0
  %1124 = vmatprep.subr.mxu0 0.0
  %1125 = vmatpush1.msra.mxu0 0.0
  %1126 = vmatprep.subr.mxu0 0.0
  %1127 = vmatpush1.msra.mxu0 0.0
  %1128 = vmatprep.mubr.f32.mxu0 0.0
  %1129 = vmatmul.mubr.f32.gmra.mrb[0].mxu0 %v1059
  %v1130 = vpop.f32.mrb[0].mxu0
  %v1131 = vadd.f32 0.0, %v1130
  %v1132 = vpop.f32.mrb[0].mxu0
  %1133 = vmatprep.mubr.f32.mxu0 0.0
  %1134 = vmatmul.mubr.f32.gmra.mrb[0].mxu0 %v1062
  %v1135 = vpop.f32.mrb[0].mxu0
  %v1136 = vadd.f32 0.0, %v1135
  %v1137 = vpop.f32.mrb[0].mxu0
  %1138 = vdwg.mxu0
  %s1139 = scalar_lea.vmem %s5, 128
  %v1140 = vld [vmem:[%s1139] sm:$0xff]
  %v1141 = vld [vmem:[%s1139 + $0x8] sm:$0xff]
  %v1142 = vld [vmem:[%s1139 + $0x10] sm:$0xff]
  %v1143 = vld [vmem:[%s1139 + $0x18] sm:$0xff]
  %v1144 = vld [vmem:[%s1139 + $0x20] sm:$0xff]
  %v1145 = vld [vmem:[%s1139 + $0x28] sm:$0xff]
  %v1146 = vld [vmem:[%s1139 + $0x30] sm:$0xff]
  %v1147 = vld [vmem:[%s1139 + $0x38] sm:$0xff]
  %v1149 = vsel %vm287, %v1131, 0
  %v1152 = vsel %vm287, %v1136, 0
  %1154 = vmatprep.subr.mxu0 0.0
  %1155 = vmatpush1.msra.mxu0 %v1140
  %1156 = vmatprep.subr.mxu0 0.0
  %1157 = vmatpush1.msra.mxu0 %v1141
  %1158 = vmatprep.subr.mxu0 0.0
  %1159 = vmatpush1.msra.mxu0 %v1142
  %1160 = vmatprep.subr.mxu0 0.0
  %1161 = vmatpush1.msra.mxu0 %v1143
  %1162 = vmatprep.subr.mxu0 0.0
  %1163 = vmatpush1.msra.mxu0 %v1144
  %1164 = vmatprep.subr.mxu0 0.0
  %1165 = vmatpush1.msra.mxu0 %v1145
  %1166 = vmatprep.subr.mxu0 0.0
  %1167 = vmatpush1.msra.mxu0 %v1146
  %1168 = vmatprep.subr.mxu0 0.0
  %1169 = vmatpush1.msra.mxu0 %v1147
  %1170 = vmatprep.subr.mxu0 0.0
  %1171 = vmatpush1.msra.mxu0 0.0
  %1172 = vmatprep.subr.mxu0 0.0
  %1173 = vmatpush1.msra.mxu0 0.0
  %1174 = vmatprep.subr.mxu0 0.0
  %1175 = vmatpush1.msra.mxu0 0.0
  %1176 = vmatprep.subr.mxu0 0.0
  %1177 = vmatpush1.msra.mxu0 0.0
  %1178 = vmatprep.subr.mxu0 0.0
  %1179 = vmatpush1.msra.mxu0 0.0
  %1180 = vmatprep.subr.mxu0 0.0
  %1181 = vmatpush1.msra.mxu0 0.0
  %1182 = vmatprep.subr.mxu0 0.0
  %1183 = vmatpush1.msra.mxu0 0.0
  %1184 = vmatprep.subr.mxu0 0.0
  %1185 = vmatpush1.msra.mxu0 0.0
  %1186 = vmatprep.subr.mxu0 0.0
  %1187 = vmatpush1.msra.mxu0 0.0
  %1188 = vmatprep.subr.mxu0 0.0
  %1189 = vmatpush1.msra.mxu0 0.0
  %1190 = vmatprep.subr.mxu0 0.0
  %1191 = vmatpush1.msra.mxu0 0.0
  %1192 = vmatprep.subr.mxu0 0.0
  %1193 = vmatpush1.msra.mxu0 0.0
  %1194 = vmatprep.subr.mxu0 0.0
  %1195 = vmatpush1.msra.mxu0 0.0
  %1196 = vmatprep.subr.mxu0 0.0
  %1197 = vmatpush1.msra.mxu0 0.0
  %1198 = vmatprep.subr.mxu0 0.0
  %1199 = vmatpush1.msra.mxu0 0.0
  %1200 = vmatprep.subr.mxu0 0.0
  %1201 = vmatpush1.msra.mxu0 0.0
  %1202 = vmatprep.subr.mxu0 0.0
  %1203 = vmatpush1.msra.mxu0 0.0
  %1204 = vmatprep.subr.mxu0 0.0
  %1205 = vmatpush1.msra.mxu0 0.0
  %1206 = vmatprep.subr.mxu0 0.0
  %1207 = vmatpush1.msra.mxu0 0.0
  %1208 = vmatprep.subr.mxu0 0.0
  %1209 = vmatpush1.msra.mxu0 0.0
  %1210 = vmatprep.subr.mxu0 0.0
  %1211 = vmatpush1.msra.mxu0 0.0
  %1212 = vmatprep.subr.mxu0 0.0
  %1213 = vmatpush1.msra.mxu0 0.0
  %1214 = vmatprep.subr.mxu0 0.0
  %1215 = vmatpush1.msra.mxu0 0.0
  %1216 = vmatprep.subr.mxu0 0.0
  %1217 = vmatpush1.msra.mxu0 0.0
  %1218 = vmatprep.mubr.f32.mxu0 0.0
  %1219 = vmatmul.mubr.f32.gmra.mrb[0].mxu0 %v1149
  %v1220 = vpop.f32.mrb[0].mxu0
  %v1221 = vadd.f32 0.0, %v1220
  %v1222 = vpop.f32.mrb[0].mxu0
  %1223 = vmatprep.mubr.f32.mxu0 0.0
  %1224 = vmatmul.mubr.f32.gmra.mrb[0].mxu0 %v1152
  %v1225 = vpop.f32.mrb[0].mxu0
  %v1226 = vadd.f32 0.0, %v1225
  %v1227 = vpop.f32.mrb[0].mxu0
  %1228 = vdwg.mxu0
  %v1229 = vadd.f32 %v1047, %v1221
  %v1230 = vadd.f32 %v1052, %v1226
  %s1231 = scalar_lea.vmem %s4, 48
  %v1232 = vld [vmem:[%s1231] sm:$0xff]
  %v1233 = vld [vmem:[%s1231 + $0x8] sm:$0xff]
  %v1235 = vsel %vm70, %v1232, 0
  %v1238 = vsel %vm70, %v1233, 0
  %1240 = vmatprep.subr.mxu0 0.0
  %1241 = vmatpush1.msra.mxu0 %v705
  %1242 = vmatprep.subr.mxu0 0.0
  %1243 = vmatpush1.msra.mxu0 %v706
  %1244 = vmatprep.subr.mxu0 0.0
  %1245 = vmatpush1.msra.mxu0 %v707
  %1246 = vmatprep.subr.mxu0 0.0
  %1247 = vmatpush1.msra.mxu0 %v708
  %1248 = vmatprep.subr.mxu0 0.0
  %1249 = vmatpush1.msra.mxu0 0.0
  %1250 = vmatprep.subr.mxu0 0.0
  %1251 = vmatpush1.msra.mxu0 0.0
  %1252 = vmatprep.subr.mxu0 0.0
  %1253 = vmatpush1.msra.mxu0 0.0
  %1254 = vmatprep.subr.mxu0 0.0
  %1255 = vmatpush1.msra.mxu0 0.0
  %1256 = vmatprep.subr.mxu0 0.0
  %1257 = vmatpush1.msra.mxu0 0.0
  %1258 = vmatprep.subr.mxu0 0.0
  %1259 = vmatpush1.msra.mxu0 0.0
  %1260 = vmatprep.subr.mxu0 0.0
  %1261 = vmatpush1.msra.mxu0 0.0
  %1262 = vmatprep.subr.mxu0 0.0
  %1263 = vmatpush1.msra.mxu0 0.0
  %1264 = vmatprep.subr.mxu0 0.0
  %1265 = vmatpush1.msra.mxu0 0.0
  %1266 = vmatprep.subr.mxu0 0.0
  %1267 = vmatpush1.msra.mxu0 0.0
  %1268 = vmatprep.subr.mxu0 0.0
  %1269 = vmatpush1.msra.mxu0 0.0
  %1270 = vmatprep.subr.mxu0 0.0
  %1271 = vmatpush1.msra.mxu0 0.0
  %1272 = vmatprep.subr.mxu0 0.0
  %1273 = vmatpush1.msra.mxu0 0.0
  %1274 = vmatprep.subr.mxu0 0.0
  %1275 = vmatpush1.msra.mxu0 0.0
  %1276 = vmatprep.subr.mxu0 0.0
  %1277 = vmatpush1.msra.mxu0 0.0
  %1278 = vmatprep.subr.mxu0 0.0
  %1279 = vmatpush1.msra.mxu0 0.0
  %1280 = vmatprep.subr.mxu0 0.0
  %1281 = vmatpush1.msra.mxu0 0.0
  %1282 = vmatprep.subr.mxu0 0.0
  %1283 = vmatpush1.msra.mxu0 0.0
  %1284 = vmatprep.subr.mxu0 0.0
  %1285 = vmatpush1.msra.mxu0 0.0
  %1286 = vmatprep.subr.mxu0 0.0
  %1287 = vmatpush1.msra.mxu0 0.0
  %1288 = vmatprep.subr.mxu0 0.0
  %1289 = vmatpush1.msra.mxu0 0.0
  %1290 = vmatprep.subr.mxu0 0.0
  %1291 = vmatpush1.msra.mxu0 0.0
  %1292 = vmatprep.subr.mxu0 0.0
  %1293 = vmatpush1.msra.mxu0 0.0
  %1294 = vmatprep.subr.mxu0 0.0
  %1295 = vmatpush1.msra.mxu0 0.0
  %1296 = vmatprep.subr.mxu0 0.0
  %1297 = vmatpush1.msra.mxu0 0.0
  %1298 = vmatprep.subr.mxu0 0.0
  %1299 = vmatpush1.msra.mxu0 0.0
  %1300 = vmatprep.subr.mxu0 0.0
  %1301 = vmatpush1.msra.mxu0 0.0
  %1302 = vmatprep.subr.mxu0 0.0
  %1303 = vmatpush1.msra.mxu0 0.0
  %1304 = vmatprep.mubr.f32.mxu0 0.0
  %1305 = vmatmul.mubr.f32.gmra.mrb[0].mxu0 %v1235
  %v1306 = vpop.f32.mrb[0].mxu0
  %v1307 = vadd.f32 0.0, %v1306
  %v1308 = vpop.f32.mrb[0].mxu0
  %1309 = vmatprep.mubr.f32.mxu0 0.0
  %1310 = vmatmul.mubr.f32.gmra.mrb[0].mxu0 %v1238
  %v1311 = vpop.f32.mrb[0].mxu0
  %v1312 = vadd.f32 0.0, %v1311
  %v1313 = vpop.f32.mrb[0].mxu0
  %1314 = vdwg.mxu0
  %s1315 = scalar_lea.vmem %s5, 192
  %v1316 = vld [vmem:[%s1315] sm:$0xff]
  %v1317 = vld [vmem:[%s1315 + $0x8] sm:$0xff]
  %v1318 = vld [vmem:[%s1315 + $0x10] sm:$0xff]
  %v1319 = vld [vmem:[%s1315 + $0x18] sm:$0xff]
  %v1320 = vld [vmem:[%s1315 + $0x20] sm:$0xff]
  %v1321 = vld [vmem:[%s1315 + $0x28] sm:$0xff]
  %v1322 = vld [vmem:[%s1315 + $0x30] sm:$0xff]
  %v1323 = vld [vmem:[%s1315 + $0x38] sm:$0xff]
  %v1325 = vsel %vm287, %v1307, 0
  %v1328 = vsel %vm287, %v1312, 0
  %1330 = vmatprep.subr.mxu0 0.0
  %1331 = vmatpush1.msra.mxu0 %v1316
  %1332 = vmatprep.subr.mxu0 0.0
  %1333 = vmatpush1.msra.mxu0 %v1317
  %1334 = vmatprep.subr.mxu0 0.0
  %1335 = vmatpush1.msra.mxu0 %v1318
  %1336 = vmatprep.subr.mxu0 0.0
  %1337 = vmatpush1.msra.mxu0 %v1319
  %1338 = vmatprep.subr.mxu0 0.0
  %1339 = vmatpush1.msra.mxu0 %v1320
  %1340 = vmatprep.subr.mxu0 0.0
  %1341 = vmatpush1.msra.mxu0 %v1321
  %1342 = vmatprep.subr.mxu0 0.0
  %1343 = vmatpush1.msra.mxu0 %v1322
  %1344 = vmatprep.subr.mxu0 0.0
  %1345 = vmatpush1.msra.mxu0 %v1323
  %1346 = vmatprep.subr.mxu0 0.0
  %1347 = vmatpush1.msra.mxu0 0.0
  %1348 = vmatprep.subr.mxu0 0.0
  %1349 = vmatpush1.msra.mxu0 0.0
  %1350 = vmatprep.subr.mxu0 0.0
  %1351 = vmatpush1.msra.mxu0 0.0
  %1352 = vmatprep.subr.mxu0 0.0
  %1353 = vmatpush1.msra.mxu0 0.0
  %1354 = vmatprep.subr.mxu0 0.0
  %1355 = vmatpush1.msra.mxu0 0.0
  %1356 = vmatprep.subr.mxu0 0.0
  %1357 = vmatpush1.msra.mxu0 0.0
  %1358 = vmatprep.subr.mxu0 0.0
  %1359 = vmatpush1.msra.mxu0 0.0
  %1360 = vmatprep.subr.mxu0 0.0
  %1361 = vmatpush1.msra.mxu0 0.0
  %1362 = vmatprep.subr.mxu0 0.0
  %1363 = vmatpush1.msra.mxu0 0.0
  %1364 = vmatprep.subr.mxu0 0.0
  %1365 = vmatpush1.msra.mxu0 0.0
  %1366 = vmatprep.subr.mxu0 0.0
  %1367 = vmatpush1.msra.mxu0 0.0
  %1368 = vmatprep.subr.mxu0 0.0
  %1369 = vmatpush1.msra.mxu0 0.0
  %1370 = vmatprep.subr.mxu0 0.0
  %1371 = vmatpush1.msra.mxu0 0.0
  %1372 = vmatprep.subr.mxu0 0.0
  %1373 = vmatpush1.msra.mxu0 0.0
  %1374 = vmatprep.subr.mxu0 0.0
  %1375 = vmatpush1.msra.mxu0 0.0
  %1376 = vmatprep.subr.mxu0 0.0
  %1377 = vmatpush1.msra.mxu0 0.0
  %1378 = vmatprep.subr.mxu0 0.0
  %1379 = vmatpush1.msra.mxu0 0.0
  %1380 = vmatprep.subr.mxu0 0.0
  %1381 = vmatpush1.msra.mxu0 0.0
  %1382 = vmatprep.subr.mxu0 0.0
  %1383 = vmatpush1.msra.mxu0 0.0
  %1384 = vmatprep.subr.mxu0 0.0
  %1385 = vmatpush1.msra.mxu0 0.0
  %1386 = vmatprep.subr.mxu0 0.0
  %1387 = vmatpush1.msra.mxu0 0.0
  %1388 = vmatprep.subr.mxu0 0.0
  %1389 = vmatpush1.msra.mxu0 0.0
  %1390 = vmatprep.subr.mxu0 0.0
  %1391 = vmatpush1.msra.mxu0 0.0
  %1392 = vmatprep.subr.mxu0 0.0
  %1393 = vmatpush1.msra.mxu0 0.0
  %1394 = vmatprep.mubr.f32.mxu0 0.0
  %1395 = vmatmul.mubr.f32.gmra.mrb[0].mxu0 %v1325
  %v1396 = vpop.f32.mrb[0].mxu0
  %v1397 = vadd.f32 0.0, %v1396
  %v1398 = vpop.f32.mrb[0].mxu0
  %1399 = vmatprep.mubr.f32.mxu0 0.0
  %1400 = vmatmul.mubr.f32.gmra.mrb[0].mxu0 %v1328
  %v1401 = vpop.f32.mrb[0].mxu0
  %v1402 = vadd.f32 0.0, %v1401
  %v1403 = vpop.f32.mrb[0].mxu0
  %1404 = vdwg.mxu0
  %v1405 = vadd.f32 %v1229, %v1397
  %v1406 = vadd.f32 %v1230, %v1402
  %v1407 = vld [vmem:[%s6] sm:$0x1]
  %v1409 = vlaneseq
  %v1410 = vshrl.u32 %v1409, 7
  %v1411 = vsub.s32 0, %v1410
  %v1412 = vrot.slane %v1407, %v1411
  %v1414 = vadd.f32 %v1405, %v1412
  %v1415 = vadd.f32 %v1406, %v1412
  %v1416 = vmax.f32 %v1414, 0.0
  %v1417 = vmax.f32 %v1415, 0.0
  %v1418 = vld [vmem:[%s7] sm:$0xff]
  %v1419 = vld [vmem:[%s7 + $0x8] sm:$0xff]
  %vm1420 = vcmask 130048
  %v1422 = vsel %vm1420, %v1418, 0
  %v1425 = vsel %vm1420, %v1419, 0
  %1427 = vmatprep.subr.mxu0 0.0
  %1428 = vmatpush1.msra.mxu0 %v1416
  %1429 = vmatprep.subr.mxu0 0.0
  %1430 = vmatpush1.msra.mxu0 %v1417
  %1431 = vmatprep.subr.mxu0 0.0
  %1432 = vmatpush1.msra.mxu0 0.0
  %1433 = vmatprep.subr.mxu0 0.0
  %1434 = vmatpush1.msra.mxu0 0.0
  %1435 = vmatprep.subr.mxu0 0.0
  %1436 = vmatpush1.msra.mxu0 0.0
  %1437 = vmatprep.subr.mxu0 0.0
  %1438 = vmatpush1.msra.mxu0 0.0
  %1439 = vmatprep.subr.mxu0 0.0
  %1440 = vmatpush1.msra.mxu0 0.0
  %1441 = vmatprep.subr.mxu0 0.0
  %1442 = vmatpush1.msra.mxu0 0.0
  %1443 = vmatprep.subr.mxu0 0.0
  %1444 = vmatpush1.msra.mxu0 0.0
  %1445 = vmatprep.subr.mxu0 0.0
  %1446 = vmatpush1.msra.mxu0 0.0
  %1447 = vmatprep.subr.mxu0 0.0
  %1448 = vmatpush1.msra.mxu0 0.0
  %1449 = vmatprep.subr.mxu0 0.0
  %1450 = vmatpush1.msra.mxu0 0.0
  %1451 = vmatprep.subr.mxu0 0.0
  %1452 = vmatpush1.msra.mxu0 0.0
  %1453 = vmatprep.subr.mxu0 0.0
  %1454 = vmatpush1.msra.mxu0 0.0
  %1455 = vmatprep.subr.mxu0 0.0
  %1456 = vmatpush1.msra.mxu0 0.0
  %1457 = vmatprep.subr.mxu0 0.0
  %1458 = vmatpush1.msra.mxu0 0.0
  %1459 = vmatprep.subr.mxu0 0.0
  %1460 = vmatpush1.msra.mxu0 0.0
  %1461 = vmatprep.subr.mxu0 0.0
  %1462 = vmatpush1.msra.mxu0 0.0
  %1463 = vmatprep.subr.mxu0 0.0
  %1464 = vmatpush1.msra.mxu0 0.0
  %1465 = vmatprep.subr.mxu0 0.0
  %1466 = vmatpush1.msra.mxu0 0.0
  %1467 = vmatprep.subr.mxu0 0.0
  %1468 = vmatpush1.msra.mxu0 0.0
  %1469 = vmatprep.subr.mxu0 0.0
  %1470 = vmatpush1.msra.mxu0 0.0
  %1471 = vmatprep.subr.mxu0 0.0
  %1472 = vmatpush1.msra.mxu0 0.0
  %1473 = vmatprep.subr.mxu0 0.0
  %1474 = vmatpush1.msra.mxu0 0.0
  %1475 = vmatprep.subr.mxu0 0.0
  %1476 = vmatpush1.msra.mxu0 0.0
  %1477 = vmatprep.subr.mxu0 0.0
  %1478 = vmatpush1.msra.mxu0 0.0
  %1479 = vmatprep.subr.mxu0 0.0
  %1480 = vmatpush1.msra.mxu0 0.0
  %1481 = vmatprep.subr.mxu0 0.0
  %1482 = vmatpush1.msra.mxu0 0.0
  %1483 = vmatprep.subr.mxu0 0.0
  %1484 = vmatpush1.msra.mxu0 0.0
  %1485 = vmatprep.subr.mxu0 0.0
  %1486 = vmatpush1.msra.mxu0 0.0
  %1487 = vmatprep.subr.mxu0 0.0
  %1488 = vmatpush1.msra.mxu0 0.0
  %1489 = vmatprep.subr.mxu0 0.0
  %1490 = vmatpush1.msra.mxu0 0.0
  %1491 = vmatprep.mubr.f32.mxu0 0.0
  %1492 = vmatmul.mubr.f32.gmra.mrb[0].mxu0 %v1422
  %v1493 = vpop.f32.mrb[0].mxu0
  %v1494 = vadd.f32 0.0, %v1493
  %v1495 = vpop.f32.mrb[0].mxu0
  %1496 = vmatprep.mubr.f32.mxu0 0.0
  %1497 = vmatmul.mubr.f32.gmra.mrb[0].mxu0 %v1425
  %v1498 = vpop.f32.mrb[0].mxu0
  %v1499 = vadd.f32 0.0, %v1498
  %v1500 = vpop.f32.mrb[0].mxu0
  %1501 = vdwg.mxu0
  %v1502 = vld [vmem:[%s8] sm:$0xff]
  %v1503 = vld [vmem:[%s8 + $0x8] sm:$0xff]
  %v1504 = vld [vmem:[%s8 + $0x10] sm:$0xff]
  %v1505 = vld [vmem:[%s8 + $0x18] sm:$0xff]
  %s1506 = scalar_lea.vmem %s7, 16
  %v1507 = vld [vmem:[%s1506] sm:$0xff]
  %v1508 = vld [vmem:[%s1506 + $0x8] sm:$0xff]
  %v1510 = vsel %vm1420, %v1507, 0
  %v1513 = vsel %vm1420, %v1508, 0
  %1515 = vmatprep.subr.mxu0 0.0
  %1516 = vmatpush1.msra.mxu0 %v1416
  %1517 = vmatprep.subr.mxu0 0.0
  %1518 = vmatpush1.msra.mxu0 %v1417
  %1519 = vmatprep.subr.mxu0 0.0
  %1520 = vmatpush1.msra.mxu0 0.0
  %1521 = vmatprep.subr.mxu0 0.0
  %1522 = vmatpush1.msra.mxu0 0.0
  %1523 = vmatprep.subr.mxu0 0.0
  %1524 = vmatpush1.msra.mxu0 0.0
  %1525 = vmatprep.subr.mxu0 0.0
  %1526 = vmatpush1.msra.mxu0 0.0
  %1527 = vmatprep.subr.mxu0 0.0
  %1528 = vmatpush1.msra.mxu0 0.0
  %1529 = vmatprep.subr.mxu0 0.0
  %1530 = vmatpush1.msra.mxu0 0.0
  %1531 = vmatprep.subr.mxu0 0.0
  %1532 = vmatpush1.msra.mxu0 0.0
  %1533 = vmatprep.subr.mxu0 0.0
  %1534 = vmatpush1.msra.mxu0 0.0
  %1535 = vmatprep.subr.mxu0 0.0
  %1536 = vmatpush1.msra.mxu0 0.0
  %1537 = vmatprep.subr.mxu0 0.0
  %1538 = vmatpush1.msra.mxu0 0.0
  %1539 = vmatprep.subr.mxu0 0.0
  %1540 = vmatpush1.msra.mxu0 0.0
  %1541 = vmatprep.subr.mxu0 0.0
  %1542 = vmatpush1.msra.mxu0 0.0
  %1543 = vmatprep.subr.mxu0 0.0
  %1544 = vmatpush1.msra.mxu0 0.0
  %1545 = vmatprep.subr.mxu0 0.0
  %1546 = vmatpush1.msra.mxu0 0.0
  %1547 = vmatprep.subr.mxu0 0.0
  %1548 = vmatpush1.msra.mxu0 0.0
  %1549 = vmatprep.subr.mxu0 0.0
  %1550 = vmatpush1.msra.mxu0 0.0
  %1551 = vmatprep.subr.mxu0 0.0
  %1552 = vmatpush1.msra.mxu0 0.0
  %1553 = vmatprep.subr.mxu0 0.0
  %1554 = vmatpush1.msra.mxu0 0.0
  %1555 = vmatprep.subr.mxu0 0.0
  %1556 = vmatpush1.msra.mxu0 0.0
  %1557 = vmatprep.subr.mxu0 0.0
  %1558 = vmatpush1.msra.mxu0 0.0
  %1559 = vmatprep.subr.mxu0 0.0
  %1560 = vmatpush1.msra.mxu0 0.0
  %1561 = vmatprep.subr.mxu0 0.0
  %1562 = vmatpush1.msra.mxu0 0.0
  %1563 = vmatprep.subr.mxu0 0.0
  %1564 = vmatpush1.msra.mxu0 0.0
  %1565 = vmatprep.subr.mxu0 0.0
  %1566 = vmatpush1.msra.mxu0 0.0
  %1567 = vmatprep.subr.mxu0 0.0
  %1568 = vmatpush1.msra.mxu0 0.0
  %1569 = vmatprep.subr.mxu0 0.0
  %1570 = vmatpush1.msra.mxu0 0.0
  %1571 = vmatprep.subr.mxu0 0.0
  %1572 = vmatpush1.msra.mxu0 0.0
  %1573 = vmatprep.subr.mxu0 0.0
  %1574 = vmatpush1.msra.mxu0 0.0
  %1575 = vmatprep.subr.mxu0 0.0
  %1576 = vmatpush1.msra.mxu0 0.0
  %1577 = vmatprep.subr.mxu0 0.0
  %1578 = vmatpush1.msra.mxu0 0.0
  %1579 = vmatprep.mubr.f32.mxu0 0.0
  %1580 = vmatmul.mubr.f32.gmra.mrb[0].mxu0 %v1510
  %v1581 = vpop.f32.mrb[0].mxu0
  %v1582 = vadd.f32 0.0, %v1581
  %v1583 = vpop.f32.mrb[0].mxu0
  %1584 = vmatprep.mubr.f32.mxu0 0.0
  %1585 = vmatmul.mubr.f32.gmra.mrb[0].mxu0 %v1513
  %v1586 = vpop.f32.mrb[0].mxu0
  %v1587 = vadd.f32 0.0, %v1586
  %v1588 = vpop.f32.mrb[0].mxu0
  %1589 = vdwg.mxu0
  %s1590 = scalar_lea.vmem %s8, 32
  %v1591 = vld [vmem:[%s1590] sm:$0xff]
  %v1592 = vld [vmem:[%s1590 + $0x8] sm:$0xff]
  %v1593 = vld [vmem:[%s1590 + $0x10] sm:$0xff]
  %v1594 = vld [vmem:[%s1590 + $0x18] sm:$0xff]
  %v1596 = vsel %vm70, %v1582, 0
  %v1599 = vsel %vm70, %v1587, 0
  %1601 = vmatprep.subr.mxu0 0.0
  %1602 = vmatpush1.msra.mxu0 %v1591
  %1603 = vmatprep.subr.mxu0 0.0
  %1604 = vmatpush1.msra.mxu0 %v1592
  %1605 = vmatprep.subr.mxu0 0.0
  %1606 = vmatpush1.msra.mxu0 %v1593
  %1607 = vmatprep.subr.mxu0 0.0
  %1608 = vmatpush1.msra.mxu0 %v1594
  %1609 = vmatprep.subr.mxu0 0.0
  %1610 = vmatpush1.msra.mxu0 0.0
  %1611 = vmatprep.subr.mxu0 0.0
  %1612 = vmatpush1.msra.mxu0 0.0
  %1613 = vmatprep.subr.mxu0 0.0
  %1614 = vmatpush1.msra.mxu0 0.0
  %1615 = vmatprep.subr.mxu0 0.0
  %1616 = vmatpush1.msra.mxu0 0.0
  %1617 = vmatprep.subr.mxu0 0.0
  %1618 = vmatpush1.msra.mxu0 0.0
  %1619 = vmatprep.subr.mxu0 0.0
  %1620 = vmatpush1.msra.mxu0 0.0
  %1621 = vmatprep.subr.mxu0 0.0
  %1622 = vmatpush1.msra.mxu0 0.0
  %1623 = vmatprep.subr.mxu0 0.0
  %1624 = vmatpush1.msra.mxu0 0.0
  %1625 = vmatprep.subr.mxu0 0.0
  %1626 = vmatpush1.msra.mxu0 0.0
  %1627 = vmatprep.subr.mxu0 0.0
  %1628 = vmatpush1.msra.mxu0 0.0
  %1629 = vmatprep.subr.mxu0 0.0
  %1630 = vmatpush1.msra.mxu0 0.0
  %1631 = vmatprep.subr.mxu0 0.0
  %1632 = vmatpush1.msra.mxu0 0.0
  %1633 = vmatprep.subr.mxu0 0.0
  %1634 = vmatpush1.msra.mxu0 0.0
  %1635 = vmatprep.subr.mxu0 0.0
  %1636 = vmatpush1.msra.mxu0 0.0
  %1637 = vmatprep.subr.mxu0 0.0
  %1638 = vmatpush1.msra.mxu0 0.0
  %1639 = vmatprep.subr.mxu0 0.0
  %1640 = vmatpush1.msra.mxu0 0.0
  %1641 = vmatprep.subr.mxu0 0.0
  %1642 = vmatpush1.msra.mxu0 0.0
  %1643 = vmatprep.subr.mxu0 0.0
  %1644 = vmatpush1.msra.mxu0 0.0
  %1645 = vmatprep.subr.mxu0 0.0
  %1646 = vmatpush1.msra.mxu0 0.0
  %1647 = vmatprep.subr.mxu0 0.0
  %1648 = vmatpush1.msra.mxu0 0.0
  %1649 = vmatprep.subr.mxu0 0.0
  %1650 = vmatpush1.msra.mxu0 0.0
  %1651 = vmatprep.subr.mxu0 0.0
  %1652 = vmatpush1.msra.mxu0 0.0
  %1653 = vmatprep.subr.mxu0 0.0
  %1654 = vmatpush1.msra.mxu0 0.0
  %1655 = vmatprep.subr.mxu0 0.0
  %1656 = vmatpush1.msra.mxu0 0.0
  %1657 = vmatprep.subr.mxu0 0.0
  %1658 = vmatpush1.msra.mxu0 0.0
  %1659 = vmatprep.subr.mxu0 0.0
  %1660 = vmatpush1.msra.mxu0 0.0
  %1661 = vmatprep.subr.mxu0 0.0
  %1662 = vmatpush1.msra.mxu0 0.0
  %1663 = vmatprep.subr.mxu0 0.0
  %1664 = vmatpush1.msra.mxu0 0.0
  %1665 = vmatprep.mubr.f32.mxu0 0.0
  %1666 = vmatmul.mubr.f32.gmra.mrb[0].mxu0 %v1596
  %v1667 = vpop.f32.mrb[0].mxu0
  %v1668 = vadd.f32 0.0, %v1667
  %v1669 = vpop.f32.mrb[0].mxu0
  %1670 = vmatprep.mubr.f32.mxu0 0.0
  %1671 = vmatmul.mubr.f32.gmra.mrb[0].mxu0 %v1599
  %v1672 = vpop.f32.mrb[0].mxu0
  %v1673 = vadd.f32 0.0, %v1672
  %v1674 = vpop.f32.mrb[0].mxu0
  %1675 = vdwg.mxu0
  %v1677 = vsel %vm70, %v1494, 0
  %v1680 = vsel %vm70, %v1499, 0
  %1682 = vmatprep.subr.mxu0 0.0
  %1683 = vmatpush1.msra.mxu0 %v1502
  %1684 = vmatprep.subr.mxu0 0.0
  %1685 = vmatpush1.msra.mxu0 %v1503
  %1686 = vmatprep.subr.mxu0 0.0
  %1687 = vmatpush1.msra.mxu0 %v1504
  %1688 = vmatprep.subr.mxu0 0.0
  %1689 = vmatpush1.msra.mxu0 %v1505
  %1690 = vmatprep.subr.mxu0 0.0
  %1691 = vmatpush1.msra.mxu0 0.0
  %1692 = vmatprep.subr.mxu0 0.0
  %1693 = vmatpush1.msra.mxu0 0.0
  %1694 = vmatprep.subr.mxu0 0.0
  %1695 = vmatpush1.msra.mxu0 0.0
  %1696 = vmatprep.subr.mxu0 0.0
  %1697 = vmatpush1.msra.mxu0 0.0
  %1698 = vmatprep.subr.mxu0 0.0
  %1699 = vmatpush1.msra.mxu0 0.0
  %1700 = vmatprep.subr.mxu0 0.0
  %1701 = vmatpush1.msra.mxu0 0.0
  %1702 = vmatprep.subr.mxu0 0.0
  %1703 = vmatpush1.msra.mxu0 0.0
  %1704 = vmatprep.subr.mxu0 0.0
  %1705 = vmatpush1.msra.mxu0 0.0
  %1706 = vmatprep.subr.mxu0 0.0
  %1707 = vmatpush1.msra.mxu0 0.0
  %1708 = vmatprep.subr.mxu0 0.0
  %1709 = vmatpush1.msra.mxu0 0.0
  %1710 = vmatprep.subr.mxu0 0.0
  %1711 = vmatpush1.msra.mxu0 0.0
  %1712 = vmatprep.subr.mxu0 0.0
  %1713 = vmatpush1.msra.mxu0 0.0
  %1714 = vmatprep.subr.mxu0 0.0
  %1715 = vmatpush1.msra.mxu0 0.0
  %1716 = vmatprep.subr.mxu0 0.0
  %1717 = vmatpush1.msra.mxu0 0.0
  %1718 = vmatprep.subr.mxu0 0.0
  %1719 = vmatpush1.msra.mxu0 0.0
  %1720 = vmatprep.subr.mxu0 0.0
  %1721 = vmatpush1.msra.mxu0 0.0
  %1722 = vmatprep.subr.mxu0 0.0
  %1723 = vmatpush1.msra.mxu0 0.0
  %1724 = vmatprep.subr.mxu0 0.0
  %1725 = vmatpush1.msra.mxu0 0.0
  %1726 = vmatprep.subr.mxu0 0.0
  %1727 = vmatpush1.msra.mxu0 0.0
  %1728 = vmatprep.subr.mxu0 0.0
  %1729 = vmatpush1.msra.mxu0 0.0
  %1730 = vmatprep.subr.mxu0 0.0
  %1731 = vmatpush1.msra.mxu0 0.0
  %1732 = vmatprep.subr.mxu0 0.0
  %1733 = vmatpush1.msra.mxu0 0.0
  %1734 = vmatprep.subr.mxu0 0.0
  %1735 = vmatpush1.msra.mxu0 0.0
  %1736 = vmatprep.subr.mxu0 0.0
  %1737 = vmatpush1.msra.mxu0 0.0
  %1738 = vmatprep.subr.mxu0 0.0
  %1739 = vmatpush1.msra.mxu0 0.0
  %1740 = vmatprep.subr.mxu0 0.0
  %1741 = vmatpush1.msra.mxu0 0.0
  %1742 = vmatprep.subr.mxu0 0.0
  %1743 = vmatpush1.msra.mxu0 0.0
  %1744 = vmatprep.subr.mxu0 0.0
  %1745 = vmatpush1.msra.mxu0 0.0
  %1746 = vmatprep.mubr.f32.mxu0 0.0
  %1747 = vmatmul.mubr.f32.gmra.mrb[0].mxu0 %v1677
  %v1748 = vpop.f32.mrb[0].mxu0
  %v1749 = vadd.f32 %v1668, %v1748
  %v1750 = vpop.f32.mrb[0].mxu0
  %1751 = vmatprep.mubr.f32.mxu0 0.0
  %1752 = vmatmul.mubr.f32.gmra.mrb[0].mxu0 %v1680
  %v1753 = vpop.f32.mrb[0].mxu0
  %v1754 = vadd.f32 %v1673, %v1753
  %v1755 = vpop.f32.mrb[0].mxu0
  %1756 = vdwg.mxu0
  %s1757 = scalar_lea.vmem %s7, 32
  %v1758 = vld [vmem:[%s1757] sm:$0xff]
  %v1759 = vld [vmem:[%s1757 + $0x8] sm:$0xff]
  %v1761 = vsel %vm1420, %v1758, 0
  %v1764 = vsel %vm1420, %v1759, 0
  %1766 = vmatprep.subr.mxu0 0.0
  %1767 = vmatpush1.msra.mxu0 %v1416
  %1768 = vmatprep.subr.mxu0 0.0
  %1769 = vmatpush1.msra.mxu0 %v1417
  %1770 = vmatprep.subr.mxu0 0.0
  %1771 = vmatpush1.msra.mxu0 0.0
  %1772 = vmatprep.subr.mxu0 0.0
  %1773 = vmatpush1.msra.mxu0 0.0
  %1774 = vmatprep.subr.mxu0 0.0
  %1775 = vmatpush1.msra.mxu0 0.0
  %1776 = vmatprep.subr.mxu0 0.0
  %1777 = vmatpush1.msra.mxu0 0.0
  %1778 = vmatprep.subr.mxu0 0.0
  %1779 = vmatpush1.msra.mxu0 0.0
  %1780 = vmatprep.subr.mxu0 0.0
  %1781 = vmatpush1.msra.mxu0 0.0
  %1782 = vmatprep.subr.mxu0 0.0
  %1783 = vmatpush1.msra.mxu0 0.0
  %1784 = vmatprep.subr.mxu0 0.0
  %1785 = vmatpush1.msra.mxu0 0.0
  %1786 = vmatprep.subr.mxu0 0.0
  %1787 = vmatpush1.msra.mxu0 0.0
  %1788 = vmatprep.subr.mxu0 0.0
  %1789 = vmatpush1.msra.mxu0 0.0
  %1790 = vmatprep.subr.mxu0 0.0
  %1791 = vmatpush1.msra.mxu0 0.0
  %1792 = vmatprep.subr.mxu0 0.0
  %1793 = vmatpush1.msra.mxu0 0.0
  %1794 = vmatprep.subr.mxu0 0.0
  %1795 = vmatpush1.msra.mxu0 0.0
  %1796 = vmatprep.subr.mxu0 0.0
  %1797 = vmatpush1.msra.mxu0 0.0
  %1798 = vmatprep.subr.mxu0 0.0
  %1799 = vmatpush1.msra.mxu0 0.0
  %1800 = vmatprep.subr.mxu0 0.0
  %1801 = vmatpush1.msra.mxu0 0.0
  %1802 = vmatprep.subr.mxu0 0.0
  %1803 = vmatpush1.msra.mxu0 0.0
  %1804 = vmatprep.subr.mxu0 0.0
  %1805 = vmatpush1.msra.mxu0 0.0
  %1806 = vmatprep.subr.mxu0 0.0
  %1807 = vmatpush1.msra.mxu0 0.0
  %1808 = vmatprep.subr.mxu0 0.0
  %1809 = vmatpush1.msra.mxu0 0.0
  %1810 = vmatprep.subr.mxu0 0.0
  %1811 = vmatpush1.msra.mxu0 0.0
  %1812 = vmatprep.subr.mxu0 0.0
  %1813 = vmatpush1.msra.mxu0 0.0
  %1814 = vmatprep.subr.mxu0 0.0
  %1815 = vmatpush1.msra.mxu0 0.0
  %1816 = vmatprep.subr.mxu0 0.0
  %1817 = vmatpush1.msra.mxu0 0.0
  %1818 = vmatprep.subr.mxu0 0.0
  %1819 = vmatpush1.msra.mxu0 0.0
  %1820 = vmatprep.subr.mxu0 0.0
  %1821 = vmatpush1.msra.mxu0 0.0
  %1822 = vmatprep.subr.mxu0 0.0
  %1823 = vmatpush1.msra.mxu0 0.0
  %1824 = vmatprep.subr.mxu0 0.0
  %1825 = vmatpush1.msra.mxu0 0.0
  %1826 = vmatprep.subr.mxu0 0.0
  %1827 = vmatpush1.msra.mxu0 0.0
  %1828 = vmatprep.subr.mxu0 0.0
  %1829 = vmatpush1.msra.mxu0 0.0
  %1830 = vmatprep.mubr.f32.mxu0 0.0
  %1831 = vmatmul.mubr.f32.gmra.mrb[0].mxu0 %v1761
  %v1832 = vpop.f32.mrb[0].mxu0
  %v1833 = vadd.f32 0.0, %v1832
  %v1834 = vpop.f32.mrb[0].mxu0
  %1835 = vmatprep.mubr.f32.mxu0 0.0
  %1836 = vmatmul.mubr.f32.gmra.mrb[0].mxu0 %v1764
  %v1837 = vpop.f32.mrb[0].mxu0
  %v1838 = vadd.f32 0.0, %v1837
  %v1839 = vpop.f32.mrb[0].mxu0
  %1840 = vdwg.mxu0
  %s1841 = scalar_lea.vmem %s8, 64
  %v1842 = vld [vmem:[%s1841] sm:$0xff]
  %v1843 = vld [vmem:[%s1841 + $0x8] sm:$0xff]
  %v1844 = vld [vmem:[%s1841 + $0x10] sm:$0xff]
  %v1845 = vld [vmem:[%s1841 + $0x18] sm:$0xff]
  %v1847 = vsel %vm70, %v1833, 0
  %v1850 = vsel %vm70, %v1838, 0
  %1852 = vmatprep.subr.mxu0 0.0
  %1853 = vmatpush1.msra.mxu0 %v1842
  %1854 = vmatprep.subr.mxu0 0.0
  %1855 = vmatpush1.msra.mxu0 %v1843
  %1856 = vmatprep.subr.mxu0 0.0
  %1857 = vmatpush1.msra.mxu0 %v1844
  %1858 = vmatprep.subr.mxu0 0.0
  %1859 = vmatpush1.msra.mxu0 %v1845
  %1860 = vmatprep.subr.mxu0 0.0
  %1861 = vmatpush1.msra.mxu0 0.0
  %1862 = vmatprep.subr.mxu0 0.0
  %1863 = vmatpush1.msra.mxu0 0.0
  %1864 = vmatprep.subr.mxu0 0.0
  %1865 = vmatpush1.msra.mxu0 0.0
  %1866 = vmatprep.subr.mxu0 0.0
  %1867 = vmatpush1.msra.mxu0 0.0
  %1868 = vmatprep.subr.mxu0 0.0
  %1869 = vmatpush1.msra.mxu0 0.0
  %1870 = vmatprep.subr.mxu0 0.0
  %1871 = vmatpush1.msra.mxu0 0.0
  %1872 = vmatprep.subr.mxu0 0.0
  %1873 = vmatpush1.msra.mxu0 0.0
  %1874 = vmatprep.subr.mxu0 0.0
  %1875 = vmatpush1.msra.mxu0 0.0
  %1876 = vmatprep.subr.mxu0 0.0
  %1877 = vmatpush1.msra.mxu0 0.0
  %1878 = vmatprep.subr.mxu0 0.0
  %1879 = vmatpush1.msra.mxu0 0.0
  %1880 = vmatprep.subr.mxu0 0.0
  %1881 = vmatpush1.msra.mxu0 0.0
  %1882 = vmatprep.subr.mxu0 0.0
  %1883 = vmatpush1.msra.mxu0 0.0
  %1884 = vmatprep.subr.mxu0 0.0
  %1885 = vmatpush1.msra.mxu0 0.0
  %1886 = vmatprep.subr.mxu0 0.0
  %1887 = vmatpush1.msra.mxu0 0.0
  %1888 = vmatprep.subr.mxu0 0.0
  %1889 = vmatpush1.msra.mxu0 0.0
  %1890 = vmatprep.subr.mxu0 0.0
  %1891 = vmatpush1.msra.mxu0 0.0
  %1892 = vmatprep.subr.mxu0 0.0
  %1893 = vmatpush1.msra.mxu0 0.0
  %1894 = vmatprep.subr.mxu0 0.0
  %1895 = vmatpush1.msra.mxu0 0.0
  %1896 = vmatprep.subr.mxu0 0.0
  %1897 = vmatpush1.msra.mxu0 0.0
  %1898 = vmatprep.subr.mxu0 0.0
  %1899 = vmatpush1.msra.mxu0 0.0
  %1900 = vmatprep.subr.mxu0 0.0
  %1901 = vmatpush1.msra.mxu0 0.0
  %1902 = vmatprep.subr.mxu0 0.0
  %1903 = vmatpush1.msra.mxu0 0.0
  %1904 = vmatprep.subr.mxu0 0.0
  %1905 = vmatpush1.msra.mxu0 0.0
  %1906 = vmatprep.subr.mxu0 0.0
  %1907 = vmatpush1.msra.mxu0 0.0
  %1908 = vmatprep.subr.mxu0 0.0
  %1909 = vmatpush1.msra.mxu0 0.0
  %1910 = vmatprep.subr.mxu0 0.0
  %1911 = vmatpush1.msra.mxu0 0.0
  %1912 = vmatprep.subr.mxu0 0.0
  %1913 = vmatpush1.msra.mxu0 0.0
  %1914 = vmatprep.subr.mxu0 0.0
  %1915 = vmatpush1.msra.mxu0 0.0
  %1916 = vmatprep.mubr.f32.mxu0 0.0
  %1917 = vmatmul.mubr.f32.gmra.mrb[0].mxu0 %v1847
  %v1918 = vpop.f32.mrb[0].mxu0
  %v1919 = vadd.f32 0.0, %v1918
  %v1920 = vpop.f32.mrb[0].mxu0
  %1921 = vmatprep.mubr.f32.mxu0 0.0
  %1922 = vmatmul.mubr.f32.gmra.mrb[0].mxu0 %v1850
  %v1923 = vpop.f32.mrb[0].mxu0
  %v1924 = vadd.f32 0.0, %v1923
  %v1925 = vpop.f32.mrb[0].mxu0
  %1926 = vdwg.mxu0
  %v1927 = vadd.f32 %v1749, %v1919
  %v1928 = vadd.f32 %v1754, %v1924
  %v1929 = vld [vmem:[%s9] sm:$0x1]
  %v1931 = vlaneseq
  %v1932 = vshrl.u32 %v1931, 7
  %v1933 = vsub.s32 0, %v1932
  %v1934 = vrot.slane %v1929, %v1933
  %v1936 = vadd.f32 %v1927, %v1934
  %v1937 = vadd.f32 %v1928, %v1934
  %v1938 = vmax.f32 %v1936, 0.0
  %v1939 = vmax.f32 %v1937, 0.0
  %v1940 = vld [vmem:[%s10] sm:$0xff]
  %v1942 = vsel %vm1420, %v1940, 0
  %1944 = vmatprep.subr.mxu0 0.0
  %1945 = vmatpush1.msra.mxu0 %v1938
  %1946 = vmatprep.subr.mxu0 0.0
  %1947 = vmatpush1.msra.mxu0 %v1939
  %1948 = vmatprep.subr.mxu0 0.0
  %1949 = vmatpush1.msra.mxu0 0.0
  %1950 = vmatprep.subr.mxu0 0.0
  %1951 = vmatpush1.msra.mxu0 0.0
  %1952 = vmatprep.subr.mxu0 0.0
  %1953 = vmatpush1.msra.mxu0 0.0
  %1954 = vmatprep.subr.mxu0 0.0
  %1955 = vmatpush1.msra.mxu0 0.0
  %1956 = vmatprep.subr.mxu0 0.0
  %1957 = vmatpush1.msra.mxu0 0.0
  %1958 = vmatprep.subr.mxu0 0.0
  %1959 = vmatpush1.msra.mxu0 0.0
  %1960 = vmatprep.subr.mxu0 0.0
  %1961 = vmatpush1.msra.mxu0 0.0
  %1962 = vmatprep.subr.mxu0 0.0
  %1963 = vmatpush1.msra.mxu0 0.0
  %1964 = vmatprep.subr.mxu0 0.0
  %1965 = vmatpush1.msra.mxu0 0.0
  %1966 = vmatprep.subr.mxu0 0.0
  %1967 = vmatpush1.msra.mxu0 0.0
  %1968 = vmatprep.subr.mxu0 0.0
  %1969 = vmatpush1.msra.mxu0 0.0
  %1970 = vmatprep.subr.mxu0 0.0
  %1971 = vmatpush1.msra.mxu0 0.0
  %1972 = vmatprep.subr.mxu0 0.0
  %1973 = vmatpush1.msra.mxu0 0.0
  %1974 = vmatprep.subr.mxu0 0.0
  %1975 = vmatpush1.msra.mxu0 0.0
  %1976 = vmatprep.subr.mxu0 0.0
  %1977 = vmatpush1.msra.mxu0 0.0
  %1978 = vmatprep.subr.mxu0 0.0
  %1979 = vmatpush1.msra.mxu0 0.0
  %1980 = vmatprep.subr.mxu0 0.0
  %1981 = vmatpush1.msra.mxu0 0.0
  %1982 = vmatprep.subr.mxu0 0.0
  %1983 = vmatpush1.msra.mxu0 0.0
  %1984 = vmatprep.subr.mxu0 0.0
  %1985 = vmatpush1.msra.mxu0 0.0
  %1986 = vmatprep.subr.mxu0 0.0
  %1987 = vmatpush1.msra.mxu0 0.0
  %1988 = vmatprep.subr.mxu0 0.0
  %1989 = vmatpush1.msra.mxu0 0.0
  %1990 = vmatprep.subr.mxu0 0.0
  %1991 = vmatpush1.msra.mxu0 0.0
  %1992 = vmatprep.subr.mxu0 0.0
  %1993 = vmatpush1.msra.mxu0 0.0
  %1994 = vmatprep.subr.mxu0 0.0
  %1995 = vmatpush1.msra.mxu0 0.0
  %1996 = vmatprep.subr.mxu0 0.0
  %1997 = vmatpush1.msra.mxu0 0.0
  %1998 = vmatprep.subr.mxu0 0.0
  %1999 = vmatpush1.msra.mxu0 0.0
  %2000 = vmatprep.subr.mxu0 0.0
  %2001 = vmatpush1.msra.mxu0 0.0
  %2002 = vmatprep.subr.mxu0 0.0
  %2003 = vmatpush1.msra.mxu0 0.0
  %2004 = vmatprep.subr.mxu0 0.0
  %2005 = vmatpush1.msra.mxu0 0.0
  %2006 = vmatprep.subr.mxu0 0.0
  %2007 = vmatpush1.msra.mxu0 0.0
  %2008 = vmatprep.mubr.f32.mxu0 0.0
  %2009 = vmatmul.mubr.f32.gmra.mrb[0].mxu0 %v1942
  %v2010 = vpop.f32.mrb[0].mxu0
  %v2011 = vadd.f32 0.0, %v2010
  %v2012 = vpop.f32.mrb[0].mxu0
  %2013 = vdwg.mxu0
  %v2014 = vld [vmem:[%s11] sm:$0xff]
  %v2015 = vld [vmem:[%s11 + $0x8] sm:$0xff]
  %v2016 = vld [vmem:[%s11 + $0x10] sm:$0xff]
  %v2017 = vld [vmem:[%s11 + $0x18] sm:$0xff]
  %v2018 = vld [vmem:[%s11 + $0x20] sm:$0xff]
  %v2019 = vld [vmem:[%s11 + $0x28] sm:$0xff]
  %v2020 = vld [vmem:[%s11 + $0x30] sm:$0xff]
  %v2021 = vld [vmem:[%s11 + $0x38] sm:$0xff]
  %s2022 = scalar_lea.vmem %s10, 8
  %v2023 = vld [vmem:[%s2022] sm:$0xff]
  %v2025 = vsel %vm1420, %v2023, 0
  %2027 = vmatprep.subr.mxu0 0.0
  %2028 = vmatpush1.msra.mxu0 %v1938
  %2029 = vmatprep.subr.mxu0 0.0
  %2030 = vmatpush1.msra.mxu0 %v1939
  %2031 = vmatprep.subr.mxu0 0.0
  %2032 = vmatpush1.msra.mxu0 0.0
  %2033 = vmatprep.subr.mxu0 0.0
  %2034 = vmatpush1.msra.mxu0 0.0
  %2035 = vmatprep.subr.mxu0 0.0
  %2036 = vmatpush1.msra.mxu0 0.0
  %2037 = vmatprep.subr.mxu0 0.0
  %2038 = vmatpush1.msra.mxu0 0.0
  %2039 = vmatprep.subr.mxu0 0.0
  %2040 = vmatpush1.msra.mxu0 0.0
  %2041 = vmatprep.subr.mxu0 0.0
  %2042 = vmatpush1.msra.mxu0 0.0
  %2043 = vmatprep.subr.mxu0 0.0
  %2044 = vmatpush1.msra.mxu0 0.0
  %2045 = vmatprep.subr.mxu0 0.0
  %2046 = vmatpush1.msra.mxu0 0.0
  %2047 = vmatprep.subr.mxu0 0.0
  %2048 = vmatpush1.msra.mxu0 0.0
  %2049 = vmatprep.subr.mxu0 0.0
  %2050 = vmatpush1.msra.mxu0 0.0
  %2051 = vmatprep.subr.mxu0 0.0
  %2052 = vmatpush1.msra.mxu0 0.0
  %2053 = vmatprep.subr.mxu0 0.0
  %2054 = vmatpush1.msra.mxu0 0.0
  %2055 = vmatprep.subr.mxu0 0.0
  %2056 = vmatpush1.msra.mxu0 0.0
  %2057 = vmatprep.subr.mxu0 0.0
  %2058 = vmatpush1.msra.mxu0 0.0
  %2059 = vmatprep.subr.mxu0 0.0
  %2060 = vmatpush1.msra.mxu0 0.0
  %2061 = vmatprep.subr.mxu0 0.0
  %2062 = vmatpush1.msra.mxu0 0.0
  %2063 = vmatprep.subr.mxu0 0.0
  %2064 = vmatpush1.msra.mxu0 0.0
  %2065 = vmatprep.subr.mxu0 0.0
  %2066 = vmatpush1.msra.mxu0 0.0
  %2067 = vmatprep.subr.mxu0 0.0
  %2068 = vmatpush1.msra.mxu0 0.0
  %2069 = vmatprep.subr.mxu0 0.0
  %2070 = vmatpush1.msra.mxu0 0.0
  %2071 = vmatprep.subr.mxu0 0.0
  %2072 = vmatpush1.msra.mxu0 0.0
  %2073 = vmatprep.subr.mxu0 0.0
  %2074 = vmatpush1.msra.mxu0 0.0
  %2075 = vmatprep.subr.mxu0 0.0
  %2076 = vmatpush1.msra.mxu0 0.0
  %2077 = vmatprep.subr.mxu0 0.0
  %2078 = vmatpush1.msra.mxu0 0.0
  %2079 = vmatprep.subr.mxu0 0.0
  %2080 = vmatpush1.msra.mxu0 0.0
  %2081 = vmatprep.subr.mxu0 0.0
  %2082 = vmatpush1.msra.mxu0 0.0
  %2083 = vmatprep.subr.mxu0 0.0
  %2084 = vmatpush1.msra.mxu0 0.0
  %2085 = vmatprep.subr.mxu0 0.0
  %2086 = vmatpush1.msra.mxu0 0.0
  %2087 = vmatprep.subr.mxu0 0.0
  %2088 = vmatpush1.msra.mxu0 0.0
  %2089 = vmatprep.subr.mxu0 0.0
  %2090 = vmatpush1.msra.mxu0 0.0
  %2091 = vmatprep.mubr.f32.mxu0 0.0
  %2092 = vmatmul.mubr.f32.gmra.mrb[0].mxu0 %v2025
  %v2093 = vpop.f32.mrb[0].mxu0
  %v2094 = vadd.f32 0.0, %v2093
  %v2095 = vpop.f32.mrb[0].mxu0
  %2096 = vdwg.mxu0
  %s2097 = scalar_lea.vmem %s11, 64
  %v2098 = vld [vmem:[%s2097] sm:$0xff]
  %v2099 = vld [vmem:[%s2097 + $0x8] sm:$0xff]
  %v2100 = vld [vmem:[%s2097 + $0x10] sm:$0xff]
  %v2101 = vld [vmem:[%s2097 + $0x18] sm:$0xff]
  %v2102 = vld [vmem:[%s2097 + $0x20] sm:$0xff]
  %v2103 = vld [vmem:[%s2097 + $0x28] sm:$0xff]
  %v2104 = vld [vmem:[%s2097 + $0x30] sm:$0xff]
  %v2105 = vld [vmem:[%s2097 + $0x38] sm:$0xff]
  %v2107 = vsel %vm287, %v2094, 0
  %2109 = vmatprep.subr.mxu0 0.0
  %2110 = vmatpush1.msra.mxu0 %v2098
  %2111 = vmatprep.subr.mxu0 0.0
  %2112 = vmatpush1.msra.mxu0 %v2099
  %2113 = vmatprep.subr.mxu0 0.0
  %2114 = vmatpush1.msra.mxu0 %v2100
  %2115 = vmatprep.subr.mxu0 0.0
  %2116 = vmatpush1.msra.mxu0 %v2101
  %2117 = vmatprep.subr.mxu0 0.0
  %2118 = vmatpush1.msra.mxu0 %v2102
  %2119 = vmatprep.subr.mxu0 0.0
  %2120 = vmatpush1.msra.mxu0 %v2103
  %2121 = vmatprep.subr.mxu0 0.0
  %2122 = vmatpush1.msra.mxu0 %v2104
  %2123 = vmatprep.subr.mxu0 0.0
  %2124 = vmatpush1.msra.mxu0 %v2105
  %2125 = vmatprep.subr.mxu0 0.0
  %2126 = vmatpush1.msra.mxu0 0.0
  %2127 = vmatprep.subr.mxu0 0.0
  %2128 = vmatpush1.msra.mxu0 0.0
  %2129 = vmatprep.subr.mxu0 0.0
  %2130 = vmatpush1.msra.mxu0 0.0
  %2131 = vmatprep.subr.mxu0 0.0
  %2132 = vmatpush1.msra.mxu0 0.0
  %2133 = vmatprep.subr.mxu0 0.0
  %2134 = vmatpush1.msra.mxu0 0.0
  %2135 = vmatprep.subr.mxu0 0.0
  %2136 = vmatpush1.msra.mxu0 0.0
  %2137 = vmatprep.subr.mxu0 0.0
  %2138 = vmatpush1.msra.mxu0 0.0
  %2139 = vmatprep.subr.mxu0 0.0
  %2140 = vmatpush1.msra.mxu0 0.0
  %2141 = vmatprep.subr.mxu0 0.0
  %2142 = vmatpush1.msra.mxu0 0.0
  %2143 = vmatprep.subr.mxu0 0.0
  %2144 = vmatpush1.msra.mxu0 0.0
  %2145 = vmatprep.subr.mxu0 0.0
  %2146 = vmatpush1.msra.mxu0 0.0
  %2147 = vmatprep.subr.mxu0 0.0
  %2148 = vmatpush1.msra.mxu0 0.0
  %2149 = vmatprep.subr.mxu0 0.0
  %2150 = vmatpush1.msra.mxu0 0.0
  %2151 = vmatprep.subr.mxu0 0.0
  %2152 = vmatpush1.msra.mxu0 0.0
  %2153 = vmatprep.subr.mxu0 0.0
  %2154 = vmatpush1.msra.mxu0 0.0
  %2155 = vmatprep.subr.mxu0 0.0
  %2156 = vmatpush1.msra.mxu0 0.0
  %2157 = vmatprep.subr.mxu0 0.0
  %2158 = vmatpush1.msra.mxu0 0.0
  %2159 = vmatprep.subr.mxu0 0.0
  %2160 = vmatpush1.msra.mxu0 0.0
  %2161 = vmatprep.subr.mxu0 0.0
  %2162 = vmatpush1.msra.mxu0 0.0
  %2163 = vmatprep.subr.mxu0 0.0
  %2164 = vmatpush1.msra.mxu0 0.0
  %2165 = vmatprep.subr.mxu0 0.0
  %2166 = vmatpush1.msra.mxu0 0.0
  %2167 = vmatprep.subr.mxu0 0.0
  %2168 = vmatpush1.msra.mxu0 0.0
  %2169 = vmatprep.subr.mxu0 0.0
  %2170 = vmatpush1.msra.mxu0 0.0
  %2171 = vmatprep.subr.mxu0 0.0
  %2172 = vmatpush1.msra.mxu0 0.0
  %2173 = vmatprep.mubr.f32.mxu0 0.0
  %2174 = vmatmul.mubr.f32.gmra.mrb[0].mxu0 %v2107
  %v2175 = vpop.f32.mrb[0].mxu0
  %v2176 = vadd.f32 0.0, %v2175
  %v2177 = vpop.f32.mrb[0].mxu0
  %2178 = vdwg.mxu0
  %v2180 = vsel %vm287, %v2011, 0
  %2182 = vmatprep.subr.mxu0 0.0
  %2183 = vmatpush1.msra.mxu0 %v2014
  %2184 = vmatprep.subr.mxu0 0.0
  %2185 = vmatpush1.msra.mxu0 %v2015
  %2186 = vmatprep.subr.mxu0 0.0
  %2187 = vmatpush1.msra.mxu0 %v2016
  %2188 = vmatprep.subr.mxu0 0.0
  %2189 = vmatpush1.msra.mxu0 %v2017
  %2190 = vmatprep.subr.mxu0 0.0
  %2191 = vmatpush1.msra.mxu0 %v2018
  %2192 = vmatprep.subr.mxu0 0.0
  %2193 = vmatpush1.msra.mxu0 %v2019
  %2194 = vmatprep.subr.mxu0 0.0
  %2195 = vmatpush1.msra.mxu0 %v2020
  %2196 = vmatprep.subr.mxu0 0.0
  %2197 = vmatpush1.msra.mxu0 %v2021
  %2198 = vmatprep.subr.mxu0 0.0
  %2199 = vmatpush1.msra.mxu0 0.0
  %2200 = vmatprep.subr.mxu0 0.0
  %2201 = vmatpush1.msra.mxu0 0.0
  %2202 = vmatprep.subr.mxu0 0.0
  %2203 = vmatpush1.msra.mxu0 0.0
  %2204 = vmatprep.subr.mxu0 0.0
  %2205 = vmatpush1.msra.mxu0 0.0
  %2206 = vmatprep.subr.mxu0 0.0
  %2207 = vmatpush1.msra.mxu0 0.0
  %2208 = vmatprep.subr.mxu0 0.0
  %2209 = vmatpush1.msra.mxu0 0.0
  %2210 = vmatprep.subr.mxu0 0.0
  %2211 = vmatpush1.msra.mxu0 0.0
  %2212 = vmatprep.subr.mxu0 0.0
  %2213 = vmatpush1.msra.mxu0 0.0
  %2214 = vmatprep.subr.mxu0 0.0
  %2215 = vmatpush1.msra.mxu0 0.0
  %2216 = vmatprep.subr.mxu0 0.0
  %2217 = vmatpush1.msra.mxu0 0.0
  %2218 = vmatprep.subr.mxu0 0.0
  %2219 = vmatpush1.msra.mxu0 0.0
  %2220 = vmatprep.subr.mxu0 0.0
  %2221 = vmatpush1.msra.mxu0 0.0
  %2222 = vmatprep.subr.mxu0 0.0
  %2223 = vmatpush1.msra.mxu0 0.0
  %2224 = vmatprep.subr.mxu0 0.0
  %2225 = vmatpush1.msra.mxu0 0.0
  %2226 = vmatprep.subr.mxu0 0.0
  %2227 = vmatpush1.msra.mxu0 0.0
  %2228 = vmatprep.subr.mxu0 0.0
  %2229 = vmatpush1.msra.mxu0 0.0
  %2230 = vmatprep.subr.mxu0 0.0
  %2231 = vmatpush1.msra.mxu0 0.0
  %2232 = vmatprep.subr.mxu0 0.0
  %2233 = vmatpush1.msra.mxu0 0.0
  %2234 = vmatprep.subr.mxu0 0.0
  %2235 = vmatpush1.msra.mxu0 0.0
  %2236 = vmatprep.subr.mxu0 0.0
  %2237 = vmatpush1.msra.mxu0 0.0
  %2238 = vmatprep.subr.mxu0 0.0
  %2239 = vmatpush1.msra.mxu0 0.0
  %2240 = vmatprep.subr.mxu0 0.0
  %2241 = vmatpush1.msra.mxu0 0.0
  %2242 = vmatprep.subr.mxu0 0.0
  %2243 = vmatpush1.msra.mxu0 0.0
  %2244 = vmatprep.subr.mxu0 0.0
  %2245 = vmatpush1.msra.mxu0 0.0
  %2246 = vmatprep.mubr.f32.mxu0 0.0
  %2247 = vmatmul.mubr.f32.gmra.mrb[0].mxu0 %v2180
  %v2248 = vpop.f32.mrb[0].mxu0
  %v2249 = vadd.f32 %v2176, %v2248
  %v2250 = vpop.f32.mrb[0].mxu0
  %2251 = vdwg.mxu0
  %s2252 = scalar_lea.vmem %s10, 16
  %v2253 = vld [vmem:[%s2252] sm:$0xff]
  %v2255 = vsel %vm1420, %v2253, 0
  %2257 = vmatprep.subr.mxu0 0.0
  %2258 = vmatpush1.msra.mxu0 %v1938
  %2259 = vmatprep.subr.mxu0 0.0
  %2260 = vmatpush1.msra.mxu0 %v1939
  %2261 = vmatprep.subr.mxu0 0.0
  %2262 = vmatpush1.msra.mxu0 0.0
  %2263 = vmatprep.subr.mxu0 0.0
  %2264 = vmatpush1.msra.mxu0 0.0
  %2265 = vmatprep.subr.mxu0 0.0
  %2266 = vmatpush1.msra.mxu0 0.0
  %2267 = vmatprep.subr.mxu0 0.0
  %2268 = vmatpush1.msra.mxu0 0.0
  %2269 = vmatprep.subr.mxu0 0.0
  %2270 = vmatpush1.msra.mxu0 0.0
  %2271 = vmatprep.subr.mxu0 0.0
  %2272 = vmatpush1.msra.mxu0 0.0
  %2273 = vmatprep.subr.mxu0 0.0
  %2274 = vmatpush1.msra.mxu0 0.0
  %2275 = vmatprep.subr.mxu0 0.0
  %2276 = vmatpush1.msra.mxu0 0.0
  %2277 = vmatprep.subr.mxu0 0.0
  %2278 = vmatpush1.msra.mxu0 0.0
  %2279 = vmatprep.subr.mxu0 0.0
  %2280 = vmatpush1.msra.mxu0 0.0
  %2281 = vmatprep.subr.mxu0 0.0
  %2282 = vmatpush1.msra.mxu0 0.0
  %2283 = vmatprep.subr.mxu0 0.0
  %2284 = vmatpush1.msra.mxu0 0.0
  %2285 = vmatprep.subr.mxu0 0.0
  %2286 = vmatpush1.msra.mxu0 0.0
  %2287 = vmatprep.subr.mxu0 0.0
  %2288 = vmatpush1.msra.mxu0 0.0
  %2289 = vmatprep.subr.mxu0 0.0
  %2290 = vmatpush1.msra.mxu0 0.0
  %2291 = vmatprep.subr.mxu0 0.0
  %2292 = vmatpush1.msra.mxu0 0.0
  %2293 = vmatprep.subr.mxu0 0.0
  %2294 = vmatpush1.msra.mxu0 0.0
  %2295 = vmatprep.subr.mxu0 0.0
  %2296 = vmatpush1.msra.mxu0 0.0
  %2297 = vmatprep.subr.mxu0 0.0
  %2298 = vmatpush1.msra.mxu0 0.0
  %2299 = vmatprep.subr.mxu0 0.0
  %2300 = vmatpush1.msra.mxu0 0.0
  %2301 = vmatprep.subr.mxu0 0.0
  %2302 = vmatpush1.msra.mxu0 0.0
  %2303 = vmatprep.subr.mxu0 0.0
  %2304 = vmatpush1.msra.mxu0 0.0
  %2305 = vmatprep.subr.mxu0 0.0
  %2306 = vmatpush1.msra.mxu0 0.0
  %2307 = vmatprep.subr.mxu0 0.0
  %2308 = vmatpush1.msra.mxu0 0.0
  %2309 = vmatprep.subr.mxu0 0.0
  %2310 = vmatpush1.msra.mxu0 0.0
  %2311 = vmatprep.subr.mxu0 0.0
  %2312 = vmatpush1.msra.mxu0 0.0
  %2313 = vmatprep.subr.mxu0 0.0
  %2314 = vmatpush1.msra.mxu0 0.0
  %2315 = vmatprep.subr.mxu0 0.0
  %2316 = vmatpush1.msra.mxu0 0.0
  %2317 = vmatprep.subr.mxu0 0.0
  %2318 = vmatpush1.msra.mxu0 0.0
  %2319 = vmatprep.subr.mxu0 0.0
  %2320 = vmatpush1.msra.mxu0 0.0
  %2321 = vmatprep.mubr.f32.mxu0 0.0
  %2322 = vmatmul.mubr.f32.gmra.mrb[0].mxu0 %v2255
  %v2323 = vpop.f32.mrb[0].mxu0
  %v2324 = vadd.f32 0.0, %v2323
  %v2325 = vpop.f32.mrb[0].mxu0
  %2326 = vdwg.mxu0
  %s2327 = scalar_lea.vmem %s11, 128
  %v2328 = vld [vmem:[%s2327] sm:$0xff]
  %v2329 = vld [vmem:[%s2327 + $0x8] sm:$0xff]
  %v2330 = vld [vmem:[%s2327 + $0x10] sm:$0xff]
  %v2331 = vld [vmem:[%s2327 + $0x18] sm:$0xff]
  %v2332 = vld [vmem:[%s2327 + $0x20] sm:$0xff]
  %v2333 = vld [vmem:[%s2327 + $0x28] sm:$0xff]
  %v2334 = vld [vmem:[%s2327 + $0x30] sm:$0xff]
  %v2335 = vld [vmem:[%s2327 + $0x38] sm:$0xff]
  %v2337 = vsel %vm287, %v2324, 0
  %2339 = vmatprep.subr.mxu0 0.0
  %2340 = vmatpush1.msra.mxu0 %v2328
  %2341 = vmatprep.subr.mxu0 0.0
  %2342 = vmatpush1.msra.mxu0 %v2329
  %2343 = vmatprep.subr.mxu0 0.0
  %2344 = vmatpush1.msra.mxu0 %v2330
  %2345 = vmatprep.subr.mxu0 0.0
  %2346 = vmatpush1.msra.mxu0 %v2331
  %2347 = vmatprep.subr.mxu0 0.0
  %2348 = vmatpush1.msra.mxu0 %v2332
  %2349 = vmatprep.subr.mxu0 0.0
  %2350 = vmatpush1.msra.mxu0 %v2333
  %2351 = vmatprep.subr.mxu0 0.0
  %2352 = vmatpush1.msra.mxu0 %v2334
  %2353 = vmatprep.subr.mxu0 0.0
  %2354 = vmatpush1.msra.mxu0 %v2335
  %2355 = vmatprep.subr.mxu0 0.0
  %2356 = vmatpush1.msra.mxu0 0.0
  %2357 = vmatprep.subr.mxu0 0.0
  %2358 = vmatpush1.msra.mxu0 0.0
  %2359 = vmatprep.subr.mxu0 0.0
  %2360 = vmatpush1.msra.mxu0 0.0
  %2361 = vmatprep.subr.mxu0 0.0
  %2362 = vmatpush1.msra.mxu0 0.0
  %2363 = vmatprep.subr.mxu0 0.0
  %2364 = vmatpush1.msra.mxu0 0.0
  %2365 = vmatprep.subr.mxu0 0.0
  %2366 = vmatpush1.msra.mxu0 0.0
  %2367 = vmatprep.subr.mxu0 0.0
  %2368 = vmatpush1.msra.mxu0 0.0
  %2369 = vmatprep.subr.mxu0 0.0
  %2370 = vmatpush1.msra.mxu0 0.0
  %2371 = vmatprep.subr.mxu0 0.0
  %2372 = vmatpush1.msra.mxu0 0.0
  %2373 = vmatprep.subr.mxu0 0.0
  %2374 = vmatpush1.msra.mxu0 0.0
  %2375 = vmatprep.subr.mxu0 0.0
  %2376 = vmatpush1.msra.mxu0 0.0
  %2377 = vmatprep.subr.mxu0 0.0
  %2378 = vmatpush1.msra.mxu0 0.0
  %2379 = vmatprep.subr.mxu0 0.0
  %2380 = vmatpush1.msra.mxu0 0.0
  %2381 = vmatprep.subr.mxu0 0.0
  %2382 = vmatpush1.msra.mxu0 0.0
  %2383 = vmatprep.subr.mxu0 0.0
  %2384 = vmatpush1.msra.mxu0 0.0
  %2385 = vmatprep.subr.mxu0 0.0
  %2386 = vmatpush1.msra.mxu0 0.0
  %2387 = vmatprep.subr.mxu0 0.0
  %2388 = vmatpush1.msra.mxu0 0.0
  %2389 = vmatprep.subr.mxu0 0.0
  %2390 = vmatpush1.msra.mxu0 0.0
  %2391 = vmatprep.subr.mxu0 0.0
  %2392 = vmatpush1.msra.mxu0 0.0
  %2393 = vmatprep.subr.mxu0 0.0
  %2394 = vmatpush1.msra.mxu0 0.0
  %2395 = vmatprep.subr.mxu0 0.0
  %2396 = vmatpush1.msra.mxu0 0.0
  %2397 = vmatprep.subr.mxu0 0.0
  %2398 = vmatpush1.msra.mxu0 0.0
  %2399 = vmatprep.subr.mxu0 0.0
  %2400 = vmatpush1.msra.mxu0 0.0
  %2401 = vmatprep.subr.mxu0 0.0
  %2402 = vmatpush1.msra.mxu0 0.0
  %2403 = vmatprep.mubr.f32.mxu0 0.0
  %2404 = vmatmul.mubr.f32.gmra.mrb[0].mxu0 %v2337
  %v2405 = vpop.f32.mrb[0].mxu0
  %v2406 = vadd.f32 0.0, %v2405
  %v2407 = vpop.f32.mrb[0].mxu0
  %2408 = vdwg.mxu0
  %v2409 = vadd.f32 %v2249, %v2406
  %s2410 = scalar_lea.vmem %s10, 24
  %v2411 = vld [vmem:[%s2410] sm:$0xff]
  %v2413 = vsel %vm1420, %v2411, 0
  %2415 = vmatprep.subr.mxu0 0.0
  %2416 = vmatpush1.msra.mxu0 %v1938
  %2417 = vmatprep.subr.mxu0 0.0
  %2418 = vmatpush1.msra.mxu0 %v1939
  %2419 = vmatprep.subr.mxu0 0.0
  %2420 = vmatpush1.msra.mxu0 0.0
  %2421 = vmatprep.subr.mxu0 0.0
  %2422 = vmatpush1.msra.mxu0 0.0
  %2423 = vmatprep.subr.mxu0 0.0
  %2424 = vmatpush1.msra.mxu0 0.0
  %2425 = vmatprep.subr.mxu0 0.0
  %2426 = vmatpush1.msra.mxu0 0.0
  %2427 = vmatprep.subr.mxu0 0.0
  %2428 = vmatpush1.msra.mxu0 0.0
  %2429 = vmatprep.subr.mxu0 0.0
  %2430 = vmatpush1.msra.mxu0 0.0
  %2431 = vmatprep.subr.mxu0 0.0
  %2432 = vmatpush1.msra.mxu0 0.0
  %2433 = vmatprep.subr.mxu0 0.0
  %2434 = vmatpush1.msra.mxu0 0.0
  %2435 = vmatprep.subr.mxu0 0.0
  %2436 = vmatpush1.msra.mxu0 0.0
  %2437 = vmatprep.subr.mxu0 0.0
  %2438 = vmatpush1.msra.mxu0 0.0
  %2439 = vmatprep.subr.mxu0 0.0
  %2440 = vmatpush1.msra.mxu0 0.0
  %2441 = vmatprep.subr.mxu0 0.0
  %2442 = vmatpush1.msra.mxu0 0.0
  %2443 = vmatprep.subr.mxu0 0.0
  %2444 = vmatpush1.msra.mxu0 0.0
  %2445 = vmatprep.subr.mxu0 0.0
  %2446 = vmatpush1.msra.mxu0 0.0
  %2447 = vmatprep.subr.mxu0 0.0
  %2448 = vmatpush1.msra.mxu0 0.0
  %2449 = vmatprep.subr.mxu0 0.0
  %2450 = vmatpush1.msra.mxu0 0.0
  %2451 = vmatprep.subr.mxu0 0.0
  %2452 = vmatpush1.msra.mxu0 0.0
  %2453 = vmatprep.subr.mxu0 0.0
  %2454 = vmatpush1.msra.mxu0 0.0
  %2455 = vmatprep.subr.mxu0 0.0
  %2456 = vmatpush1.msra.mxu0 0.0
  %2457 = vmatprep.subr.mxu0 0.0
  %2458 = vmatpush1.msra.mxu0 0.0
  %2459 = vmatprep.subr.mxu0 0.0
  %2460 = vmatpush1.msra.mxu0 0.0
  %2461 = vmatprep.subr.mxu0 0.0
  %2462 = vmatpush1.msra.mxu0 0.0
  %2463 = vmatprep.subr.mxu0 0.0
  %2464 = vmatpush1.msra.mxu0 0.0
  %2465 = vmatprep.subr.mxu0 0.0
  %2466 = vmatpush1.msra.mxu0 0.0
  %2467 = vmatprep.subr.mxu0 0.0
  %2468 = vmatpush1.msra.mxu0 0.0
  %2469 = vmatprep.subr.mxu0 0.0
  %2470 = vmatpush1.msra.mxu0 0.0
  %2471 = vmatprep.subr.mxu0 0.0
  %2472 = vmatpush1.msra.mxu0 0.0
  %2473 = vmatprep.subr.mxu0 0.0
  %2474 = vmatpush1.msra.mxu0 0.0
  %2475 = vmatprep.subr.mxu0 0.0
  %2476 = vmatpush1.msra.mxu0 0.0
  %2477 = vmatprep.subr.mxu0 0.0
  %2478 = vmatpush1.msra.mxu0 0.0
  %2479 = vmatprep.mubr.f32.mxu0 0.0
  %2480 = vmatmul.mubr.f32.gmra.mrb[0].mxu0 %v2413
  %v2481 = vpop.f32.mrb[0].mxu0
  %v2482 = vadd.f32 0.0, %v2481
  %v2483 = vpop.f32.mrb[0].mxu0
  %2484 = vdwg.mxu0
  %s2485 = scalar_lea.vmem %s11, 192
  %v2486 = vld [vmem:[%s2485] sm:$0xff]
  %v2487 = vld [vmem:[%s2485 + $0x8] sm:$0xff]
  %v2488 = vld [vmem:[%s2485 + $0x10] sm:$0xff]
  %v2489 = vld [vmem:[%s2485 + $0x18] sm:$0xff]
  %v2490 = vld [vmem:[%s2485 + $0x20] sm:$0xff]
  %v2491 = vld [vmem:[%s2485 + $0x28] sm:$0xff]
  %v2492 = vld [vmem:[%s2485 + $0x30] sm:$0xff]
  %v2493 = vld [vmem:[%s2485 + $0x38] sm:$0xff]
  %v2495 = vsel %vm287, %v2482, 0
  %2497 = vmatprep.subr.mxu0 0.0
  %2498 = vmatpush1.msra.mxu0 %v2486
  %2499 = vmatprep.subr.mxu0 0.0
  %2500 = vmatpush1.msra.mxu0 %v2487
  %2501 = vmatprep.subr.mxu0 0.0
  %2502 = vmatpush1.msra.mxu0 %v2488
  %2503 = vmatprep.subr.mxu0 0.0
  %2504 = vmatpush1.msra.mxu0 %v2489
  %2505 = vmatprep.subr.mxu0 0.0
  %2506 = vmatpush1.msra.mxu0 %v2490
  %2507 = vmatprep.subr.mxu0 0.0
  %2508 = vmatpush1.msra.mxu0 %v2491
  %2509 = vmatprep.subr.mxu0 0.0
  %2510 = vmatpush1.msra.mxu0 %v2492
  %2511 = vmatprep.subr.mxu0 0.0
  %2512 = vmatpush1.msra.mxu0 %v2493
  %2513 = vmatprep.subr.mxu0 0.0
  %2514 = vmatpush1.msra.mxu0 0.0
  %2515 = vmatprep.subr.mxu0 0.0
  %2516 = vmatpush1.msra.mxu0 0.0
  %2517 = vmatprep.subr.mxu0 0.0
  %2518 = vmatpush1.msra.mxu0 0.0
  %2519 = vmatprep.subr.mxu0 0.0
  %2520 = vmatpush1.msra.mxu0 0.0
  %2521 = vmatprep.subr.mxu0 0.0
  %2522 = vmatpush1.msra.mxu0 0.0
  %2523 = vmatprep.subr.mxu0 0.0
  %2524 = vmatpush1.msra.mxu0 0.0
  %2525 = vmatprep.subr.mxu0 0.0
  %2526 = vmatpush1.msra.mxu0 0.0
  %2527 = vmatprep.subr.mxu0 0.0
  %2528 = vmatpush1.msra.mxu0 0.0
  %2529 = vmatprep.subr.mxu0 0.0
  %2530 = vmatpush1.msra.mxu0 0.0
  %2531 = vmatprep.subr.mxu0 0.0
  %2532 = vmatpush1.msra.mxu0 0.0
  %2533 = vmatprep.subr.mxu0 0.0
  %2534 = vmatpush1.msra.mxu0 0.0
  %2535 = vmatprep.subr.mxu0 0.0
  %2536 = vmatpush1.msra.mxu0 0.0
  %2537 = vmatprep.subr.mxu0 0.0
  %2538 = vmatpush1.msra.mxu0 0.0
  %2539 = vmatprep.subr.mxu0 0.0
  %2540 = vmatpush1.msra.mxu0 0.0
  %2541 = vmatprep.subr.mxu0 0.0
  %2542 = vmatpush1.msra.mxu0 0.0
  %2543 = vmatprep.subr.mxu0 0.0
  %2544 = vmatpush1.msra.mxu0 0.0
  %2545 = vmatprep.subr.mxu0 0.0
  %2546 = vmatpush1.msra.mxu0 0.0
  %2547 = vmatprep.subr.mxu0 0.0
  %2548 = vmatpush1.msra.mxu0 0.0
  %2549 = vmatprep.subr.mxu0 0.0
  %2550 = vmatpush1.msra.mxu0 0.0
  %2551 = vmatprep.subr.mxu0 0.0
  %2552 = vmatpush1.msra.mxu0 0.0
  %2553 = vmatprep.subr.mxu0 0.0
  %2554 = vmatpush1.msra.mxu0 0.0
  %2555 = vmatprep.subr.mxu0 0.0
  %2556 = vmatpush1.msra.mxu0 0.0
  %2557 = vmatprep.subr.mxu0 0.0
  %2558 = vmatpush1.msra.mxu0 0.0
  %2559 = vmatprep.subr.mxu0 0.0
  %2560 = vmatpush1.msra.mxu0 0.0
  %2561 = vmatprep.mubr.f32.mxu0 0.0
  %2562 = vmatmul.mubr.f32.gmra.mrb[0].mxu0 %v2495
  %v2563 = vpop.f32.mrb[0].mxu0
  %v2564 = vadd.f32 0.0, %v2563
  %v2565 = vpop.f32.mrb[0].mxu0
  %2566 = vdwg.mxu0
  %v2567 = vadd.f32 %v2409, %v2564
  %v2568 = vld [vmem:[%s12] sm:$0x1]
  %v2570 = vlaneseq
  %v2571 = vshrl.u32 %v2570, 7
  %v2572 = vsub.s32 0, %v2571
  %v2573 = vrot.slane %v2568, %v2572
  %v2575 = vadd.f32 %v2567, %v2573
  %v2576 = vmax.f32 %v2575, 0.0
  %v2577 = vld [vmem:[%s13] sm:$0xff]
  %vm2578 = vcmask 64512
  %v2580 = vsel %vm2578, %v2577, 0
  %2582 = vmatprep.subr.mxu0 0.0
  %2583 = vmatpush1.msra.mxu0 %v2576
  %2584 = vmatprep.subr.mxu0 0.0
  %2585 = vmatpush1.msra.mxu0 0.0
  %2586 = vmatprep.subr.mxu0 0.0
  %2587 = vmatpush1.msra.mxu0 0.0
  %2588 = vmatprep.subr.mxu0 0.0
  %2589 = vmatpush1.msra.mxu0 0.0
  %2590 = vmatprep.subr.mxu0 0.0
  %2591 = vmatpush1.msra.mxu0 0.0
  %2592 = vmatprep.subr.mxu0 0.0
  %2593 = vmatpush1.msra.mxu0 0.0
  %2594 = vmatprep.subr.mxu0 0.0
  %2595 = vmatpush1.msra.mxu0 0.0
  %2596 = vmatprep.subr.mxu0 0.0
  %2597 = vmatpush1.msra.mxu0 0.0
  %2598 = vmatprep.subr.mxu0 0.0
  %2599 = vmatpush1.msra.mxu0 0.0
  %2600 = vmatprep.subr.mxu0 0.0
  %2601 = vmatpush1.msra.mxu0 0.0
  %2602 = vmatprep.subr.mxu0 0.0
  %2603 = vmatpush1.msra.mxu0 0.0
  %2604 = vmatprep.subr.mxu0 0.0
  %2605 = vmatpush1.msra.mxu0 0.0
  %2606 = vmatprep.subr.mxu0 0.0
  %2607 = vmatpush1.msra.mxu0 0.0
  %2608 = vmatprep.subr.mxu0 0.0
  %2609 = vmatpush1.msra.mxu0 0.0
  %2610 = vmatprep.subr.mxu0 0.0
  %2611 = vmatpush1.msra.mxu0 0.0
  %2612 = vmatprep.subr.mxu0 0.0
  %2613 = vmatpush1.msra.mxu0 0.0
  %2614 = vmatprep.subr.mxu0 0.0
  %2615 = vmatpush1.msra.mxu0 0.0
  %2616 = vmatprep.subr.mxu0 0.0
  %2617 = vmatpush1.msra.mxu0 0.0
  %2618 = vmatprep.subr.mxu0 0.0
  %2619 = vmatpush1.msra.mxu0 0.0
  %2620 = vmatprep.subr.mxu0 0.0
  %2621 = vmatpush1.msra.mxu0 0.0
  %2622 = vmatprep.subr.mxu0 0.0
  %2623 = vmatpush1.msra.mxu0 0.0
  %2624 = vmatprep.subr.mxu0 0.0
  %2625 = vmatpush1.msra.mxu0 0.0
  %2626 = vmatprep.subr.mxu0 0.0
  %2627 = vmatpush1.msra.mxu0 0.0
  %2628 = vmatprep.subr.mxu0 0.0
  %2629 = vmatpush1.msra.mxu0 0.0
  %2630 = vmatprep.subr.mxu0 0.0
  %2631 = vmatpush1.msra.mxu0 0.0
  %2632 = vmatprep.subr.mxu0 0.0
  %2633 = vmatpush1.msra.mxu0 0.0
  %2634 = vmatprep.subr.mxu0 0.0
  %2635 = vmatpush1.msra.mxu0 0.0
  %2636 = vmatprep.subr.mxu0 0.0
  %2637 = vmatpush1.msra.mxu0 0.0
  %2638 = vmatprep.subr.mxu0 0.0
  %2639 = vmatpush1.msra.mxu0 0.0
  %2640 = vmatprep.subr.mxu0 0.0
  %2641 = vmatpush1.msra.mxu0 0.0
  %2642 = vmatprep.subr.mxu0 0.0
  %2643 = vmatpush1.msra.mxu0 0.0
  %2644 = vmatprep.subr.mxu0 0.0
  %2645 = vmatpush1.msra.mxu0 0.0
  %2646 = vmatprep.mubr.f32.mxu0 0.0
  %2647 = vmatmul.mubr.f32.gmra.mrb[0].mxu0 %v2580
  %v2648 = vpop.f32.mrb[0].mxu0
  %v2649 = vadd.f32 0.0, %v2648
  %v2650 = vpop.f32.mrb[0].mxu0
  %2651 = vdwg.mxu0
  %v2652 = vld [vmem:[%s14] sm:$0xff]
  %v2653 = vld [vmem:[%s14 + $0x8] sm:$0xff]
  %v2654 = vld [vmem:[%s14 + $0x10] sm:$0xff]
  %v2655 = vld [vmem:[%s14 + $0x18] sm:$0xff]
  %s2656 = scalar_lea.vmem %s13, 8
  %v2657 = vld [vmem:[%s2656] sm:$0xff]
  %v2659 = vsel %vm2578, %v2657, 0
  %2661 = vmatprep.subr.mxu0 0.0
  %2662 = vmatpush1.msra.mxu0 %v2576
  %2663 = vmatprep.subr.mxu0 0.0
  %2664 = vmatpush1.msra.mxu0 0.0
  %2665 = vmatprep.subr.mxu0 0.0
  %2666 = vmatpush1.msra.mxu0 0.0
  %2667 = vmatprep.subr.mxu0 0.0
  %2668 = vmatpush1.msra.mxu0 0.0
  %2669 = vmatprep.subr.mxu0 0.0
  %2670 = vmatpush1.msra.mxu0 0.0
  %2671 = vmatprep.subr.mxu0 0.0
  %2672 = vmatpush1.msra.mxu0 0.0
  %2673 = vmatprep.subr.mxu0 0.0
  %2674 = vmatpush1.msra.mxu0 0.0
  %2675 = vmatprep.subr.mxu0 0.0
  %2676 = vmatpush1.msra.mxu0 0.0
  %2677 = vmatprep.subr.mxu0 0.0
  %2678 = vmatpush1.msra.mxu0 0.0
  %2679 = vmatprep.subr.mxu0 0.0
  %2680 = vmatpush1.msra.mxu0 0.0
  %2681 = vmatprep.subr.mxu0 0.0
  %2682 = vmatpush1.msra.mxu0 0.0
  %2683 = vmatprep.subr.mxu0 0.0
  %2684 = vmatpush1.msra.mxu0 0.0
  %2685 = vmatprep.subr.mxu0 0.0
  %2686 = vmatpush1.msra.mxu0 0.0
  %2687 = vmatprep.subr.mxu0 0.0
  %2688 = vmatpush1.msra.mxu0 0.0
  %2689 = vmatprep.subr.mxu0 0.0
  %2690 = vmatpush1.msra.mxu0 0.0
  %2691 = vmatprep.subr.mxu0 0.0
  %2692 = vmatpush1.msra.mxu0 0.0
  %2693 = vmatprep.subr.mxu0 0.0
  %2694 = vmatpush1.msra.mxu0 0.0
  %2695 = vmatprep.subr.mxu0 0.0
  %2696 = vmatpush1.msra.mxu0 0.0
  %2697 = vmatprep.subr.mxu0 0.0
  %2698 = vmatpush1.msra.mxu0 0.0
  %2699 = vmatprep.subr.mxu0 0.0
  %2700 = vmatpush1.msra.mxu0 0.0
  %2701 = vmatprep.subr.mxu0 0.0
  %2702 = vmatpush1.msra.mxu0 0.0
  %2703 = vmatprep.subr.mxu0 0.0
  %2704 = vmatpush1.msra.mxu0 0.0
  %2705 = vmatprep.subr.mxu0 0.0
  %2706 = vmatpush1.msra.mxu0 0.0
  %2707 = vmatprep.subr.mxu0 0.0
  %2708 = vmatpush1.msra.mxu0 0.0
  %2709 = vmatprep.subr.mxu0 0.0
  %2710 = vmatpush1.msra.mxu0 0.0
  %2711 = vmatprep.subr.mxu0 0.0
  %2712 = vmatpush1.msra.mxu0 0.0
  %2713 = vmatprep.subr.mxu0 0.0
  %2714 = vmatpush1.msra.mxu0 0.0
  %2715 = vmatprep.subr.mxu0 0.0
  %2716 = vmatpush1.msra.mxu0 0.0
  %2717 = vmatprep.subr.mxu0 0.0
  %2718 = vmatpush1.msra.mxu0 0.0
  %2719 = vmatprep.subr.mxu0 0.0
  %2720 = vmatpush1.msra.mxu0 0.0
  %2721 = vmatprep.subr.mxu0 0.0
  %2722 = vmatpush1.msra.mxu0 0.0
  %2723 = vmatprep.subr.mxu0 0.0
  %2724 = vmatpush1.msra.mxu0 0.0
  %2725 = vmatprep.mubr.f32.mxu0 0.0
  %2726 = vmatmul.mubr.f32.gmra.mrb[0].mxu0 %v2659
  %v2727 = vpop.f32.mrb[0].mxu0
  %v2728 = vadd.f32 0.0, %v2727
  %v2729 = vpop.f32.mrb[0].mxu0
  %2730 = vdwg.mxu0
  %s2731 = scalar_lea.vmem %s14, 32
  %v2732 = vld [vmem:[%s2731] sm:$0xff]
  %v2733 = vld [vmem:[%s2731 + $0x8] sm:$0xff]
  %v2734 = vld [vmem:[%s2731 + $0x10] sm:$0xff]
  %v2735 = vld [vmem:[%s2731 + $0x18] sm:$0xff]
  %v2737 = vsel %vm70, %v2728, 0
  %2739 = vmatprep.subr.mxu0 0.0
  %2740 = vmatpush1.msra.mxu0 %v2732
  %2741 = vmatprep.subr.mxu0 0.0
  %2742 = vmatpush1.msra.mxu0 %v2733
  %2743 = vmatprep.subr.mxu0 0.0
  %2744 = vmatpush1.msra.mxu0 %v2734
  %2745 = vmatprep.subr.mxu0 0.0
  %2746 = vmatpush1.msra.mxu0 %v2735
  %2747 = vmatprep.subr.mxu0 0.0
  %2748 = vmatpush1.msra.mxu0 0.0
  %2749 = vmatprep.subr.mxu0 0.0
  %2750 = vmatpush1.msra.mxu0 0.0
  %2751 = vmatprep.subr.mxu0 0.0
  %2752 = vmatpush1.msra.mxu0 0.0
  %2753 = vmatprep.subr.mxu0 0.0
  %2754 = vmatpush1.msra.mxu0 0.0
  %2755 = vmatprep.subr.mxu0 0.0
  %2756 = vmatpush1.msra.mxu0 0.0
  %2757 = vmatprep.subr.mxu0 0.0
  %2758 = vmatpush1.msra.mxu0 0.0
  %2759 = vmatprep.subr.mxu0 0.0
  %2760 = vmatpush1.msra.mxu0 0.0
  %2761 = vmatprep.subr.mxu0 0.0
  %2762 = vmatpush1.msra.mxu0 0.0
  %2763 = vmatprep.subr.mxu0 0.0
  %2764 = vmatpush1.msra.mxu0 0.0
  %2765 = vmatprep.subr.mxu0 0.0
  %2766 = vmatpush1.msra.mxu0 0.0
  %2767 = vmatprep.subr.mxu0 0.0
  %2768 = vmatpush1.msra.mxu0 0.0
  %2769 = vmatprep.subr.mxu0 0.0
  %2770 = vmatpush1.msra.mxu0 0.0
  %2771 = vmatprep.subr.mxu0 0.0
  %2772 = vmatpush1.msra.mxu0 0.0
  %2773 = vmatprep.subr.mxu0 0.0
  %2774 = vmatpush1.msra.mxu0 0.0
  %2775 = vmatprep.subr.mxu0 0.0
  %2776 = vmatpush1.msra.mxu0 0.0
  %2777 = vmatprep.subr.mxu0 0.0
  %2778 = vmatpush1.msra.mxu0 0.0
  %2779 = vmatprep.subr.mxu0 0.0
  %2780 = vmatpush1.msra.mxu0 0.0
  %2781 = vmatprep.subr.mxu0 0.0
  %2782 = vmatpush1.msra.mxu0 0.0
  %2783 = vmatprep.subr.mxu0 0.0
  %2784 = vmatpush1.msra.mxu0 0.0
  %2785 = vmatprep.subr.mxu0 0.0
  %2786 = vmatpush1.msra.mxu0 0.0
  %2787 = vmatprep.subr.mxu0 0.0
  %2788 = vmatpush1.msra.mxu0 0.0
  %2789 = vmatprep.subr.mxu0 0.0
  %2790 = vmatpush1.msra.mxu0 0.0
  %2791 = vmatprep.subr.mxu0 0.0
  %2792 = vmatpush1.msra.mxu0 0.0
  %2793 = vmatprep.subr.mxu0 0.0
  %2794 = vmatpush1.msra.mxu0 0.0
  %2795 = vmatprep.subr.mxu0 0.0
  %2796 = vmatpush1.msra.mxu0 0.0
  %2797 = vmatprep.subr.mxu0 0.0
  %2798 = vmatpush1.msra.mxu0 0.0
  %2799 = vmatprep.subr.mxu0 0.0
  %2800 = vmatpush1.msra.mxu0 0.0
  %2801 = vmatprep.subr.mxu0 0.0
  %2802 = vmatpush1.msra.mxu0 0.0
  %2803 = vmatprep.mubr.f32.mxu0 0.0
  %2804 = vmatmul.mubr.f32.gmra.mrb[0].mxu0 %v2737
  %v2805 = vpop.f32.mrb[0].mxu0
  %v2806 = vadd.f32 0.0, %v2805
  %v2807 = vpop.f32.mrb[0].mxu0
  %2808 = vdwg.mxu0
  %v2810 = vsel %vm70, %v2649, 0
  %2812 = vmatprep.subr.mxu0 0.0
  %2813 = vmatpush1.msra.mxu0 %v2652
  %2814 = vmatprep.subr.mxu0 0.0
  %2815 = vmatpush1.msra.mxu0 %v2653
  %2816 = vmatprep.subr.mxu0 0.0
  %2817 = vmatpush1.msra.mxu0 %v2654
  %2818 = vmatprep.subr.mxu0 0.0
  %2819 = vmatpush1.msra.mxu0 %v2655
  %2820 = vmatprep.subr.mxu0 0.0
  %2821 = vmatpush1.msra.mxu0 0.0
  %2822 = vmatprep.subr.mxu0 0.0
  %2823 = vmatpush1.msra.mxu0 0.0
  %2824 = vmatprep.subr.mxu0 0.0
  %2825 = vmatpush1.msra.mxu0 0.0
  %2826 = vmatprep.subr.mxu0 0.0
  %2827 = vmatpush1.msra.mxu0 0.0
  %2828 = vmatprep.subr.mxu0 0.0
  %2829 = vmatpush1.msra.mxu0 0.0
  %2830 = vmatprep.subr.mxu0 0.0
  %2831 = vmatpush1.msra.mxu0 0.0
  %2832 = vmatprep.subr.mxu0 0.0
  %2833 = vmatpush1.msra.mxu0 0.0
  %2834 = vmatprep.subr.mxu0 0.0
  %2835 = vmatpush1.msra.mxu0 0.0
  %2836 = vmatprep.subr.mxu0 0.0
  %2837 = vmatpush1.msra.mxu0 0.0
  %2838 = vmatprep.subr.mxu0 0.0
  %2839 = vmatpush1.msra.mxu0 0.0
  %2840 = vmatprep.subr.mxu0 0.0
  %2841 = vmatpush1.msra.mxu0 0.0
  %2842 = vmatprep.subr.mxu0 0.0
  %2843 = vmatpush1.msra.mxu0 0.0
  %2844 = vmatprep.subr.mxu0 0.0
  %2845 = vmatpush1.msra.mxu0 0.0
  %2846 = vmatprep.subr.mxu0 0.0
  %2847 = vmatpush1.msra.mxu0 0.0
  %2848 = vmatprep.subr.mxu0 0.0
  %2849 = vmatpush1.msra.mxu0 0.0
  %2850 = vmatprep.subr.mxu0 0.0
  %2851 = vmatpush1.msra.mxu0 0.0
  %2852 = vmatprep.subr.mxu0 0.0
  %2853 = vmatpush1.msra.mxu0 0.0
  %2854 = vmatprep.subr.mxu0 0.0
  %2855 = vmatpush1.msra.mxu0 0.0
  %2856 = vmatprep.subr.mxu0 0.0
  %2857 = vmatpush1.msra.mxu0 0.0
  %2858 = vmatprep.subr.mxu0 0.0
  %2859 = vmatpush1.msra.mxu0 0.0
  %2860 = vmatprep.subr.mxu0 0.0
  %2861 = vmatpush1.msra.mxu0 0.0
  %2862 = vmatprep.subr.mxu0 0.0
  %2863 = vmatpush1.msra.mxu0 0.0
  %2864 = vmatprep.subr.mxu0 0.0
  %2865 = vmatpush1.msra.mxu0 0.0
  %2866 = vmatprep.subr.mxu0 0.0
  %2867 = vmatpush1.msra.mxu0 0.0
  %2868 = vmatprep.subr.mxu0 0.0
  %2869 = vmatpush1.msra.mxu0 0.0
  %2870 = vmatprep.subr.mxu0 0.0
  %2871 = vmatpush1.msra.mxu0 0.0
  %2872 = vmatprep.subr.mxu0 0.0
  %2873 = vmatpush1.msra.mxu0 0.0
  %2874 = vmatprep.subr.mxu0 0.0
  %2875 = vmatpush1.msra.mxu0 0.0
  %2876 = vmatprep.mubr.f32.mxu0 0.0
  %2877 = vmatmul.mubr.f32.gmra.mrb[0].mxu0 %v2810
  %v2878 = vpop.f32.mrb[0].mxu0
  %v2879 = vadd.f32 %v2806, %v2878
  %v2880 = vpop.f32.mrb[0].mxu0
  %2881 = vdwg.mxu0
  %s2882 = scalar_lea.vmem %s13, 16
  %v2883 = vld [vmem:[%s2882] sm:$0xff]
  %v2885 = vsel %vm2578, %v2883, 0
  %2887 = vmatprep.subr.mxu0 0.0
  %2888 = vmatpush1.msra.mxu0 %v2576
  %2889 = vmatprep.subr.mxu0 0.0
  %2890 = vmatpush1.msra.mxu0 0.0
  %2891 = vmatprep.subr.mxu0 0.0
  %2892 = vmatpush1.msra.mxu0 0.0
  %2893 = vmatprep.subr.mxu0 0.0
  %2894 = vmatpush1.msra.mxu0 0.0
  %2895 = vmatprep.subr.mxu0 0.0
  %2896 = vmatpush1.msra.mxu0 0.0
  %2897 = vmatprep.subr.mxu0 0.0
  %2898 = vmatpush1.msra.mxu0 0.0
  %2899 = vmatprep.subr.mxu0 0.0
  %2900 = vmatpush1.msra.mxu0 0.0
  %2901 = vmatprep.subr.mxu0 0.0
  %2902 = vmatpush1.msra.mxu0 0.0
  %2903 = vmatprep.subr.mxu0 0.0
  %2904 = vmatpush1.msra.mxu0 0.0
  %2905 = vmatprep.subr.mxu0 0.0
  %2906 = vmatpush1.msra.mxu0 0.0
  %2907 = vmatprep.subr.mxu0 0.0
  %2908 = vmatpush1.msra.mxu0 0.0
  %2909 = vmatprep.subr.mxu0 0.0
  %2910 = vmatpush1.msra.mxu0 0.0
  %2911 = vmatprep.subr.mxu0 0.0
  %2912 = vmatpush1.msra.mxu0 0.0
  %2913 = vmatprep.subr.mxu0 0.0
  %2914 = vmatpush1.msra.mxu0 0.0
  %2915 = vmatprep.subr.mxu0 0.0
  %2916 = vmatpush1.msra.mxu0 0.0
  %2917 = vmatprep.subr.mxu0 0.0
  %2918 = vmatpush1.msra.mxu0 0.0
  %2919 = vmatprep.subr.mxu0 0.0
  %2920 = vmatpush1.msra.mxu0 0.0
  %2921 = vmatprep.subr.mxu0 0.0
  %2922 = vmatpush1.msra.mxu0 0.0
  %2923 = vmatprep.subr.mxu0 0.0
  %2924 = vmatpush1.msra.mxu0 0.0
  %2925 = vmatprep.subr.mxu0 0.0
  %2926 = vmatpush1.msra.mxu0 0.0
  %2927 = vmatprep.subr.mxu0 0.0
  %2928 = vmatpush1.msra.mxu0 0.0
  %2929 = vmatprep.subr.mxu0 0.0
  %2930 = vmatpush1.msra.mxu0 0.0
  %2931 = vmatprep.subr.mxu0 0.0
  %2932 = vmatpush1.msra.mxu0 0.0
  %2933 = vmatprep.subr.mxu0 0.0
  %2934 = vmatpush1.msra.mxu0 0.0
  %2935 = vmatprep.subr.mxu0 0.0
  %2936 = vmatpush1.msra.mxu0 0.0
  %2937 = vmatprep.subr.mxu0 0.0
  %2938 = vmatpush1.msra.mxu0 0.0
  %2939 = vmatprep.subr.mxu0 0.0
  %2940 = vmatpush1.msra.mxu0 0.0
  %2941 = vmatprep.subr.mxu0 0.0
  %2942 = vmatpush1.msra.mxu0 0.0
  %2943 = vmatprep.subr.mxu0 0.0
  %2944 = vmatpush1.msra.mxu0 0.0
  %2945 = vmatprep.subr.mxu0 0.0
  %2946 = vmatpush1.msra.mxu0 0.0
  %2947 = vmatprep.subr.mxu0 0.0
  %2948 = vmatpush1.msra.mxu0 0.0
  %2949 = vmatprep.subr.mxu0 0.0
  %2950 = vmatpush1.msra.mxu0 0.0
  %2951 = vmatprep.mubr.f32.mxu0 0.0
  %2952 = vmatmul.mubr.f32.gmra.mrb[0].mxu0 %v2885
  %v2953 = vpop.f32.mrb[0].mxu0
  %v2954 = vadd.f32 0.0, %v2953
  %v2955 = vpop.f32.mrb[0].mxu0
  %2956 = vdwg.mxu0
  %s2957 = scalar_lea.vmem %s14, 64
  %v2958 = vld [vmem:[%s2957] sm:$0xff]
  %v2959 = vld [vmem:[%s2957 + $0x8] sm:$0xff]
  %v2960 = vld [vmem:[%s2957 + $0x10] sm:$0xff]
  %v2961 = vld [vmem:[%s2957 + $0x18] sm:$0xff]
  %v2963 = vsel %vm70, %v2954, 0
  %2965 = vmatprep.subr.mxu0 0.0
  %2966 = vmatpush1.msra.mxu0 %v2958
  %2967 = vmatprep.subr.mxu0 0.0
  %2968 = vmatpush1.msra.mxu0 %v2959
  %2969 = vmatprep.subr.mxu0 0.0
  %2970 = vmatpush1.msra.mxu0 %v2960
  %2971 = vmatprep.subr.mxu0 0.0
  %2972 = vmatpush1.msra.mxu0 %v2961
  %2973 = vmatprep.subr.mxu0 0.0
  %2974 = vmatpush1.msra.mxu0 0.0
  %2975 = vmatprep.subr.mxu0 0.0
  %2976 = vmatpush1.msra.mxu0 0.0
  %2977 = vmatprep.subr.mxu0 0.0
  %2978 = vmatpush1.msra.mxu0 0.0
  %2979 = vmatprep.subr.mxu0 0.0
  %2980 = vmatpush1.msra.mxu0 0.0
  %2981 = vmatprep.subr.mxu0 0.0
  %2982 = vmatpush1.msra.mxu0 0.0
  %2983 = vmatprep.subr.mxu0 0.0
  %2984 = vmatpush1.msra.mxu0 0.0
  %2985 = vmatprep.subr.mxu0 0.0
  %2986 = vmatpush1.msra.mxu0 0.0
  %2987 = vmatprep.subr.mxu0 0.0
  %2988 = vmatpush1.msra.mxu0 0.0
  %2989 = vmatprep.subr.mxu0 0.0
  %2990 = vmatpush1.msra.mxu0 0.0
  %2991 = vmatprep.subr.mxu0 0.0
  %2992 = vmatpush1.msra.mxu0 0.0
  %2993 = vmatprep.subr.mxu0 0.0
  %2994 = vmatpush1.msra.mxu0 0.0
  %2995 = vmatprep.subr.mxu0 0.0
  %2996 = vmatpush1.msra.mxu0 0.0
  %2997 = vmatprep.subr.mxu0 0.0
  %2998 = vmatpush1.msra.mxu0 0.0
  %2999 = vmatprep.subr.mxu0 0.0
  %3000 = vmatpush1.msra.mxu0 0.0
  %3001 = vmatprep.subr.mxu0 0.0
  %3002 = vmatpush1.msra.mxu0 0.0
  %3003 = vmatprep.subr.mxu0 0.0
  %3004 = vmatpush1.msra.mxu0 0.0
  %3005 = vmatprep.subr.mxu0 0.0
  %3006 = vmatpush1.msra.mxu0 0.0
  %3007 = vmatprep.subr.mxu0 0.0
  %3008 = vmatpush1.msra.mxu0 0.0
  %3009 = vmatprep.subr.mxu0 0.0
  %3010 = vmatpush1.msra.mxu0 0.0
  %3011 = vmatprep.subr.mxu0 0.0
  %3012 = vmatpush1.msra.mxu0 0.0
  %3013 = vmatprep.subr.mxu0 0.0
  %3014 = vmatpush1.msra.mxu0 0.0
  %3015 = vmatprep.subr.mxu0 0.0
  %3016 = vmatpush1.msra.mxu0 0.0
  %3017 = vmatprep.subr.mxu0 0.0
  %3018 = vmatpush1.msra.mxu0 0.0
  %3019 = vmatprep.subr.mxu0 0.0
  %3020 = vmatpush1.msra.mxu0 0.0
  %3021 = vmatprep.subr.mxu0 0.0
  %3022 = vmatpush1.msra.mxu0 0.0
  %3023 = vmatprep.subr.mxu0 0.0
  %3024 = vmatpush1.msra.mxu0 0.0
  %3025 = vmatprep.subr.mxu0 0.0
  %3026 = vmatpush1.msra.mxu0 0.0
  %3027 = vmatprep.subr.mxu0 0.0
  %3028 = vmatpush1.msra.mxu0 0.0
  %3029 = vmatprep.mubr.f32.mxu0 0.0
  %3030 = vmatmul.mubr.f32.gmra.mrb[0].mxu0 %v2963
  %v3031 = vpop.f32.mrb[0].mxu0
  %v3032 = vadd.f32 0.0, %v3031
  %v3033 = vpop.f32.mrb[0].mxu0
  %3034 = vdwg.mxu0
  %v3035 = vadd.f32 %v2879, %v3032
  %v3036 = vld [vmem:[%s15] sm:$0x1]
  %v3038 = vlaneseq
  %v3039 = vshrl.u32 %v3038, 7
  %v3040 = vsub.s32 0, %v3039
  %v3041 = vrot.slane %v3036, %v3040
  %v3043 = vadd.f32 %v3035, %v3041
  %v3044 = vmax.f32 %v3043, 0.0
  %v3045 = vld [vmem:[%s16] sm:$0xf]
  %v3047 = vsel %vm2578, %v3045, 0
  %3049 = vmatprep.subr.mxu0 0.0
  %3050 = vmatpush1.msra.mxu0 %v3044
  %3051 = vmatprep.subr.mxu0 0.0
  %3052 = vmatpush1.msra.mxu0 0.0
  %3053 = vmatprep.subr.mxu0 0.0
  %3054 = vmatpush1.msra.mxu0 0.0
  %3055 = vmatprep.subr.mxu0 0.0
  %3056 = vmatpush1.msra.mxu0 0.0
  %3057 = vmatprep.subr.mxu0 0.0
  %3058 = vmatpush1.msra.mxu0 0.0
  %3059 = vmatprep.subr.mxu0 0.0
  %3060 = vmatpush1.msra.mxu0 0.0
  %3061 = vmatprep.subr.mxu0 0.0
  %3062 = vmatpush1.msra.mxu0 0.0
  %3063 = vmatprep.subr.mxu0 0.0
  %3064 = vmatpush1.msra.mxu0 0.0
  %3065 = vmatprep.subr.mxu0 0.0
  %3066 = vmatpush1.msra.mxu0 0.0
  %3067 = vmatprep.subr.mxu0 0.0
  %3068 = vmatpush1.msra.mxu0 0.0
  %3069 = vmatprep.subr.mxu0 0.0
  %3070 = vmatpush1.msra.mxu0 0.0
  %3071 = vmatprep.subr.mxu0 0.0
  %3072 = vmatpush1.msra.mxu0 0.0
  %3073 = vmatprep.subr.mxu0 0.0
  %3074 = vmatpush1.msra.mxu0 0.0
  %3075 = vmatprep.subr.mxu0 0.0
  %3076 = vmatpush1.msra.mxu0 0.0
  %3077 = vmatprep.subr.mxu0 0.0
  %3078 = vmatpush1.msra.mxu0 0.0
  %3079 = vmatprep.subr.mxu0 0.0
  %3080 = vmatpush1.msra.mxu0 0.0
  %3081 = vmatprep.subr.mxu0 0.0
  %3082 = vmatpush1.msra.mxu0 0.0
  %3083 = vmatprep.subr.mxu0 0.0
  %3084 = vmatpush1.msra.mxu0 0.0
  %3085 = vmatprep.subr.mxu0 0.0
  %3086 = vmatpush1.msra.mxu0 0.0
  %3087 = vmatprep.subr.mxu0 0.0
  %3088 = vmatpush1.msra.mxu0 0.0
  %3089 = vmatprep.subr.mxu0 0.0
  %3090 = vmatpush1.msra.mxu0 0.0
  %3091 = vmatprep.subr.mxu0 0.0
  %3092 = vmatpush1.msra.mxu0 0.0
  %3093 = vmatprep.subr.mxu0 0.0
  %3094 = vmatpush1.msra.mxu0 0.0
  %3095 = vmatprep.subr.mxu0 0.0
  %3096 = vmatpush1.msra.mxu0 0.0
  %3097 = vmatprep.subr.mxu0 0.0
  %3098 = vmatpush1.msra.mxu0 0.0
  %3099 = vmatprep.subr.mxu0 0.0
  %3100 = vmatpush1.msra.mxu0 0.0
  %3101 = vmatprep.subr.mxu0 0.0
  %3102 = vmatpush1.msra.mxu0 0.0
  %3103 = vmatprep.subr.mxu0 0.0
  %3104 = vmatpush1.msra.mxu0 0.0
  %3105 = vmatprep.subr.mxu0 0.0
  %3106 = vmatpush1.msra.mxu0 0.0
  %3107 = vmatprep.subr.mxu0 0.0
  %3108 = vmatpush1.msra.mxu0 0.0
  %3109 = vmatprep.subr.mxu0 0.0
  %3110 = vmatpush1.msra.mxu0 0.0
  %3111 = vmatprep.subr.mxu0 0.0
  %3112 = vmatpush1.msra.mxu0 0.0
  %3113 = vmatprep.mubr.f32.mxu0 0.0
  %3114 = vmatmul.mubr.f32.gmra.mrb[0].mxu0 %v3047
  %v3115 = vpop.f32.mrb[0].mxu0
  %v3116 = vadd.f32 0.0, %v3115
  %v3117 = vpop.f32.mrb[0].mxu0
  %3118 = vdwg.mxu0
  %v3119 = vld [vmem:[%s17] sm:$0xff]
  %v3120 = vld [vmem:[%s17 + $0x8] sm:$0xff]
  %v3121 = vld [vmem:[%s17 + $0x10] sm:$0xff]
  %v3122 = vld [vmem:[%s17 + $0x18] sm:$0xff]
  %s3123 = scalar_lea.vmem %s16, 4
  %v3124 = vld [vmem:[%s3123] sm:$0xf]
  %v3126 = vsel %vm2578, %v3124, 0
  %3128 = vmatprep.subr.mxu0 0.0
  %3129 = vmatpush1.msra.mxu0 %v3044
  %3130 = vmatprep.subr.mxu0 0.0
  %3131 = vmatpush1.msra.mxu0 0.0
  %3132 = vmatprep.subr.mxu0 0.0
  %3133 = vmatpush1.msra.mxu0 0.0
  %3134 = vmatprep.subr.mxu0 0.0
  %3135 = vmatpush1.msra.mxu0 0.0
  %3136 = vmatprep.subr.mxu0 0.0
  %3137 = vmatpush1.msra.mxu0 0.0
  %3138 = vmatprep.subr.mxu0 0.0
  %3139 = vmatpush1.msra.mxu0 0.0
  %3140 = vmatprep.subr.mxu0 0.0
  %3141 = vmatpush1.msra.mxu0 0.0
  %3142 = vmatprep.subr.mxu0 0.0
  %3143 = vmatpush1.msra.mxu0 0.0
  %3144 = vmatprep.subr.mxu0 0.0
  %3145 = vmatpush1.msra.mxu0 0.0
  %3146 = vmatprep.subr.mxu0 0.0
  %3147 = vmatpush1.msra.mxu0 0.0
  %3148 = vmatprep.subr.mxu0 0.0
  %3149 = vmatpush1.msra.mxu0 0.0
  %3150 = vmatprep.subr.mxu0 0.0
  %3151 = vmatpush1.msra.mxu0 0.0
  %3152 = vmatprep.subr.mxu0 0.0
  %3153 = vmatpush1.msra.mxu0 0.0
  %3154 = vmatprep.subr.mxu0 0.0
  %3155 = vmatpush1.msra.mxu0 0.0
  %3156 = vmatprep.subr.mxu0 0.0
  %3157 = vmatpush1.msra.mxu0 0.0
  %3158 = vmatprep.subr.mxu0 0.0
  %3159 = vmatpush1.msra.mxu0 0.0
  %3160 = vmatprep.subr.mxu0 0.0
  %3161 = vmatpush1.msra.mxu0 0.0
  %3162 = vmatprep.subr.mxu0 0.0
  %3163 = vmatpush1.msra.mxu0 0.0
  %3164 = vmatprep.subr.mxu0 0.0
  %3165 = vmatpush1.msra.mxu0 0.0
  %3166 = vmatprep.subr.mxu0 0.0
  %3167 = vmatpush1.msra.mxu0 0.0
  %3168 = vmatprep.subr.mxu0 0.0
  %3169 = vmatpush1.msra.mxu0 0.0
  %3170 = vmatprep.subr.mxu0 0.0
  %3171 = vmatpush1.msra.mxu0 0.0
  %3172 = vmatprep.subr.mxu0 0.0
  %3173 = vmatpush1.msra.mxu0 0.0
  %3174 = vmatprep.subr.mxu0 0.0
  %3175 = vmatpush1.msra.mxu0 0.0
  %3176 = vmatprep.subr.mxu0 0.0
  %3177 = vmatpush1.msra.mxu0 0.0
  %3178 = vmatprep.subr.mxu0 0.0
  %3179 = vmatpush1.msra.mxu0 0.0
  %3180 = vmatprep.subr.mxu0 0.0
  %3181 = vmatpush1.msra.mxu0 0.0
  %3182 = vmatprep.subr.mxu0 0.0
  %3183 = vmatpush1.msra.mxu0 0.0
  %3184 = vmatprep.subr.mxu0 0.0
  %3185 = vmatpush1.msra.mxu0 0.0
  %3186 = vmatprep.subr.mxu0 0.0
  %3187 = vmatpush1.msra.mxu0 0.0
  %3188 = vmatprep.subr.mxu0 0.0
  %3189 = vmatpush1.msra.mxu0 0.0
  %3190 = vmatprep.subr.mxu0 0.0
  %3191 = vmatpush1.msra.mxu0 0.0
  %3192 = vmatprep.mubr.f32.mxu0 0.0
  %3193 = vmatmul.mubr.f32.gmra.mrb[0].mxu0 %v3126
  %v3194 = vpop.f32.mrb[0].mxu0
  %v3195 = vadd.f32 0.0, %v3194
  %v3196 = vpop.f32.mrb[0].mxu0
  %3197 = vdwg.mxu0
  %s3198 = scalar_lea.vmem %s17, 32
  %v3199 = vld [vmem:[%s3198] sm:$0xff]
  %v3200 = vld [vmem:[%s3198 + $0x8] sm:$0xff]
  %v3201 = vld [vmem:[%s3198 + $0x10] sm:$0xff]
  %v3202 = vld [vmem:[%s3198 + $0x18] sm:$0xff]
  %v3204 = vsel %vm70, %v3195, 0
  %3206 = vmatprep.subr.mxu0 0.0
  %3207 = vmatpush1.msra.mxu0 %v3199
  %3208 = vmatprep.subr.mxu0 0.0
  %3209 = vmatpush1.msra.mxu0 %v3200
  %3210 = vmatprep.subr.mxu0 0.0
  %3211 = vmatpush1.msra.mxu0 %v3201
  %3212 = vmatprep.subr.mxu0 0.0
  %3213 = vmatpush1.msra.mxu0 %v3202
  %3214 = vmatprep.subr.mxu0 0.0
  %3215 = vmatpush1.msra.mxu0 0.0
  %3216 = vmatprep.subr.mxu0 0.0
  %3217 = vmatpush1.msra.mxu0 0.0
  %3218 = vmatprep.subr.mxu0 0.0
  %3219 = vmatpush1.msra.mxu0 0.0
  %3220 = vmatprep.subr.mxu0 0.0
  %3221 = vmatpush1.msra.mxu0 0.0
  %3222 = vmatprep.subr.mxu0 0.0
  %3223 = vmatpush1.msra.mxu0 0.0
  %3224 = vmatprep.subr.mxu0 0.0
  %3225 = vmatpush1.msra.mxu0 0.0
  %3226 = vmatprep.subr.mxu0 0.0
  %3227 = vmatpush1.msra.mxu0 0.0
  %3228 = vmatprep.subr.mxu0 0.0
  %3229 = vmatpush1.msra.mxu0 0.0
  %3230 = vmatprep.subr.mxu0 0.0
  %3231 = vmatpush1.msra.mxu0 0.0
  %3232 = vmatprep.subr.mxu0 0.0
  %3233 = vmatpush1.msra.mxu0 0.0
  %3234 = vmatprep.subr.mxu0 0.0
  %3235 = vmatpush1.msra.mxu0 0.0
  %3236 = vmatprep.subr.mxu0 0.0
  %3237 = vmatpush1.msra.mxu0 0.0
  %3238 = vmatprep.subr.mxu0 0.0
  %3239 = vmatpush1.msra.mxu0 0.0
  %3240 = vmatprep.subr.mxu0 0.0
  %3241 = vmatpush1.msra.mxu0 0.0
  %3242 = vmatprep.subr.mxu0 0.0
  %3243 = vmatpush1.msra.mxu0 0.0
  %3244 = vmatprep.subr.mxu0 0.0
  %3245 = vmatpush1.msra.mxu0 0.0
  %3246 = vmatprep.subr.mxu0 0.0
  %3247 = vmatpush1.msra.mxu0 0.0
  %3248 = vmatprep.subr.mxu0 0.0
  %3249 = vmatpush1.msra.mxu0 0.0
  %3250 = vmatprep.subr.mxu0 0.0
  %3251 = vmatpush1.msra.mxu0 0.0
  %3252 = vmatprep.subr.mxu0 0.0
  %3253 = vmatpush1.msra.mxu0 0.0
  %3254 = vmatprep.subr.mxu0 0.0
  %3255 = vmatpush1.msra.mxu0 0.0
  %3256 = vmatprep.subr.mxu0 0.0
  %3257 = vmatpush1.msra.mxu0 0.0
  %3258 = vmatprep.subr.mxu0 0.0
  %3259 = vmatpush1.msra.mxu0 0.0
  %3260 = vmatprep.subr.mxu0 0.0
  %3261 = vmatpush1.msra.mxu0 0.0
  %3262 = vmatprep.subr.mxu0 0.0
  %3263 = vmatpush1.msra.mxu0 0.0
  %3264 = vmatprep.subr.mxu0 0.0
  %3265 = vmatpush1.msra.mxu0 0.0
  %3266 = vmatprep.subr.mxu0 0.0
  %3267 = vmatpush1.msra.mxu0 0.0
  %3268 = vmatprep.subr.mxu0 0.0
  %3269 = vmatpush1.msra.mxu0 0.0
  %3270 = vmatprep.mubr.f32.mxu0 0.0
  %3271 = vmatmul.mubr.f32.gmra.mrb[0].mxu0 %v3204
  %v3272 = vpop.f32.mrb[0].mxu0
  %v3273 = vadd.f32 0.0, %v3272
  %v3274 = vpop.f32.mrb[0].mxu0
  %3275 = vdwg.mxu0
  %v3277 = vsel %vm70, %v3116, 0
  %3279 = vmatprep.subr.mxu0 0.0
  %3280 = vmatpush1.msra.mxu0 %v3119
  %3281 = vmatprep.subr.mxu0 0.0
  %3282 = vmatpush1.msra.mxu0 %v3120
  %3283 = vmatprep.subr.mxu0 0.0
  %3284 = vmatpush1.msra.mxu0 %v3121
  %3285 = vmatprep.subr.mxu0 0.0
  %3286 = vmatpush1.msra.mxu0 %v3122
  %3287 = vmatprep.subr.mxu0 0.0
  %3288 = vmatpush1.msra.mxu0 0.0
  %3289 = vmatprep.subr.mxu0 0.0
  %3290 = vmatpush1.msra.mxu0 0.0
  %3291 = vmatprep.subr.mxu0 0.0
  %3292 = vmatpush1.msra.mxu0 0.0
  %3293 = vmatprep.subr.mxu0 0.0
  %3294 = vmatpush1.msra.mxu0 0.0
  %3295 = vmatprep.subr.mxu0 0.0
  %3296 = vmatpush1.msra.mxu0 0.0
  %3297 = vmatprep.subr.mxu0 0.0
  %3298 = vmatpush1.msra.mxu0 0.0
  %3299 = vmatprep.subr.mxu0 0.0
  %3300 = vmatpush1.msra.mxu0 0.0
  %3301 = vmatprep.subr.mxu0 0.0
  %3302 = vmatpush1.msra.mxu0 0.0
  %3303 = vmatprep.subr.mxu0 0.0
  %3304 = vmatpush1.msra.mxu0 0.0
  %3305 = vmatprep.subr.mxu0 0.0
  %3306 = vmatpush1.msra.mxu0 0.0
  %3307 = vmatprep.subr.mxu0 0.0
  %3308 = vmatpush1.msra.mxu0 0.0
  %3309 = vmatprep.subr.mxu0 0.0
  %3310 = vmatpush1.msra.mxu0 0.0
  %3311 = vmatprep.subr.mxu0 0.0
  %3312 = vmatpush1.msra.mxu0 0.0
  %3313 = vmatprep.subr.mxu0 0.0
  %3314 = vmatpush1.msra.mxu0 0.0
  %3315 = vmatprep.subr.mxu0 0.0
  %3316 = vmatpush1.msra.mxu0 0.0
  %3317 = vmatprep.subr.mxu0 0.0
  %3318 = vmatpush1.msra.mxu0 0.0
  %3319 = vmatprep.subr.mxu0 0.0
  %3320 = vmatpush1.msra.mxu0 0.0
  %3321 = vmatprep.subr.mxu0 0.0
  %3322 = vmatpush1.msra.mxu0 0.0
  %3323 = vmatprep.subr.mxu0 0.0
  %3324 = vmatpush1.msra.mxu0 0.0
  %3325 = vmatprep.subr.mxu0 0.0
  %3326 = vmatpush1.msra.mxu0 0.0
  %3327 = vmatprep.subr.mxu0 0.0
  %3328 = vmatpush1.msra.mxu0 0.0
  %3329 = vmatprep.subr.mxu0 0.0
  %3330 = vmatpush1.msra.mxu0 0.0
  %3331 = vmatprep.subr.mxu0 0.0
  %3332 = vmatpush1.msra.mxu0 0.0
  %3333 = vmatprep.subr.mxu0 0.0
  %3334 = vmatpush1.msra.mxu0 0.0
  %3335 = vmatprep.subr.mxu0 0.0
  %3336 = vmatpush1.msra.mxu0 0.0
  %3337 = vmatprep.subr.mxu0 0.0
  %3338 = vmatpush1.msra.mxu0 0.0
  %3339 = vmatprep.subr.mxu0 0.0
  %3340 = vmatpush1.msra.mxu0 0.0
  %3341 = vmatprep.subr.mxu0 0.0
  %3342 = vmatpush1.msra.mxu0 0.0
  %3343 = vmatprep.mubr.f32.mxu0 0.0
  %3344 = vmatmul.mubr.f32.gmra.mrb[0].mxu0 %v3277
  %v3345 = vpop.f32.mrb[0].mxu0
  %v3346 = vadd.f32 %v3273, %v3345
  %v3347 = vpop.f32.mrb[0].mxu0
  %3348 = vdwg.mxu0
  %s3349 = scalar_lea.vmem %s16, 8
  %v3350 = vld [vmem:[%s3349] sm:$0xf]
  %v3352 = vsel %vm2578, %v3350, 0
  %3354 = vmatprep.subr.mxu0 0.0
  %3355 = vmatpush1.msra.mxu0 %v3044
  %3356 = vmatprep.subr.mxu0 0.0
  %3357 = vmatpush1.msra.mxu0 0.0
  %3358 = vmatprep.subr.mxu0 0.0
  %3359 = vmatpush1.msra.mxu0 0.0
  %3360 = vmatprep.subr.mxu0 0.0
  %3361 = vmatpush1.msra.mxu0 0.0
  %3362 = vmatprep.subr.mxu0 0.0
  %3363 = vmatpush1.msra.mxu0 0.0
  %3364 = vmatprep.subr.mxu0 0.0
  %3365 = vmatpush1.msra.mxu0 0.0
  %3366 = vmatprep.subr.mxu0 0.0
  %3367 = vmatpush1.msra.mxu0 0.0
  %3368 = vmatprep.subr.mxu0 0.0
  %3369 = vmatpush1.msra.mxu0 0.0
  %3370 = vmatprep.subr.mxu0 0.0
  %3371 = vmatpush1.msra.mxu0 0.0
  %3372 = vmatprep.subr.mxu0 0.0
  %3373 = vmatpush1.msra.mxu0 0.0
  %3374 = vmatprep.subr.mxu0 0.0
  %3375 = vmatpush1.msra.mxu0 0.0
  %3376 = vmatprep.subr.mxu0 0.0
  %3377 = vmatpush1.msra.mxu0 0.0
  %3378 = vmatprep.subr.mxu0 0.0
  %3379 = vmatpush1.msra.mxu0 0.0
  %3380 = vmatprep.subr.mxu0 0.0
  %3381 = vmatpush1.msra.mxu0 0.0
  %3382 = vmatprep.subr.mxu0 0.0
  %3383 = vmatpush1.msra.mxu0 0.0
  %3384 = vmatprep.subr.mxu0 0.0
  %3385 = vmatpush1.msra.mxu0 0.0
  %3386 = vmatprep.subr.mxu0 0.0
  %3387 = vmatpush1.msra.mxu0 0.0
  %3388 = vmatprep.subr.mxu0 0.0
  %3389 = vmatpush1.msra.mxu0 0.0
  %3390 = vmatprep.subr.mxu0 0.0
  %3391 = vmatpush1.msra.mxu0 0.0
  %3392 = vmatprep.subr.mxu0 0.0
  %3393 = vmatpush1.msra.mxu0 0.0
  %3394 = vmatprep.subr.mxu0 0.0
  %3395 = vmatpush1.msra.mxu0 0.0
  %3396 = vmatprep.subr.mxu0 0.0
  %3397 = vmatpush1.msra.mxu0 0.0
  %3398 = vmatprep.subr.mxu0 0.0
  %3399 = vmatpush1.msra.mxu0 0.0
  %3400 = vmatprep.subr.mxu0 0.0
  %3401 = vmatpush1.msra.mxu0 0.0
  %3402 = vmatprep.subr.mxu0 0.0
  %3403 = vmatpush1.msra.mxu0 0.0
  %3404 = vmatprep.subr.mxu0 0.0
  %3405 = vmatpush1.msra.mxu0 0.0
  %3406 = vmatprep.subr.mxu0 0.0
  %3407 = vmatpush1.msra.mxu0 0.0
  %3408 = vmatprep.subr.mxu0 0.0
  %3409 = vmatpush1.msra.mxu0 0.0
  %3410 = vmatprep.subr.mxu0 0.0
  %3411 = vmatpush1.msra.mxu0 0.0
  %3412 = vmatprep.subr.mxu0 0.0
  %3413 = vmatpush1.msra.mxu0 0.0
  %3414 = vmatprep.subr.mxu0 0.0
  %3415 = vmatpush1.msra.mxu0 0.0
  %3416 = vmatprep.subr.mxu0 0.0
  %3417 = vmatpush1.msra.mxu0 0.0
  %3418 = vmatprep.mubr.f32.mxu0 0.0
  %3419 = vmatmul.mubr.f32.gmra.mrb[0].mxu0 %v3352
  %v3420 = vpop.f32.mrb[0].mxu0
  %v3421 = vadd.f32 0.0, %v3420
  %v3422 = vpop.f32.mrb[0].mxu0
  %3423 = vdwg.mxu0
  %s3424 = scalar_lea.vmem %s17, 64
  %v3425 = vld [vmem:[%s3424] sm:$0xff]
  %v3426 = vld [vmem:[%s3424 + $0x8] sm:$0xff]
  %v3427 = vld [vmem:[%s3424 + $0x10] sm:$0xff]
  %v3428 = vld [vmem:[%s3424 + $0x18] sm:$0xff]
  %v3430 = vsel %vm70, %v3421, 0
  %3432 = vmatprep.subr.mxu0 0.0
  %3433 = vmatpush1.msra.mxu0 %v3425
  %3434 = vmatprep.subr.mxu0 0.0
  %3435 = vmatpush1.msra.mxu0 %v3426
  %3436 = vmatprep.subr.mxu0 0.0
  %3437 = vmatpush1.msra.mxu0 %v3427
  %3438 = vmatprep.subr.mxu0 0.0
  %3439 = vmatpush1.msra.mxu0 %v3428
  %3440 = vmatprep.subr.mxu0 0.0
  %3441 = vmatpush1.msra.mxu0 0.0
  %3442 = vmatprep.subr.mxu0 0.0
  %3443 = vmatpush1.msra.mxu0 0.0
  %3444 = vmatprep.subr.mxu0 0.0
  %3445 = vmatpush1.msra.mxu0 0.0
  %3446 = vmatprep.subr.mxu0 0.0
  %3447 = vmatpush1.msra.mxu0 0.0
  %3448 = vmatprep.subr.mxu0 0.0
  %3449 = vmatpush1.msra.mxu0 0.0
  %3450 = vmatprep.subr.mxu0 0.0
  %3451 = vmatpush1.msra.mxu0 0.0
  %3452 = vmatprep.subr.mxu0 0.0
  %3453 = vmatpush1.msra.mxu0 0.0
  %3454 = vmatprep.subr.mxu0 0.0
  %3455 = vmatpush1.msra.mxu0 0.0
  %3456 = vmatprep.subr.mxu0 0.0
  %3457 = vmatpush1.msra.mxu0 0.0
  %3458 = vmatprep.subr.mxu0 0.0
  %3459 = vmatpush1.msra.mxu0 0.0
  %3460 = vmatprep.subr.mxu0 0.0
  %3461 = vmatpush1.msra.mxu0 0.0
  %3462 = vmatprep.subr.mxu0 0.0
  %3463 = vmatpush1.msra.mxu0 0.0
  %3464 = vmatprep.subr.mxu0 0.0
  %3465 = vmatpush1.msra.mxu0 0.0
  %3466 = vmatprep.subr.mxu0 0.0
  %3467 = vmatpush1.msra.mxu0 0.0
  %3468 = vmatprep.subr.mxu0 0.0
  %3469 = vmatpush1.msra.mxu0 0.0
  %3470 = vmatprep.subr.mxu0 0.0
  %3471 = vmatpush1.msra.mxu0 0.0
  %3472 = vmatprep.subr.mxu0 0.0
  %3473 = vmatpush1.msra.mxu0 0.0
  %3474 = vmatprep.subr.mxu0 0.0
  %3475 = vmatpush1.msra.mxu0 0.0
  %3476 = vmatprep.subr.mxu0 0.0
  %3477 = vmatpush1.msra.mxu0 0.0
  %3478 = vmatprep.subr.mxu0 0.0
  %3479 = vmatpush1.msra.mxu0 0.0
  %3480 = vmatprep.subr.mxu0 0.0
  %3481 = vmatpush1.msra.mxu0 0.0
  %3482 = vmatprep.subr.mxu0 0.0
  %3483 = vmatpush1.msra.mxu0 0.0
  %3484 = vmatprep.subr.mxu0 0.0
  %3485 = vmatpush1.msra.mxu0 0.0
  %3486 = vmatprep.subr.mxu0 0.0
  %3487 = vmatpush1.msra.mxu0 0.0
  %3488 = vmatprep.subr.mxu0 0.0
  %3489 = vmatpush1.msra.mxu0 0.0
  %3490 = vmatprep.subr.mxu0 0.0
  %3491 = vmatpush1.msra.mxu0 0.0
  %3492 = vmatprep.subr.mxu0 0.0
  %3493 = vmatpush1.msra.mxu0 0.0
  %3494 = vmatprep.subr.mxu0 0.0
  %3495 = vmatpush1.msra.mxu0 0.0
  %3496 = vmatprep.mubr.f32.mxu0 0.0
  %3497 = vmatmul.mubr.f32.gmra.mrb[0].mxu0 %v3430
  %v3498 = vpop.f32.mrb[0].mxu0
  %v3499 = vadd.f32 0.0, %v3498
  %v3500 = vpop.f32.mrb[0].mxu0
  %3501 = vdwg.mxu0
  %v3502 = vadd.f32 %v3346, %v3499
  %s3503 = scalar_lea.vmem %s16, 12
  %v3504 = vld [vmem:[%s3503] sm:$0xf]
  %v3506 = vsel %vm2578, %v3504, 0
  %3508 = vmatprep.subr.mxu0 0.0
  %3509 = vmatpush1.msra.mxu0 %v3044
  %3510 = vmatprep.subr.mxu0 0.0
  %3511 = vmatpush1.msra.mxu0 0.0
  %3512 = vmatprep.subr.mxu0 0.0
  %3513 = vmatpush1.msra.mxu0 0.0
  %3514 = vmatprep.subr.mxu0 0.0
  %3515 = vmatpush1.msra.mxu0 0.0
  %3516 = vmatprep.subr.mxu0 0.0
  %3517 = vmatpush1.msra.mxu0 0.0
  %3518 = vmatprep.subr.mxu0 0.0
  %3519 = vmatpush1.msra.mxu0 0.0
  %3520 = vmatprep.subr.mxu0 0.0
  %3521 = vmatpush1.msra.mxu0 0.0
  %3522 = vmatprep.subr.mxu0 0.0
  %3523 = vmatpush1.msra.mxu0 0.0
  %3524 = vmatprep.subr.mxu0 0.0
  %3525 = vmatpush1.msra.mxu0 0.0
  %3526 = vmatprep.subr.mxu0 0.0
  %3527 = vmatpush1.msra.mxu0 0.0
  %3528 = vmatprep.subr.mxu0 0.0
  %3529 = vmatpush1.msra.mxu0 0.0
  %3530 = vmatprep.subr.mxu0 0.0
  %3531 = vmatpush1.msra.mxu0 0.0
  %3532 = vmatprep.subr.mxu0 0.0
  %3533 = vmatpush1.msra.mxu0 0.0
  %3534 = vmatprep.subr.mxu0 0.0
  %3535 = vmatpush1.msra.mxu0 0.0
  %3536 = vmatprep.subr.mxu0 0.0
  %3537 = vmatpush1.msra.mxu0 0.0
  %3538 = vmatprep.subr.mxu0 0.0
  %3539 = vmatpush1.msra.mxu0 0.0
  %3540 = vmatprep.subr.mxu0 0.0
  %3541 = vmatpush1.msra.mxu0 0.0
  %3542 = vmatprep.subr.mxu0 0.0
  %3543 = vmatpush1.msra.mxu0 0.0
  %3544 = vmatprep.subr.mxu0 0.0
  %3545 = vmatpush1.msra.mxu0 0.0
  %3546 = vmatprep.subr.mxu0 0.0
  %3547 = vmatpush1.msra.mxu0 0.0
  %3548 = vmatprep.subr.mxu0 0.0
  %3549 = vmatpush1.msra.mxu0 0.0
  %3550 = vmatprep.subr.mxu0 0.0
  %3551 = vmatpush1.msra.mxu0 0.0
  %3552 = vmatprep.subr.mxu0 0.0
  %3553 = vmatpush1.msra.mxu0 0.0
  %3554 = vmatprep.subr.mxu0 0.0
  %3555 = vmatpush1.msra.mxu0 0.0
  %3556 = vmatprep.subr.mxu0 0.0
  %3557 = vmatpush1.msra.mxu0 0.0
  %3558 = vmatprep.subr.mxu0 0.0
  %3559 = vmatpush1.msra.mxu0 0.0
  %3560 = vmatprep.subr.mxu0 0.0
  %3561 = vmatpush1.msra.mxu0 0.0
  %3562 = vmatprep.subr.mxu0 0.0
  %3563 = vmatpush1.msra.mxu0 0.0
  %3564 = vmatprep.subr.mxu0 0.0
  %3565 = vmatpush1.msra.mxu0 0.0
  %3566 = vmatprep.subr.mxu0 0.0
  %3567 = vmatpush1.msra.mxu0 0.0
  %3568 = vmatprep.subr.mxu0 0.0
  %3569 = vmatpush1.msra.mxu0 0.0
  %3570 = vmatprep.subr.mxu0 0.0
  %3571 = vmatpush1.msra.mxu0 0.0
  %3572 = vmatprep.mubr.f32.mxu0 0.0
  %3573 = vmatmul.mubr.f32.gmra.mrb[0].mxu0 %v3506
  %v3574 = vpop.f32.mrb[0].mxu0
  %v3575 = vadd.f32 0.0, %v3574
  %v3576 = vpop.f32.mrb[0].mxu0
  %3577 = vdwg.mxu0
  %s3578 = scalar_lea.vmem %s17, 96
  %v3579 = vld [vmem:[%s3578] sm:$0xff]
  %v3580 = vld [vmem:[%s3578 + $0x8] sm:$0xff]
  %v3581 = vld [vmem:[%s3578 + $0x10] sm:$0xff]
  %v3582 = vld [vmem:[%s3578 + $0x18] sm:$0xff]
  %v3584 = vsel %vm70, %v3575, 0
  %3586 = vmatprep.subr.mxu0 0.0
  %3587 = vmatpush1.msra.mxu0 %v3579
  %3588 = vmatprep.subr.mxu0 0.0
  %3589 = vmatpush1.msra.mxu0 %v3580
  %3590 = vmatprep.subr.mxu0 0.0
  %3591 = vmatpush1.msra.mxu0 %v3581
  %3592 = vmatprep.subr.mxu0 0.0
  %3593 = vmatpush1.msra.mxu0 %v3582
  %3594 = vmatprep.subr.mxu0 0.0
  %3595 = vmatpush1.msra.mxu0 0.0
  %3596 = vmatprep.subr.mxu0 0.0
  %3597 = vmatpush1.msra.mxu0 0.0
  %3598 = vmatprep.subr.mxu0 0.0
  %3599 = vmatpush1.msra.mxu0 0.0
  %3600 = vmatprep.subr.mxu0 0.0
  %3601 = vmatpush1.msra.mxu0 0.0
  %3602 = vmatprep.subr.mxu0 0.0
  %3603 = vmatpush1.msra.mxu0 0.0
  %3604 = vmatprep.subr.mxu0 0.0
  %3605 = vmatpush1.msra.mxu0 0.0
  %3606 = vmatprep.subr.mxu0 0.0
  %3607 = vmatpush1.msra.mxu0 0.0
  %3608 = vmatprep.subr.mxu0 0.0
  %3609 = vmatpush1.msra.mxu0 0.0
  %3610 = vmatprep.subr.mxu0 0.0
  %3611 = vmatpush1.msra.mxu0 0.0
  %3612 = vmatprep.subr.mxu0 0.0
  %3613 = vmatpush1.msra.mxu0 0.0
  %3614 = vmatprep.subr.mxu0 0.0
  %3615 = vmatpush1.msra.mxu0 0.0
  %3616 = vmatprep.subr.mxu0 0.0
  %3617 = vmatpush1.msra.mxu0 0.0
  %3618 = vmatprep.subr.mxu0 0.0
  %3619 = vmatpush1.msra.mxu0 0.0
  %3620 = vmatprep.subr.mxu0 0.0
  %3621 = vmatpush1.msra.mxu0 0.0
  %3622 = vmatprep.subr.mxu0 0.0
  %3623 = vmatpush1.msra.mxu0 0.0
  %3624 = vmatprep.subr.mxu0 0.0
  %3625 = vmatpush1.msra.mxu0 0.0
  %3626 = vmatprep.subr.mxu0 0.0
  %3627 = vmatpush1.msra.mxu0 0.0
  %3628 = vmatprep.subr.mxu0 0.0
  %3629 = vmatpush1.msra.mxu0 0.0
  %3630 = vmatprep.subr.mxu0 0.0
  %3631 = vmatpush1.msra.mxu0 0.0
  %3632 = vmatprep.subr.mxu0 0.0
  %3633 = vmatpush1.msra.mxu0 0.0
  %3634 = vmatprep.subr.mxu0 0.0
  %3635 = vmatpush1.msra.mxu0 0.0
  %3636 = vmatprep.subr.mxu0 0.0
  %3637 = vmatpush1.msra.mxu0 0.0
  %3638 = vmatprep.subr.mxu0 0.0
  %3639 = vmatpush1.msra.mxu0 0.0
  %3640 = vmatprep.subr.mxu0 0.0
  %3641 = vmatpush1.msra.mxu0 0.0
  %3642 = vmatprep.subr.mxu0 0.0
  %3643 = vmatpush1.msra.mxu0 0.0
  %3644 = vmatprep.subr.mxu0 0.0
  %3645 = vmatpush1.msra.mxu0 0.0
  %3646 = vmatprep.subr.mxu0 0.0
  %3647 = vmatpush1.msra.mxu0 0.0
  %3648 = vmatprep.subr.mxu0 0.0
  %3649 = vmatpush1.msra.mxu0 0.0
  %3650 = vmatprep.mubr.f32.mxu0 0.0
  %3651 = vmatmul.mubr.f32.gmra.mrb[0].mxu0 %v3584
  %v3652 = vpop.f32.mrb[0].mxu0
  %v3653 = vadd.f32 0.0, %v3652
  %v3654 = vpop.f32.mrb[0].mxu0
  %3655 = vdwg.mxu0
  %v3656 = vadd.f32 %v3502, %v3653
  %v3657 = vld [vmem:[%s18] sm:$0x1]
  %v3659 = vlaneseq
  %v3660 = vshrl.u32 %v3659, 7
  %v3661 = vsub.s32 0, %v3660
  %v3662 = vrot.slane %v3657, %v3661
  %v3664 = vadd.f32 %v3656, %v3662
  %v3665 = vmax.f32 %v3664, 0.0
  %vm3666 = vcmask 125952
  %3667 = vst.msk [vmem:[%s19] sm:$0xf] %vm3666, %v3665
  // Predicated region
  $region78: #{cnn2_forward.1} parent=0 // pred_check
    _
  $region79: #{cnn2_forward.1} parent=0 // pred_check_branch
    %3669 = sbr.rel (0) target = $region81
  $region80: #{cnn2_forward.1} parent=0 // pred_region
    _
  $region81: #{cnn2_forward.1} parent=0 // pred_fallthru
    _
  // Predicated region
  $region82: #{cnn2_forward.1} parent=0 // pred_check
    _
  $region83: #{cnn2_forward.1} parent=0 // pred_check_branch
    %3671 = sbr.rel (0) target = $region85
  $region84: #{cnn2_forward.1} parent=0 // pred_region
    _
  $region85: #{cnn2_forward.1} parent=0 // pred_fallthru
    _

</llo_original>
